<compile_context>
chip_gen: v7x
topology: tpu7x:2x2x1
jax: 0.10.0
libtpu: 0.0.40
codegen_flags: <defaults>
</compile_context>

<pallas_src>
import functools

import jax
import jax.numpy as jnp
from jax.experimental import pallas as pl
from jax.experimental.pallas import tpu as pltpu

# ----------------------------- model config -----------------------------
QK_DIM = 64            # self.dim
V_DIM = 64             # must equal QUERY_TOKEN_DIM (proj takes cat([x, query]) with in=2*v_dim)
QUERY_TOKEN_DIM = 64   # must equal QK_DIM (q = Linear(norm(query) + pos_enc(dim=qk_dim)))
TGT_TOKEN_DIM = 128
NUM_HEADS = 4
HEAD_DIM = QK_DIM // NUM_HEADS          # 16
V_HEAD_DIM = V_DIM // NUM_HEADS         # 16
KV_DIM = QK_DIM + V_DIM                 # 128 : fused k|v lane width
SEG_DIM = 128                           # head-logit lanes, padded 4 -> 128 (keeps both matmuls 128x128)
SCALE = float(HEAD_DIM) ** -0.5         # MultiHeadAttention per-head scale (folded into seg matrix)
LN_EPS = 1e-5                           # nn.LayerNorm default


def _round_up(x, m):
    return -(-x // m) * m


# ----------------------------- in-kernel helpers -----------------------------
def _layernorm(x, gamma, beta):
    mu = jnp.mean(x, axis=-1, keepdims=True)
    var = jnp.mean((x - mu) ** 2, axis=-1, keepdims=True)
    return (x - mu) * jax.lax.rsqrt(var + LN_EPS) * gamma + beta


def _erf(x):
    # erf via Abramowitz & Stegun 7.1.26 (|abs err| < 1.5e-7): matches PyTorch's exact
    # (erf-based) nn.GELU at float32 precision, using only exp / mul / select (VPU+EUP safe).
    sign = jnp.where(x >= 0.0, 1.0, -1.0)
    ax = jnp.abs(x)
    t = 1.0 / (1.0 + 0.3275911 * ax)
    poly = t * (0.254829592 + t * (-0.284496736 + t * (1.421413741
               + t * (-1.453152027 + t * 1.061405429))))
    return sign * (1.0 - poly * jnp.exp(-ax * ax))


def _gelu_exact(x):
    return 0.5 * x * (1.0 + _erf(x * 0.7071067811865476))


# ----------------------------- the Pallas kernel -----------------------------
def cross_attention_kernel(
    qp_ref, memory_ref,
    g1_ref, be1_ref, g2_ref, be2_ref,
    wq_ref, bq_ref, wkv_ref, bkv_ref,
    wpf_ref, bp_ref,
    wf1_ref, bf1_ref, wf2_ref, bf2_ref,
    seg_ref, segt_ref,
    x_out_ref, kv_out_ref,
    *, m_valid,
):
    bf16 = jnp.bfloat16
    f32 = jnp.float32

    qp = qp_ref[...]                                   # [TB, 128] = [query | posenc]
    query = qp[:, :QUERY_TOKEN_DIM]                    # [TB, 64]
    posenc = qp[:, QUERY_TOKEN_DIM:]                   # [TB, 64]
    mem = memory_ref[...]                              # [TB, M, T]   (M is a multiple of 8)
    TB, M, T = mem.shape

    # ---- fused k|v projection: one (TB*M,128)x(128,128) bf16 MXU matmul, f32 accumulation ----
    mem_bf = mem.reshape(TB * M, T).astype(bf16)       # reshape is a view (M % 8 == 0), cast on 2D
    kv = jnp.dot(mem_bf, wkv_ref[...], preferred_element_type=f32) + bkv_ref[...]
    kv3 = kv.reshape(TB, M, KV_DIM)                    # [..., :QK_DIM] = k, [..., QK_DIM:] = v
    kv_out_ref[...] = kv3                              # single unmasked 128-lane store

    # ---- q = Linear_q(LayerNorm1(query) + pos_enc), zero-padded to 128 lanes (lanes >= 64 are 0) ----
    qn = _layernorm(query, g1_ref[...], be1_ref[...])
    q = jnp.dot((qn + posenc).astype(bf16), wq_ref[...],
                preferred_element_type=f32) + bq_ref[...]          # [TB, 128]

    # ---- multi-head attention: 1 query token vs M memory tokens per pixel ----
    # Head-segmented dot products and the probability broadcast are both 128x128 bf16 MXU matmuls
    # against constant block-one-hot matrices (scale folded into `seg`) -> no per-head loop and the
    # whole epilogue works on the fused 128-lane k|v tensor.
    prod = q[:, None, :] * kv3                                      # [TB, M, 128] (v half * 0)
    logits = jnp.dot(prod.reshape(TB * M, KV_DIM).astype(bf16), seg_ref[...],
                     preferred_element_type=f32).reshape(TB, M, SEG_DIM)
    if m_valid != M:
        # Padded memory rows carry bias-driven k/v; mask their logits out of the softmax.
        row = jax.lax.broadcasted_iota(jnp.int32, (TB, M, SEG_DIM), 1)
        logits = jnp.where(row < m_valid, logits, -jnp.inf)
    # Columns >= NUM_HEADS are all-zero padding; they stay benign through the softmax below.
    logits = logits - jnp.max(logits, axis=1, keepdims=True)        # stable softmax over memory axis
    p = jnp.exp(logits)                                             # UNNORMALIZED probs, f32

    # Broadcast per-head probs to the v-half lanes (bf16 MXU), then reduce over M. The per-head
    # softmax denominators fall out of the same reduction; a single [TB,128] reciprocal (EUP)
    # normalizes after the M-reduction instead of dividing the full [TB,M,128] tensor.
    pb = jnp.dot(p.reshape(TB * M, SEG_DIM).astype(bf16), segt_ref[...],
                 preferred_element_type=f32).reshape(TB, M, KV_DIM)
    reduced_un = jnp.sum(pb * kv3, axis=1)                          # [TB, 128] = [zeros | sum p*v]
    denom = jnp.sum(pb, axis=1)                                     # [TB, 128] = [zeros | sum p]
    inv = pl.reciprocal(jnp.maximum(denom, 1.0), approx=True)       # q-half lanes 0 -> 1 (harmless)
    reduced = reduced_un * inv                                      # [TB, 128] = [zeros | attn_out]

    # ---- x = query + proj(cat([attn_out, query]))  (proj_drop identity; single fused matmul) ----
    # Merge query into the zero q-half lanes of `reduced` with one lane select; Wp rows were
    # reordered to [query-half ; attn-half] at pack time, so one (TB,128)x(128,64) matmul suffices.
    lane = jax.lax.broadcasted_iota(jnp.int32, (TB, KV_DIM), 1)
    merged = jnp.where(lane < QK_DIM, qp, reduced)                  # [query | attn_out]
    x = query + (jnp.dot(merged.astype(bf16), wpf_ref[...],
                         preferred_element_type=f32) + bp_ref[...])

    # ---- x = x + FFN(LayerNorm2(x))  (dropouts identity, p=0) ----
    xn = _layernorm(x, g2_ref[...], be2_ref[...])
    hid = jnp.dot(xn.astype(bf16), wf1_ref[...], preferred_element_type=f32) + bf1_ref[...]
    hid = _gelu_exact(hid)
    hid = jnp.dot(hid.astype(bf16), wf2_ref[...], preferred_element_type=f32) + bf2_ref[...]
    x_out_ref[...] = x + hid


# ----------------------------- plain-JAX glue -----------------------------
def linear_position_embedding_sine(x, dim):
    # x: [N, 1, 2] ; constants (3.14, 1/200) match the reference implementation exactly.
    freq = jnp.linspace(0.0, dim // 4 - 1, dim // 4, dtype=jnp.float32)
    a = 3.14 * x[..., -2:-1] * freq * (1.0 / 200.0)
    b = 3.14 * x[..., -1:] * freq * (1.0 / 200.0)
    return jnp.concatenate([jnp.sin(a), jnp.cos(a), jnp.sin(b), jnp.cos(b)], axis=-1)


def init_params(key):
    # Deterministic synthetic weights, PyTorch-Linear-style uniform(+-1/sqrt(fan_in)).
    # Weights stored as [in, out] so the kernel computes x @ W + b.
    def lin(k, fan_in, fan_out):
        k1, k2 = jax.random.split(k)
        bound = 1.0 / (fan_in ** 0.5)
        w = jax.random.uniform(k1, (fan_in, fan_out), jnp.float32, -bound, bound)
        b = jax.random.uniform(k2, (1, fan_out), jnp.float32, -bound, bound)
        return w, b

    keys = jax.random.split(key, 6)
    p = {
        "g1": jnp.ones((1, QUERY_TOKEN_DIM), jnp.float32),
        "be1": jnp.zeros((1, QUERY_TOKEN_DIM), jnp.float32),
        "g2": jnp.ones((1, QUERY_TOKEN_DIM), jnp.float32),
        "be2": jnp.zeros((1, QUERY_TOKEN_DIM), jnp.float32),
    }
    p["wq"], p["bq"] = lin(keys[0], QUERY_TOKEN_DIM, QK_DIM)
    p["wk"], p["bk"] = lin(keys[1], TGT_TOKEN_DIM, QK_DIM)
    p["wv"], p["bv"] = lin(keys[2], TGT_TOKEN_DIM, V_DIM)
    p["wp"], p["bp"] = lin(keys[3], V_DIM * 2, QUERY_TOKEN_DIM)
    p["wf1"], p["bf1"] = lin(keys[4], QUERY_TOKEN_DIM, QUERY_TOKEN_DIM)
    p["wf2"], p["bf2"] = lin(keys[5], QUERY_TOKEN_DIM, QUERY_TOKEN_DIM)
    return p


def _pack_params(p):
    """Pack per-layer weights into the fused / padded / bf16 layouts the kernel expects.

    Matmul weight matrices are pre-cast to bfloat16 (MXU inputs); biases and LayerNorm
    parameters stay f32 (they are added to f32 accumulations).
    """
    f32, bf16 = jnp.float32, jnp.bfloat16
    packed = {
        "g1": p["g1"], "be1": p["be1"], "g2": p["g2"], "be2": p["be2"],
        # q projection zero-padded to KV_DIM output lanes (lanes >= QK_DIM stay exactly 0).
        "wq": jnp.concatenate([p["wq"], jnp.zeros((QUERY_TOKEN_DIM, V_DIM), f32)], axis=1).astype(bf16),
        "bq": jnp.concatenate([p["bq"], jnp.zeros((1, V_DIM), f32)], axis=1),
        # fused k|v projection (single 128-wide MXU matmul).
        "wkv": jnp.concatenate([p["wk"], p["wv"]], axis=1).astype(bf16),
        "bkv": jnp.concatenate([p["bk"], p["bv"]], axis=1),
        # fused output projection: kernel builds merged = [query | attn], so Wp rows are
        # reordered to [query-half ; attn-half].
        "wpf": jnp.concatenate([p["wp"][V_DIM:], p["wp"][:V_DIM]], axis=0).astype(bf16),
        "bp": p["bp"],
        "wf1": p["wf1"].astype(bf16), "bf1": p["bf1"],
        "wf2": p["wf2"].astype(bf16), "bf2": p["bf2"],
    }
    # Head-segment block-one-hot matrices; per-head scale (exact power of two) folded into `seg`.
    # All entries are 0 / 1 / 0.25 -> exact in bf16.
    k_head = jnp.arange(QK_DIM) // HEAD_DIM
    v_head = jnp.arange(V_DIM) // V_HEAD_DIM
    heads = jnp.arange(NUM_HEADS)
    seg = jnp.zeros((KV_DIM, SEG_DIM), f32)
    seg = seg.at[:QK_DIM, :NUM_HEADS].set(
        (k_head[:, None] == heads[None, :]).astype(f32) * SCALE)
    segt = jnp.zeros((SEG_DIM, KV_DIM), f32)
    segt = segt.at[:NUM_HEADS, QK_DIM:].set(
        (heads[:, None] == v_head[None, :]).astype(f32))
    packed["seg"] = seg.astype(bf16)
    packed["segT"] = segt.astype(bf16)
    return packed


@functools.partial(jax.jit, static_argnames=("tb",))
def cross_attention_layer(query, memory, query_coord, params, *, tb=256):
    """Equivalent of CrossAttentionLayer.forward(query, None, None, memory, query_coord).

    Returns (x, k, v) with x: [BN, 1, D], k: [BN, M, QK_DIM], v: [BN, M, V_DIM].
    k/v are lane slices of one fused [BN, M, 128] kernel output; downstream kernels should
    slice that buffer lazily instead of materializing the split.

    tb: pixel-sequences per grid step.  Live-footprint formula (f32):
        ~2*(memory block) + 2*(kv block) + ~5 live [tb, M, 128] intermediates
        ~= 9-10 * tb * M * 512 bytes, which must fit vmem_limit_bytes (32 MiB here, safe for
        v7x's 64 MiB/TC VMEM).  For M=8 that allows tb up to ~512-1024 on v5e/v6e (sweep; at
        tb>=512 consider pipeline_mode=pl.Buffered(3) on the memory/kv specs) and tb<=512 on
        v7x.  On v7x also keep the grid length >= 2 and even so both TensorCores get work.
    """
    # TODO(synk): the precomputed inp_key/inp_value fast path is not implemented; k, v are
    # always recomputed from `memory` inside the kernel (the inp_* == None branch).
    B, _, H1, W1 = query_coord.shape
    BN, _, D = query.shape
    BN2, M, T = memory.shape
    assert BN == B * H1 * W1 and BN2 == BN
    assert D == QUERY_TOKEN_DIM and T == TGT_TOKEN_DIM

    coords_flat = jnp.transpose(query_coord, (0, 2, 3, 1)).reshape(BN, 1, 2)
    posenc = linear_position_embedding_sine(coords_flat, dim=QK_DIM).reshape(BN, QK_DIM)
    # lane-dense 128-wide query-side input stream: [query | posenc]
    qp = jnp.concatenate([query.reshape(BN, D), posenc], axis=-1)

    # Pad the memory-token axis to a sublane multiple so all in-kernel reshapes are views;
    # padded rows are masked to -inf inside the kernel before the softmax.
    m_pad = _round_up(M, 8)
    if m_pad != M:
        memory = jnp.pad(memory, ((0, 0), (0, m_pad - M), (0, 0)))

    # Clamp tb for tiny inputs (keeps tb a multiple of 8), then pad BN up to a tb multiple
    # (zero rows are numerically benign; sliced off below).
    tb = min(tb, _round_up(BN, 8))
    bn_pad = _round_up(BN, tb)
    if bn_pad != BN:
        qp = jnp.pad(qp, ((0, bn_pad - BN), (0, 0)))
        memory = jnp.pad(memory, ((0, bn_pad - BN), (0, 0), (0, 0)))

    w = _pack_params(params)

    grid = (bn_pad // tb,)
    seq2 = lambda shape: pl.BlockSpec(shape, lambda i: (i, 0))
    seq3 = lambda shape: pl.BlockSpec(shape, lambda i: (i, 0, 0))
    full = lambda shape: pl.BlockSpec(shape, lambda i: (0, 0))

    in_specs = [
        seq2((tb, 2 * D)),                               # [query | posenc] block
        seq3((tb, m_pad, T)),                            # memory block
        full((1, D)), full((1, D)),                      # norm1 gamma / beta
        full((1, D)), full((1, D)),                      # norm2 gamma / beta
        full((D, KV_DIM)), full((1, KV_DIM)),            # Wq (padded, bf16), bq (padded)
        full((T, KV_DIM)), full((1, KV_DIM)),            # Wk|Wv fused (bf16), bk|bv fused
        full((KV_DIM, D)), full((1, D)),                 # Wproj fused ([query-half;attn-half], bf16), bproj
        full((D, D)), full((1, D)),                      # FFN W1 (bf16), b1
        full((D, D)), full((1, D)),                      # FFN W2 (bf16), b2
        full((KV_DIM, SEG_DIM)), full((SEG_DIM, KV_DIM)),  # head segment matrices (bf16)
    ]
    out_specs = [
        seq2((tb, D)),                    # x
        seq3((tb, m_pad, KV_DIM)),        # fused kv (lane-dense, unmasked stores)
    ]
    out_shape = [
        jax.ShapeDtypeStruct((bn_pad, D), jnp.float32),
        jax.ShapeDtypeStruct((bn_pad, m_pad, KV_DIM), jnp.float32),
    ]

    x, kv = pl.pallas_call(
        functools.partial(cross_attention_kernel, m_valid=M),
        out_shape=out_shape,
        grid_spec=pltpu.PrefetchScalarGridSpec(
            num_scalar_prefetch=0,
            grid=grid,
            in_specs=in_specs,
            out_specs=out_specs,
        ),
        compiler_params=pltpu.CompilerParams(
            dimension_semantics=("parallel",),
            vmem_limit_bytes=32 * 1024 * 1024,   # safe on v7x (64 MiB/TC); ~10 MiB used at tb=256, M=8
        ),
    )(
        qp, memory,
        w["g1"], w["be1"], w["g2"], w["be2"],
        w["wq"], w["bq"], w["wkv"], w["bkv"],
        w["wpf"], w["bp"],
        w["wf1"], w["bf1"], w["wf2"], w["bf2"],
        w["seg"], w["segT"],
    )
    x = x[:BN]
    kv = kv[:BN, :M]
    # Downstream consumers should keep/slice the fused kv lazily; these slices exist only to
    # match the reference (x, k, v) API.
    return x.reshape(BN, 1, D), kv[..., :QK_DIM], kv[..., QK_DIM:]


if __name__ == "__main__":
    key = jax.random.PRNGKey(0)
    kq, km, kc, kp = jax.random.split(key, 4)

    B, H1, W1, M = 2, 4, 4, 8
    BN = B * H1 * W1
    query = jax.random.normal(kq, (BN, 1, QUERY_TOKEN_DIM), jnp.float32)
    memory = jax.random.normal(km, (BN, M, TGT_TOKEN_DIM), jnp.float32)
    query_coord = jax.random.uniform(kc, (B, 2, H1, W1), jnp.float32, 0.0, float(H1))

    params = init_params(kp)
    x, k, v = cross_attention_layer(query, memory, query_coord, params)
    jax.block_until_ready((x, k, v))

    assert x.shape == (BN, 1, QUERY_TOKEN_DIM)
    assert k.shape == (BN, M, QK_DIM)
    assert v.shape == (BN, M, V_DIM)
    print("KERNEL_OK")
</pallas_src>

<mosaic_0001>
module attributes {stable_mosaic.version = 11 : i64} {
  func.func @cross_attention_kernel(%arg0: i32, %arg1: memref<32x128xf32, #tpu.memory_space<vmem>>, %arg2: memref<32x8x128xf32, #tpu.memory_space<vmem>>, %arg3: memref<1x64xf32, #tpu.memory_space<vmem>>, %arg4: memref<1x64xf32, #tpu.memory_space<vmem>>, %arg5: memref<1x64xf32, #tpu.memory_space<vmem>>, %arg6: memref<1x64xf32, #tpu.memory_space<vmem>>, %arg7: memref<64x128xbf16, #tpu.memory_space<vmem>>, %arg8: memref<1x128xf32, #tpu.memory_space<vmem>>, %arg9: memref<128x128xbf16, #tpu.memory_space<vmem>>, %arg10: memref<1x128xf32, #tpu.memory_space<vmem>>, %arg11: memref<128x64xbf16, #tpu.memory_space<vmem>>, %arg12: memref<1x64xf32, #tpu.memory_space<vmem>>, %arg13: memref<64x64xbf16, #tpu.memory_space<vmem>>, %arg14: memref<1x64xf32, #tpu.memory_space<vmem>>, %arg15: memref<64x64xbf16, #tpu.memory_space<vmem>>, %arg16: memref<1x64xf32, #tpu.memory_space<vmem>>, %arg17: memref<128x128xbf16, #tpu.memory_space<vmem>>, %arg18: memref<128x128xbf16, #tpu.memory_space<vmem>>, %arg19: memref<32x64xf32, #tpu.memory_space<vmem>>, %arg20: memref<32x8x128xf32, #tpu.memory_space<vmem>>) attributes {dimension_semantics = [#tpu.dimension_semantics<parallel>], iteration_bounds = array<i64: 1>, scalar_prefetch = 0 : i64, scratch_operands = 0 : i64, tpu.core_type = #tpu.core_type<tc>, window_params = [{transform_indices = @transform_0, window_bounds = array<i64: 32, 128>}, {transform_indices = @transform_1, window_bounds = array<i64: 32, 8, 128>}, {pipeline_mode = #tpu.pipeline_mode<synchronous>, transform_indices = @transform_2, window_bounds = array<i64: 1, 64>}, {pipeline_mode = #tpu.pipeline_mode<synchronous>, transform_indices = @transform_3, window_bounds = array<i64: 1, 64>}, {pipeline_mode = #tpu.pipeline_mode<synchronous>, transform_indices = @transform_4, window_bounds = array<i64: 1, 64>}, {pipeline_mode = #tpu.pipeline_mode<synchronous>, transform_indices = @transform_5, window_bounds = array<i64: 1, 64>}, {pipeline_mode = #tpu.pipeline_mode<synchronous>, transform_indices = @transform_6, window_bounds = array<i64: 64, 128>}, {pipeline_mode = #tpu.pipeline_mode<synchronous>, transform_indices = @transform_7, window_bounds = array<i64: 1, 128>}, {pipeline_mode = #tpu.pipeline_mode<synchronous>, transform_indices = @transform_8, window_bounds = array<i64: 128, 128>}, {pipeline_mode = #tpu.pipeline_mode<synchronous>, transform_indices = @transform_9, window_bounds = array<i64: 1, 128>}, {pipeline_mode = #tpu.pipeline_mode<synchronous>, transform_indices = @transform_10, window_bounds = array<i64: 128, 64>}, {pipeline_mode = #tpu.pipeline_mode<synchronous>, transform_indices = @transform_11, window_bounds = array<i64: 1, 64>}, {pipeline_mode = #tpu.pipeline_mode<synchronous>, transform_indices = @transform_12, window_bounds = array<i64: 64, 64>}, {pipeline_mode = #tpu.pipeline_mode<synchronous>, transform_indices = @transform_13, window_bounds = array<i64: 1, 64>}, {pipeline_mode = #tpu.pipeline_mode<synchronous>, transform_indices = @transform_14, window_bounds = array<i64: 64, 64>}, {pipeline_mode = #tpu.pipeline_mode<synchronous>, transform_indices = @transform_15, window_bounds = array<i64: 1, 64>}, {pipeline_mode = #tpu.pipeline_mode<synchronous>, transform_indices = @transform_16, window_bounds = array<i64: 128, 128>}, {pipeline_mode = #tpu.pipeline_mode<synchronous>, transform_indices = @transform_17, window_bounds = array<i64: 128, 128>}, {transform_indices = @transform_18, window_bounds = array<i64: 32, 64>}, {transform_indices = @transform_19, window_bounds = array<i64: 32, 8, 128>}]} {
    %c0 = arith.constant 0 : index
    %c0_0 = arith.constant 0 : index
    %0 = vector.load %arg1[%c0, %c0_0] : memref<32x128xf32, #tpu.memory_space<vmem>>, vector<32x128xf32>
    %1 = vector.extract_strided_slice %0 {offsets = [0, 0], sizes = [32, 64], strides = [1, 1]} : vector<32x128xf32> to vector<32x64xf32>
    %2 = vector.extract_strided_slice %0 {offsets = [0, 64], sizes = [32, 64], strides = [1, 1]} : vector<32x128xf32> to vector<32x64xf32>
    %c0_1 = arith.constant 0 : index
    %c0_2 = arith.constant 0 : index
    %c0_3 = arith.constant 0 : index
    %3 = vector.load %arg2[%c0_1, %c0_2, %c0_3] : memref<32x8x128xf32, #tpu.memory_space<vmem>>, vector<32x8x128xf32>
    %4 = vector.shape_cast %3 : vector<32x8x128xf32> to vector<256x128xf32>
    %5 = arith.truncf %4 : vector<256x128xf32> to vector<256x128xbf16>
    %c0_4 = arith.constant 0 : index
    %c0_5 = arith.constant 0 : index
    %6 = vector.load %arg9[%c0_4, %c0_5] : memref<128x128xbf16, #tpu.memory_space<vmem>>, vector<128x128xbf16>
    %cst = arith.constant dense<0.000000e+00> : vector<256x128xf32>
    %7 = tpu.matmul %5, %6, %cst {dimension_numbers = #tpu.dot_dimension_numbers<[1], [0], [0], [1], [0, 0, 1, 1], [], []>} : vector<256x128xbf16>, vector<128x128xbf16>, vector<256x128xf32> -> vector<256x128xf32>
    %c0_6 = arith.constant 0 : index
    %c0_7 = arith.constant 0 : index
    %8 = vector.load %arg10[%c0_6, %c0_7] : memref<1x128xf32, #tpu.memory_space<vmem>>, vector<1x128xf32>
    %9 = vector.broadcast %8 : vector<1x128xf32> to vector<256x128xf32>
    %10 = arith.addf %7, %9 : vector<256x128xf32>
    %11 = vector.shape_cast %10 : vector<256x128xf32> to vector<32x8x128xf32>
    %c0_8 = arith.constant 0 : index
    %c0_9 = arith.constant 0 : index
    %c0_10 = arith.constant 0 : index
    %12 = vector.load %arg20[%c0_8, %c0_9, %c0_10] : memref<32x8x128xf32, #tpu.memory_space<vmem>>, vector<32x8x128xf32>
    tpu.vector_store %arg20[%c0_8, %c0_9, %c0_10], %11 {strides = array<i32>} : memref<32x8x128xf32, #tpu.memory_space<vmem>>, vector<32x8x128xf32>,
    %c0_11 = arith.constant 0 : index
    %c0_12 = arith.constant 0 : index
    %13 = vector.load %arg3[%c0_11, %c0_12] : memref<1x64xf32, #tpu.memory_space<vmem>>, vector<1x64xf32>
    %c0_13 = arith.constant 0 : index
    %c0_14 = arith.constant 0 : index
    %14 = vector.load %arg4[%c0_13, %c0_14] : memref<1x64xf32, #tpu.memory_space<vmem>>, vector<1x64xf32>
    %cst_15 = arith.constant dense<0.000000e+00> : vector<32xf32>
    %15 = vector.multi_reduction <add>, %1, %cst_15 [1] : vector<32x64xf32> to vector<32xf32>
    %16 = vector.shape_cast %15 : vector<32xf32> to vector<32x1xf32>
    %cst_16 = arith.constant 6.400000e+01 : f32
    %17 = vector.broadcast %cst_16 : f32 to vector<32x1xf32>
    %18 = arith.divf %16, %17 : vector<32x1xf32>
    %19 = vector.broadcast %18 : vector<32x1xf32> to vector<32x64xf32>
    %20 = arith.subf %1, %19 : vector<32x64xf32>
    %21 = arith.mulf %20, %20 : vector<32x64xf32>
    %cst_17 = arith.constant dense<0.000000e+00> : vector<32xf32>
    %22 = vector.multi_reduction <add>, %21, %cst_17 [1] : vector<32x64xf32> to vector<32xf32>
    %23 = vector.shape_cast %22 : vector<32xf32> to vector<32x1xf32>
    %cst_18 = arith.constant 6.400000e+01 : f32
    %24 = vector.broadcast %cst_18 : f32 to vector<32x1xf32>
    %25 = arith.divf %23, %24 : vector<32x1xf32>
    %26 = vector.broadcast %18 : vector<32x1xf32> to vector<32x64xf32>
    %27 = arith.subf %1, %26 : vector<32x64xf32>
    %cst_19 = arith.constant 9.99999974E-6 : f32
    %28 = vector.broadcast %cst_19 : f32 to vector<32x1xf32>
    %29 = arith.addf %25, %28 : vector<32x1xf32>
    %30 = math.rsqrt %29 : vector<32x1xf32>
    %31 = vector.broadcast %30 : vector<32x1xf32> to vector<32x64xf32>
    %32 = arith.mulf %27, %31 : vector<32x64xf32>
    %33 = vector.broadcast %13 : vector<1x64xf32> to vector<32x64xf32>
    %34 = arith.mulf %32, %33 : vector<32x64xf32>
    %35 = vector.broadcast %14 : vector<1x64xf32> to vector<32x64xf32>
    %36 = arith.addf %34, %35 : vector<32x64xf32>
    %37 = arith.addf %36, %2 : vector<32x64xf32>
    %38 = arith.truncf %37 : vector<32x64xf32> to vector<32x64xbf16>
    %c0_20 = arith.constant 0 : index
    %c0_21 = arith.constant 0 : index
    %39 = vector.load %arg7[%c0_20, %c0_21] : memref<64x128xbf16, #tpu.memory_space<vmem>>, vector<64x128xbf16>
    %cst_22 = arith.constant dense<0.000000e+00> : vector<32x128xf32>
    %40 = tpu.matmul %38, %39, %cst_22 {dimension_numbers = #tpu.dot_dimension_numbers<[1], [0], [0], [1], [0, 0, 1, 1], [], []>} : vector<32x64xbf16>, vector<64x128xbf16>, vector<32x128xf32> -> vector<32x128xf32>
    %c0_23 = arith.constant 0 : index
    %c0_24 = arith.constant 0 : index
    %41 = vector.load %arg8[%c0_23, %c0_24] : memref<1x128xf32, #tpu.memory_space<vmem>>, vector<1x128xf32>
    %42 = vector.broadcast %41 : vector<1x128xf32> to vector<32x128xf32>
    %43 = arith.addf %40, %42 : vector<32x128xf32>
    %44 = vector.shape_cast %43 : vector<32x128xf32> to vector<32x1x128xf32>
    %45 = vector.broadcast %44 : vector<32x1x128xf32> to vector<32x8x128xf32>
    %46 = arith.mulf %45, %11 : vector<32x8x128xf32>
    %47 = vector.shape_cast %46 : vector<32x8x128xf32> to vector<256x128xf32>
    %48 = arith.truncf %47 : vector<256x128xf32> to vector<256x128xbf16>
    %c0_25 = arith.constant 0 : index
    %c0_26 = arith.constant 0 : index
    %49 = vector.load %arg17[%c0_25, %c0_26] : memref<128x128xbf16, #tpu.memory_space<vmem>>, vector<128x128xbf16>
    %cst_27 = arith.constant dense<0.000000e+00> : vector<256x128xf32>
    %50 = tpu.matmul %48, %49, %cst_27 {dimension_numbers = #tpu.dot_dimension_numbers<[1], [0], [0], [1], [0, 0, 1, 1], [], []>} : vector<256x128xbf16>, vector<128x128xbf16>, vector<256x128xf32> -> vector<256x128xf32>
    %51 = vector.shape_cast %50 : vector<256x128xf32> to vector<32x8x128xf32>
    %cst_28 = arith.constant dense<0xFF800000> : vector<32x128xf32>
    %52 = vector.multi_reduction <maximumf>, %51, %cst_28 [1] : vector<32x8x128xf32> to vector<32x128xf32>
    %53 = vector.shape_cast %52 : vector<32x128xf32> to vector<32x1x128xf32>
    %54 = vector.broadcast %53 : vector<32x1x128xf32> to vector<32x8x128xf32>
    %55 = arith.subf %51, %54 : vector<32x8x128xf32>
    %56 = math.exp %55 : vector<32x8x128xf32>
    %57 = vector.shape_cast %56 : vector<32x8x128xf32> to vector<256x128xf32>
    %58 = arith.truncf %57 : vector<256x128xf32> to vector<256x128xbf16>
    %c0_29 = arith.constant 0 : index
    %c0_30 = arith.constant 0 : index
    %59 = vector.load %arg18[%c0_29, %c0_30] : memref<128x128xbf16, #tpu.memory_space<vmem>>, vector<128x128xbf16>
    %cst_31 = arith.constant dense<0.000000e+00> : vector<256x128xf32>
    %60 = tpu.matmul %58, %59, %cst_31 {dimension_numbers = #tpu.dot_dimension_numbers<[1], [0], [0], [1], [0, 0, 1, 1], [], []>} : vector<256x128xbf16>, vector<128x128xbf16>, vector<256x128xf32> -> vector<256x128xf32>
    %61 = vector.shape_cast %60 : vector<256x128xf32> to vector<32x8x128xf32>
    %62 = arith.mulf %61, %11 : vector<32x8x128xf32>
    %cst_32 = arith.constant dense<0.000000e+00> : vector<32x128xf32>
    %63 = vector.multi_reduction <add>, %62, %cst_32 [1] : vector<32x8x128xf32> to vector<32x128xf32>
    %cst_33 = arith.constant dense<0.000000e+00> : vector<32x128xf32>
    %64 = vector.multi_reduction <add>, %61, %cst_33 [1] : vector<32x8x128xf32> to vector<32x128xf32>
    %cst_34 = arith.constant 1.000000e+00 : f32
    %65 = vector.broadcast %cst_34 : f32 to vector<32x128xf32>
    %66 = arith.maximumf %64, %65 : vector<32x128xf32>
    %67 = tpu.reciprocal %66 {approx = true} : vector<32x128xf32> -> vector<32x128xf32>
    %68 = arith.mulf %63, %67 : vector<32x128xf32>
    %69 = tpu.iota {dimensions = array<i32: 1>} : vector<32x128xi32>
    %c64_i32 = arith.constant 64 : i32
    %70 = vector.broadcast %c64_i32 : i32 to vector<32x128xi32>
    %71 = arith.cmpi slt, %69, %70 : vector<32x128xi32>
    %72 = arith.select %71, %0, %68 : vector<32x128xi1>, vector<32x128xf32>
    %73 = arith.truncf %72 : vector<32x128xf32> to vector<32x128xbf16>
    %c0_35 = arith.constant 0 : index
    %c0_36 = arith.constant 0 : index
    %74 = vector.load %arg11[%c0_35, %c0_36] : memref<128x64xbf16, #tpu.memory_space<vmem>>, vector<128x64xbf16>
    %cst_37 = arith.constant dense<0.000000e+00> : vector<32x64xf32>
    %75 = tpu.matmul %73, %74, %cst_37 {dimension_numbers = #tpu.dot_dimension_numbers<[1], [0], [0], [1], [0, 0, 1, 1], [], []>} : vector<32x128xbf16>, vector<128x64xbf16>, vector<32x64xf32> -> vector<32x64xf32>
    %c0_38 = arith.constant 0 : index
    %c0_39 = arith.constant 0 : index
    %76 = vector.load %arg12[%c0_38, %c0_39] : memref<1x64xf32, #tpu.memory_space<vmem>>, vector<1x64xf32>
    %77 = vector.broadcast %76 : vector<1x64xf32> to vector<32x64xf32>
    %78 = arith.addf %75, %77 : vector<32x64xf32>
    %79 = arith.addf %1, %78 : vector<32x64xf32>
    %c0_40 = arith.constant 0 : index
    %c0_41 = arith.constant 0 : index
    %80 = vector.load %arg5[%c0_40, %c0_41] : memref<1x64xf32, #tpu.memory_space<vmem>>, vector<1x64xf32>
    %c0_42 = arith.constant 0 : index
    %c0_43 = arith.constant 0 : index
    %81 = vector.load %arg6[%c0_42, %c0_43] : memref<1x64xf32, #tpu.memory_space<vmem>>, vector<1x64xf32>
    %cst_44 = arith.constant dense<0.000000e+00> : vector<32xf32>
    %82 = vector.multi_reduction <add>, %79, %cst_44 [1] : vector<32x64xf32> to vector<32xf32>
    %83 = vector.shape_cast %82 : vector<32xf32> to vector<32x1xf32>
    %cst_45 = arith.constant 6.400000e+01 : f32
    %84 = vector.broadcast %cst_45 : f32 to vector<32x1xf32>
    %85 = arith.divf %83, %84 : vector<32x1xf32>
    %86 = vector.broadcast %85 : vector<32x1xf32> to vector<32x64xf32>
    %87 = arith.subf %79, %86 : vector<32x64xf32>
    %88 = arith.mulf %87, %87 : vector<32x64xf32>
    %cst_46 = arith.constant dense<0.000000e+00> : vector<32xf32>
    %89 = vector.multi_reduction <add>, %88, %cst_46 [1] : vector<32x64xf32> to vector<32xf32>
    %90 = vector.shape_cast %89 : vector<32xf32> to vector<32x1xf32>
    %cst_47 = arith.constant 6.400000e+01 : f32
    %91 = vector.broadcast %cst_47 : f32 to vector<32x1xf32>
    %92 = arith.divf %90, %91 : vector<32x1xf32>
    %93 = vector.broadcast %85 : vector<32x1xf32> to vector<32x64xf32>
    %94 = arith.subf %79, %93 : vector<32x64xf32>
    %cst_48 = arith.constant 9.99999974E-6 : f32
    %95 = vector.broadcast %cst_48 : f32 to vector<32x1xf32>
    %96 = arith.addf %92, %95 : vector<32x1xf32>
    %97 = math.rsqrt %96 : vector<32x1xf32>
    %98 = vector.broadcast %97 : vector<32x1xf32> to vector<32x64xf32>
    %99 = arith.mulf %94, %98 : vector<32x64xf32>
    %100 = vector.broadcast %80 : vector<1x64xf32> to vector<32x64xf32>
    %101 = arith.mulf %99, %100 : vector<32x64xf32>
    %102 = vector.broadcast %81 : vector<1x64xf32> to vector<32x64xf32>
    %103 = arith.addf %101, %102 : vector<32x64xf32>
    %104 = arith.truncf %103 : vector<32x64xf32> to vector<32x64xbf16>
    %c0_49 = arith.constant 0 : index
    %c0_50 = arith.constant 0 : index
    %105 = vector.load %arg13[%c0_49, %c0_50] : memref<64x64xbf16, #tpu.memory_space<vmem>>, vector<64x64xbf16>
    %cst_51 = arith.constant dense<0.000000e+00> : vector<32x64xf32>
    %106 = tpu.matmul %104, %105, %cst_51 {dimension_numbers = #tpu.dot_dimension_numbers<[1], [0], [0], [1], [0, 0, 1, 1], [], []>} : vector<32x64xbf16>, vector<64x64xbf16>, vector<32x64xf32> -> vector<32x64xf32>
    %c0_52 = arith.constant 0 : index
    %c0_53 = arith.constant 0 : index
    %107 = vector.load %arg14[%c0_52, %c0_53] : memref<1x64xf32, #tpu.memory_space<vmem>>, vector<1x64xf32>
    %108 = vector.broadcast %107 : vector<1x64xf32> to vector<32x64xf32>
    %109 = arith.addf %106, %108 : vector<32x64xf32>
    %cst_54 = arith.constant 5.000000e-01 : f32
    %110 = vector.broadcast %cst_54 : f32 to vector<32x64xf32>
    %111 = arith.mulf %110, %109 : vector<32x64xf32>
    %cst_55 = arith.constant 0.707106769 : f32
    %112 = vector.broadcast %cst_55 : f32 to vector<32x64xf32>
    %113 = arith.mulf %109, %112 : vector<32x64xf32>
    %cst_56 = arith.constant 0.000000e+00 : f32
    %114 = vector.broadcast %cst_56 : f32 to vector<32x64xf32>
    %115 = arith.cmpf oge, %113, %114 : vector<32x64xf32>
    %cst_57 = arith.constant 1.000000e+00 : f32
    %cst_58 = arith.constant -1.000000e+00 : f32
    %116 = vector.broadcast %cst_57 : f32 to vector<32x64xf32>
    %117 = vector.broadcast %cst_58 : f32 to vector<32x64xf32>
    %118 = arith.select %115, %116, %117 : vector<32x64xi1>, vector<32x64xf32>
    %119 = math.absf %113 : vector<32x64xf32>
    %cst_59 = arith.constant 0.327591091 : f32
    %120 = vector.broadcast %cst_59 : f32 to vector<32x64xf32>
    %121 = arith.mulf %120, %119 : vector<32x64xf32>
    %cst_60 = arith.constant 1.000000e+00 : f32
    %122 = vector.broadcast %cst_60 : f32 to vector<32x64xf32>
    %123 = arith.addf %122, %121 : vector<32x64xf32>
    %cst_61 = arith.constant 1.000000e+00 : f32
    %124 = vector.broadcast %cst_61 : f32 to vector<32x64xf32>
    %125 = arith.divf %124, %123 : vector<32x64xf32>
    %cst_62 = arith.constant 1.06140542 : f32
    %126 = vector.broadcast %cst_62 : f32 to vector<32x64xf32>
    %127 = arith.mulf %125, %126 : vector<32x64xf32>
    %cst_63 = arith.constant -1.45315206 : f32
    %128 = vector.broadcast %cst_63 : f32 to vector<32x64xf32>
    %129 = arith.addf %128, %127 : vector<32x64xf32>
    %130 = arith.mulf %125, %129 : vector<32x64xf32>
    %cst_64 = arith.constant 1.42141378 : f32
    %131 = vector.broadcast %cst_64 : f32 to vector<32x64xf32>
    %132 = arith.addf %131, %130 : vector<32x64xf32>
    %133 = arith.mulf %125, %132 : vector<32x64xf32>
    %cst_65 = arith.constant -0.284496725 : f32
    %134 = vector.broadcast %cst_65 : f32 to vector<32x64xf32>
    %135 = arith.addf %134, %133 : vector<32x64xf32>
    %136 = arith.mulf %125, %135 : vector<32x64xf32>
    %cst_66 = arith.constant 0.254829586 : f32
    %137 = vector.broadcast %cst_66 : f32 to vector<32x64xf32>
    %138 = arith.addf %137, %136 : vector<32x64xf32>
    %139 = arith.mulf %125, %138 : vector<32x64xf32>
    %cst_67 = arith.constant 0.000000e+00 : f32
    %140 = vector.broadcast %cst_67 : f32 to vector<32x64xf32>
    %141 = arith.subf %140, %119 : vector<32x64xf32>
    %142 = arith.mulf %141, %119 : vector<32x64xf32>
    %143 = math.exp %142 : vector<32x64xf32>
    %144 = arith.mulf %139, %143 : vector<32x64xf32>
    %cst_68 = arith.constant 1.000000e+00 : f32
    %145 = vector.broadcast %cst_68 : f32 to vector<32x64xf32>
    %146 = arith.subf %145, %144 : vector<32x64xf32>
    %147 = arith.mulf %118, %146 : vector<32x64xf32>
    %cst_69 = arith.constant 1.000000e+00 : f32
    %148 = vector.broadcast %cst_69 : f32 to vector<32x64xf32>
    %149 = arith.addf %148, %147 : vector<32x64xf32>
    %150 = arith.mulf %111, %149 : vector<32x64xf32>
    %151 = arith.truncf %150 : vector<32x64xf32> to vector<32x64xbf16>
    %c0_70 = arith.constant 0 : index
    %c0_71 = arith.constant 0 : index
    %152 = vector.load %arg15[%c0_70, %c0_71] : memref<64x64xbf16, #tpu.memory_space<vmem>>, vector<64x64xbf16>
    %cst_72 = arith.constant dense<0.000000e+00> : vector<32x64xf32>
    %153 = tpu.matmul %151, %152, %cst_72 {dimension_numbers = #tpu.dot_dimension_numbers<[1], [0], [0], [1], [0, 0, 1, 1], [], []>} : vector<32x64xbf16>, vector<64x64xbf16>, vector<32x64xf32> -> vector<32x64xf32>
    %c0_73 = arith.constant 0 : index
    %c0_74 = arith.constant 0 : index
    %154 = vector.load %arg16[%c0_73, %c0_74] : memref<1x64xf32, #tpu.memory_space<vmem>>, vector<1x64xf32>
    %155 = vector.broadcast %154 : vector<1x64xf32> to vector<32x64xf32>
    %156 = arith.addf %153, %155 : vector<32x64xf32>
    %157 = arith.addf %79, %156 : vector<32x64xf32>
    %c0_75 = arith.constant 0 : index
    %c0_76 = arith.constant 0 : index
    %158 = vector.load %arg19[%c0_75, %c0_76] : memref<32x64xf32, #tpu.memory_space<vmem>>, vector<32x64xf32>
    tpu.vector_store %arg19[%c0_75, %c0_76], %157 {strides = array<i32>} : memref<32x64xf32, #tpu.memory_space<vmem>>, vector<32x64xf32>,
    return
  }
  func.func @transform_0(%arg0: i32) -> (i32, i32) {
    %c0_i32 = arith.constant 0 : i32
    %c0_i32_0 = arith.constant 0 : i32
    return %arg0, %c0_i32 : i32, i32
  }
  func.func @transform_1(%arg0: i32) -> (i32, i32, i32) {
    %c0_i32 = arith.constant 0 : i32
    %c0_i32_0 = arith.constant 0 : i32
    %c0_i32_1 = arith.constant 0 : i32
    return %arg0, %c0_i32, %c0_i32_0 : i32, i32, i32
  }
  func.func @transform_2(%arg0: i32) -> (i32, i32) {
    %c0_i32 = arith.constant 0 : i32
    %c0_i32_0 = arith.constant 0 : i32
    %c0_i32_1 = arith.constant 0 : i32
    return %c0_i32, %c0_i32_0 : i32, i32
  }
  func.func @transform_3(%arg0: i32) -> (i32, i32) {
    %c0_i32 = arith.constant 0 : i32
    %c0_i32_0 = arith.constant 0 : i32
    %c0_i32_1 = arith.constant 0 : i32
    return %c0_i32, %c0_i32_0 : i32, i32
  }
  func.func @transform_4(%arg0: i32) -> (i32, i32) {
    %c0_i32 = arith.constant 0 : i32
    %c0_i32_0 = arith.constant 0 : i32
    %c0_i32_1 = arith.constant 0 : i32
    return %c0_i32, %c0_i32_0 : i32, i32
  }
  func.func @transform_5(%arg0: i32) -> (i32, i32) {
    %c0_i32 = arith.constant 0 : i32
    %c0_i32_0 = arith.constant 0 : i32
    %c0_i32_1 = arith.constant 0 : i32
    return %c0_i32, %c0_i32_0 : i32, i32
  }
  func.func @transform_6(%arg0: i32) -> (i32, i32) {
    %c0_i32 = arith.constant 0 : i32
    %c0_i32_0 = arith.constant 0 : i32
    %c0_i32_1 = arith.constant 0 : i32
    return %c0_i32, %c0_i32_0 : i32, i32
  }
  func.func @transform_7(%arg0: i32) -> (i32, i32) {
    %c0_i32 = arith.constant 0 : i32
    %c0_i32_0 = arith.constant 0 : i32
    %c0_i32_1 = arith.constant 0 : i32
    return %c0_i32, %c0_i32_0 : i32, i32
  }
  func.func @transform_8(%arg0: i32) -> (i32, i32) {
    %c0_i32 = arith.constant 0 : i32
    %c0_i32_0 = arith.constant 0 : i32
    %c0_i32_1 = arith.constant 0 : i32
    return %c0_i32, %c0_i32_0 : i32, i32
  }
  func.func @transform_9(%arg0: i32) -> (i32, i32) {
    %c0_i32 = arith.constant 0 : i32
    %c0_i32_0 = arith.constant 0 : i32
    %c0_i32_1 = arith.constant 0 : i32
    return %c0_i32, %c0_i32_0 : i32, i32
  }
  func.func @transform_10(%arg0: i32) -> (i32, i32) {
    %c0_i32 = arith.constant 0 : i32
    %c0_i32_0 = arith.constant 0 : i32
    %c0_i32_1 = arith.constant 0 : i32
    return %c0_i32, %c0_i32_0 : i32, i32
  }
  func.func @transform_11(%arg0: i32) -> (i32, i32) {
    %c0_i32 = arith.constant 0 : i32
    %c0_i32_0 = arith.constant 0 : i32
    %c0_i32_1 = arith.constant 0 : i32
    return %c0_i32, %c0_i32_0 : i32, i32
  }
  func.func @transform_12(%arg0: i32) -> (i32, i32) {
    %c0_i32 = arith.constant 0 : i32
    %c0_i32_0 = arith.constant 0 : i32
    %c0_i32_1 = arith.constant 0 : i32
    return %c0_i32, %c0_i32_0 : i32, i32
  }
  func.func @transform_13(%arg0: i32) -> (i32, i32) {
    %c0_i32 = arith.constant 0 : i32
    %c0_i32_0 = arith.constant 0 : i32
    %c0_i32_1 = arith.constant 0 : i32
    return %c0_i32, %c0_i32_0 : i32, i32
  }
  func.func @transform_14(%arg0: i32) -> (i32, i32) {
    %c0_i32 = arith.constant 0 : i32
    %c0_i32_0 = arith.constant 0 : i32
    %c0_i32_1 = arith.constant 0 : i32
    return %c0_i32, %c0_i32_0 : i32, i32
  }
  func.func @transform_15(%arg0: i32) -> (i32, i32) {
    %c0_i32 = arith.constant 0 : i32
    %c0_i32_0 = arith.constant 0 : i32
    %c0_i32_1 = arith.constant 0 : i32
    return %c0_i32, %c0_i32_0 : i32, i32
  }
  func.func @transform_16(%arg0: i32) -> (i32, i32) {
    %c0_i32 = arith.constant 0 : i32
    %c0_i32_0 = arith.constant 0 : i32
    %c0_i32_1 = arith.constant 0 : i32
    return %c0_i32, %c0_i32_0 : i32, i32
  }
  func.func @transform_17(%arg0: i32) -> (i32, i32) {
    %c0_i32 = arith.constant 0 : i32
    %c0_i32_0 = arith.constant 0 : i32
    %c0_i32_1 = arith.constant 0 : i32
    return %c0_i32, %c0_i32_0 : i32, i32
  }
  func.func @transform_18(%arg0: i32) -> (i32, i32) {
    %c0_i32 = arith.constant 0 : i32
    %c0_i32_0 = arith.constant 0 : i32
    return %arg0, %c0_i32 : i32, i32
  }
  func.func @transform_19(%arg0: i32) -> (i32, i32, i32) {
    %c0_i32 = arith.constant 0 : i32
    %c0_i32_0 = arith.constant 0 : i32
    %c0_i32_1 = arith.constant 0 : i32
    return %arg0, %c0_i32, %c0_i32_0 : i32, i32, i32
  }
}

</mosaic_0001>

<llo_original>
// kernel: cross_attention_layer.1
$region0: #{cross_attention_layer.1}
  #allocation0 [shape = 'u32[]', space=smem, size = 0x4, offset = 0x4, fixed_abs, tag = 'smem constant byte address 0x4 - core index']
  #allocation1 [shape = 'u32[144,128]{1,0:T(1,128)}', space=vmem, size = 0x12000, scoped, tag = 'internal scratch']
  %s0 = inlined_call_operand.vmem [shape: f32[32,128], index: 0, kind: input, shape index: {}]
  %s1 = inlined_call_operand.vmem [shape: f32[32,8,128], index: 1, kind: input, shape index: {}]
  %s2 = inlined_call_operand.vmem [shape: f32[1,64], index: 2, kind: input, shape index: {}]
  %s3 = inlined_call_operand.vmem [shape: f32[1,64], index: 3, kind: input, shape index: {}]
  %s4 = inlined_call_operand.vmem [shape: f32[1,64], index: 4, kind: input, shape index: {}]
  %s5 = inlined_call_operand.vmem [shape: f32[1,64], index: 5, kind: input, shape index: {}]
  %s6 = inlined_call_operand.vmem [shape: bf16[64,128], index: 6, kind: input, shape index: {}]
  %s7 = inlined_call_operand.vmem [shape: f32[1,128], index: 7, kind: input, shape index: {}]
  %s8 = inlined_call_operand.vmem [shape: bf16[128,128], index: 8, kind: input, shape index: {}]
  %s9 = inlined_call_operand.vmem [shape: f32[1,128], index: 9, kind: input, shape index: {}]
  %s10 = inlined_call_operand.vmem [shape: bf16[128,64], index: 10, kind: input, shape index: {}]
  %s11 = inlined_call_operand.vmem [shape: f32[1,64], index: 11, kind: input, shape index: {}]
  %s12 = inlined_call_operand.vmem [shape: bf16[64,64], index: 12, kind: input, shape index: {}]
  %s13 = inlined_call_operand.vmem [shape: f32[1,64], index: 13, kind: input, shape index: {}]
  %s14 = inlined_call_operand.vmem [shape: bf16[64,64], index: 14, kind: input, shape index: {}]
  %s15 = inlined_call_operand.vmem [shape: f32[1,64], index: 15, kind: input, shape index: {}]
  %s16 = inlined_call_operand.vmem [shape: bf16[128,128], index: 16, kind: input, shape index: {}]
  %s17 = inlined_call_operand.vmem [shape: bf16[128,128], index: 17, kind: input, shape index: {}]
  %s18 = inlined_call_operand.hbm [shape: f32[32,64], index: 18, kind: output, shape index: {0}]
  %s19 = inlined_call_operand.vmem [shape: f32[32,8,128], index: 19, kind: output, shape index: {1}]
  %20 = xla_tuple %s18, %s19
  %s21 = sld [smem:[#allocation0]]
  $region90: #{cross_attention_layer.1} parent=0
    _
  %s23 = ssub.s32 1, %s21
  %s24 = scalar_select 0, %s23, %s21
  $region1: #{cross_attention_layer.1} parent=0
    #allocation2 [shape = 'u8[16384]{0}', space=vmem, size = 0x4000, scoped, tag = 'output window, operand 0, single buffered']
    #allocation3 [shape = 's32[1]{0}', space=sflag, size = 0x4, scoped, tag = 'scoped memory for cross_attention_layer.1']
    %25 = vsyncpa [#allocation3], 0
    // Predicated region
    $region2: #{cross_attention_layer.1} parent=1 // pred_check
      _
    $region3: #{cross_attention_layer.1} parent=1 // pred_check_branch
      %27 = sbr.rel (0) target = $region5
    $region4: #{cross_attention_layer.1} parent=1 // pred_region
      _
    $region5: #{cross_attention_layer.1} parent=1 // pred_fallthru
      _
    // Predicated region
    $region6: #{cross_attention_layer.1} parent=1 // pred_check
      _
    $region7: #{cross_attention_layer.1} parent=1 // pred_check_branch
      %29 = sbr.rel (0) target = $region9
    $region8: #{cross_attention_layer.1} parent=1 // pred_region
      _
    $region9: #{cross_attention_layer.1} parent=1 // pred_fallthru
      _
    // Predicated region
    $region10: #{cross_attention_layer.1} parent=1 // pred_check
      _
    $region11: #{cross_attention_layer.1} parent=1 // pred_check_branch
      %31 = sbr.rel (0) target = $region13
    $region12: #{cross_attention_layer.1} parent=1 // pred_region
      _
    $region13: #{cross_attention_layer.1} parent=1 // pred_fallthru
      _
    // Predicated region
    $region14: #{cross_attention_layer.1} parent=1 // pred_check
      _
    $region15: #{cross_attention_layer.1} parent=1 // pred_check_branch
      %33 = sbr.rel (0) target = $region17
    $region16: #{cross_attention_layer.1} parent=1 // pred_region
      _
    $region17: #{cross_attention_layer.1} parent=1 // pred_fallthru
      _
    // Predicated region
    $region18: #{cross_attention_layer.1} parent=1 // pred_check
      _
    $region19: #{cross_attention_layer.1} parent=1 // pred_check_branch
      %35 = sbr.rel (0) target = $region21
    $region20: #{cross_attention_layer.1} parent=1 // pred_region
      _
    $region21: #{cross_attention_layer.1} parent=1 // pred_fallthru
      _
    // Predicated region
    $region22: #{cross_attention_layer.1} parent=1 // pred_check
      _
    $region23: #{cross_attention_layer.1} parent=1 // pred_check_branch
      %37 = sbr.rel (0) target = $region25
    $region24: #{cross_attention_layer.1} parent=1 // pred_region
      _
    $region25: #{cross_attention_layer.1} parent=1 // pred_fallthru
      _
    // Predicated region
    $region26: #{cross_attention_layer.1} parent=1 // pred_check
      _
    $region27: #{cross_attention_layer.1} parent=1 // pred_check_branch
      %39 = sbr.rel (0) target = $region29
    $region28: #{cross_attention_layer.1} parent=1 // pred_region
      _
    $region29: #{cross_attention_layer.1} parent=1 // pred_fallthru
      _
    // Predicated region
    $region30: #{cross_attention_layer.1} parent=1 // pred_check
      _
    $region31: #{cross_attention_layer.1} parent=1 // pred_check_branch
      %41 = sbr.rel (0) target = $region33
    $region32: #{cross_attention_layer.1} parent=1 // pred_region
      _
    $region33: #{cross_attention_layer.1} parent=1 // pred_fallthru
      _
    // Predicated region
    $region34: #{cross_attention_layer.1} parent=1 // pred_check
      _
    $region35: #{cross_attention_layer.1} parent=1 // pred_check_branch
      %43 = sbr.rel (0) target = $region37
    $region36: #{cross_attention_layer.1} parent=1 // pred_region
      _
    $region37: #{cross_attention_layer.1} parent=1 // pred_fallthru
      _
    // Predicated region
    $region38: #{cross_attention_layer.1} parent=1 // pred_check
      _
    $region39: #{cross_attention_layer.1} parent=1 // pred_check_branch
      %45 = sbr.rel (0) target = $region41
    $region40: #{cross_attention_layer.1} parent=1 // pred_region
      _
    $region41: #{cross_attention_layer.1} parent=1 // pred_fallthru
      _
    // Predicated region
    $region42: #{cross_attention_layer.1} parent=1 // pred_check
      _
    $region43: #{cross_attention_layer.1} parent=1 // pred_check_branch
      %47 = sbr.rel (0) target = $region45
    $region44: #{cross_attention_layer.1} parent=1 // pred_region
      _
    $region45: #{cross_attention_layer.1} parent=1 // pred_fallthru
      _
    // Predicated region
    $region46: #{cross_attention_layer.1} parent=1 // pred_check
      _
    $region47: #{cross_attention_layer.1} parent=1 // pred_check_branch
      %49 = sbr.rel (0) target = $region49
    $region48: #{cross_attention_layer.1} parent=1 // pred_region
      _
    $region49: #{cross_attention_layer.1} parent=1 // pred_fallthru
      _
    // Predicated region
    $region50: #{cross_attention_layer.1} parent=1 // pred_check
      _
    $region51: #{cross_attention_layer.1} parent=1 // pred_check_branch
      %51 = sbr.rel (0) target = $region53
    $region52: #{cross_attention_layer.1} parent=1 // pred_region
      _
    $region53: #{cross_attention_layer.1} parent=1 // pred_fallthru
      _
    // Predicated region
    $region54: #{cross_attention_layer.1} parent=1 // pred_check
      _
    $region55: #{cross_attention_layer.1} parent=1 // pred_check_branch
      %53 = sbr.rel (0) target = $region57
    $region56: #{cross_attention_layer.1} parent=1 // pred_region
      _
    $region57: #{cross_attention_layer.1} parent=1 // pred_fallthru
      _
    // Predicated region
    $region58: #{cross_attention_layer.1} parent=1 // pred_check
      _
    $region59: #{cross_attention_layer.1} parent=1 // pred_check_branch
      %55 = sbr.rel (0) target = $region61
    $region60: #{cross_attention_layer.1} parent=1 // pred_region
      _
    $region61: #{cross_attention_layer.1} parent=1 // pred_fallthru
      _
    // Predicated region
    $region62: #{cross_attention_layer.1} parent=1 // pred_check
      _
    $region63: #{cross_attention_layer.1} parent=1 // pred_check_branch
      %57 = sbr.rel (0) target = $region65
    $region64: #{cross_attention_layer.1} parent=1 // pred_region
      _
    $region65: #{cross_attention_layer.1} parent=1 // pred_fallthru
      _
    // Predicated region
    $region66: #{cross_attention_layer.1} parent=1 // pred_check
      _
    $region67: #{cross_attention_layer.1} parent=1 // pred_check_branch
      %59 = sbr.rel (0) target = $region69
    $region68: #{cross_attention_layer.1} parent=1 // pred_region
      _
    $region69: #{cross_attention_layer.1} parent=1 // pred_fallthru
      _
    // Predicated region
    $region70: #{cross_attention_layer.1} parent=1 // pred_check
      _
    $region71: #{cross_attention_layer.1} parent=1 // pred_check_branch
      %61 = sbr.rel (0) target = $region73
    $region72: #{cross_attention_layer.1} parent=1 // pred_region
      _
    $region73: #{cross_attention_layer.1} parent=1 // pred_fallthru
      _
    %v63 = vld [vmem:[%s0] sm:$0xff]
    %v64 = vld [vmem:[%s0 + $0x8] sm:$0xff]
    %v65 = vld [vmem:[%s0 + $0x10] sm:$0xff]
    %v66 = vld [vmem:[%s0 + $0x18] sm:$0xff]
    %v67 = vld [vmem:[%s1] sm:$0xff]
    %v68 = vld [vmem:[%s1 + $0x8] sm:$0xff]
    %v69 = vld [vmem:[%s1 + $0x10] sm:$0xff]
    %v70 = vld [vmem:[%s1 + $0x18] sm:$0xff]
    %v71 = vld [vmem:[%s1 + $0x20] sm:$0xff]
    %v72 = vld [vmem:[%s1 + $0x28] sm:$0xff]
    %v73 = vld [vmem:[%s1 + $0x30] sm:$0xff]
    %v74 = vld [vmem:[%s1 + $0x38] sm:$0xff]
    %v75 = vld [vmem:[%s1 + $0x40] sm:$0xff]
    %v76 = vld [vmem:[%s1 + $0x48] sm:$0xff]
    %v77 = vld [vmem:[%s1 + $0x50] sm:$0xff]
    %v78 = vld [vmem:[%s1 + $0x58] sm:$0xff]
    %v79 = vld [vmem:[%s1 + $0x60] sm:$0xff]
    %v80 = vld [vmem:[%s1 + $0x68] sm:$0xff]
    %v81 = vld [vmem:[%s1 + $0x70] sm:$0xff]
    %v82 = vld [vmem:[%s1 + $0x78] sm:$0xff]
    %v83 = vld [vmem:[%s1 + $0x80] sm:$0xff]
    %v84 = vld [vmem:[%s1 + $0x88] sm:$0xff]
    %v85 = vld [vmem:[%s1 + $0x90] sm:$0xff]
    %v86 = vld [vmem:[%s1 + $0x98] sm:$0xff]
    %v87 = vld [vmem:[%s1 + $0xa0] sm:$0xff]
    %v88 = vld [vmem:[%s1 + $0xa8] sm:$0xff]
    %v89 = vld [vmem:[%s1 + $0xb0] sm:$0xff]
    %v90 = vld [vmem:[%s1 + $0xb8] sm:$0xff]
    %v91 = vld [vmem:[%s1 + $0xc0] sm:$0xff]
    %v92 = vld [vmem:[%s1 + $0xc8] sm:$0xff]
    %v93 = vld [vmem:[%s1 + $0xd0] sm:$0xff]
    %v94 = vld [vmem:[%s1 + $0xd8] sm:$0xff]
    %v95 = vld [vmem:[%s1 + $0xe0] sm:$0xff]
    %v96 = vld [vmem:[%s1 + $0xe8] sm:$0xff]
    %v97 = vld [vmem:[%s1 + $0xf0] sm:$0xff]
    %v98 = vld [vmem:[%s1 + $0xf8] sm:$0xff]
    %v99 = vpack.c.bf16 %v68, %v67
    %v100 = vpack.c.bf16 %v70, %v69
    %v101 = vpack.c.bf16 %v72, %v71
    %v102 = vpack.c.bf16 %v74, %v73
    %v103 = vpack.c.bf16 %v76, %v75
    %v104 = vpack.c.bf16 %v78, %v77
    %v105 = vpack.c.bf16 %v80, %v79
    %v106 = vpack.c.bf16 %v82, %v81
    %v107 = vpack.c.bf16 %v84, %v83
    %v108 = vpack.c.bf16 %v86, %v85
    %v109 = vpack.c.bf16 %v88, %v87
    %v110 = vpack.c.bf16 %v90, %v89
    %v111 = vpack.c.bf16 %v92, %v91
    %v112 = vpack.c.bf16 %v94, %v93
    %v113 = vpack.c.bf16 %v96, %v95
    %v114 = vpack.c.bf16 %v98, %v97
    %v115 = vld [vmem:[%s8] sm:$0xf]
    %v116 = vld [vmem:[%s8 + $0x4] sm:$0xf]
    %v117 = vld [vmem:[%s8 + $0x8] sm:$0xf]
    %v118 = vld [vmem:[%s8 + $0xc] sm:$0xf]
    %v119 = vld [vmem:[%s8 + $0x10] sm:$0xf]
    %v120 = vld [vmem:[%s8 + $0x14] sm:$0xf]
    %v121 = vld [vmem:[%s8 + $0x18] sm:$0xf]
    %v122 = vld [vmem:[%s8 + $0x1c] sm:$0xf]
    %v123 = vld [vmem:[%s8 + $0x20] sm:$0xf]
    %v124 = vld [vmem:[%s8 + $0x24] sm:$0xf]
    %v125 = vld [vmem:[%s8 + $0x28] sm:$0xf]
    %v126 = vld [vmem:[%s8 + $0x2c] sm:$0xf]
    %v127 = vld [vmem:[%s8 + $0x30] sm:$0xf]
    %v128 = vld [vmem:[%s8 + $0x34] sm:$0xf]
    %v129 = vld [vmem:[%s8 + $0x38] sm:$0xf]
    %v130 = vld [vmem:[%s8 + $0x3c] sm:$0xf]
    %v131 = vld [vmem:[%s9] sm:$0x1]
    %v133 = vlaneseq
    %v134 = vshrl.u32 %v133, 7
    %v135 = vsub.s32 0, %v134
    %v136 = vrot.slane %v131, %v135
    %v154 = vunpack.c.l.b16 %v115
    %v155 = vunpack.c.l.b16 %v116
    %v156 = vunpack.c.l.b16 %v117
    %v157 = vunpack.c.l.b16 %v118
    %v158 = vunpack.c.l.b16 %v119
    %v159 = vunpack.c.l.b16 %v120
    %v160 = vunpack.c.l.b16 %v121
    %v161 = vunpack.c.l.b16 %v122
    %v162 = vunpack.c.l.b16 %v123
    %v163 = vunpack.c.l.b16 %v124
    %v164 = vunpack.c.l.b16 %v125
    %v165 = vunpack.c.l.b16 %v126
    %v166 = vunpack.c.l.b16 %v127
    %v167 = vunpack.c.l.b16 %v128
    %v168 = vunpack.c.l.b16 %v129
    %v169 = vunpack.c.l.b16 %v130
    %v170 = vpack.c.b16 %v155, %v154
    %v171 = vpack.c.b16 %v157, %v156
    %v172 = vpack.c.b16 %v159, %v158
    %v173 = vpack.c.b16 %v161, %v160
    %v174 = vpack.c.b16 %v163, %v162
    %v175 = vpack.c.b16 %v165, %v164
    %v176 = vpack.c.b16 %v167, %v166
    %v177 = vpack.c.b16 %v169, %v168
    %186 = vmatprep.subr.bf16.mxu0 0
    %187 = vmatpush1.bf16.msra.mxu0 %v170
    %188 = vmatprep.subr.bf16.mxu0 0
    %189 = vmatpush1.bf16.msra.mxu0 %v171
    %190 = vmatprep.subr.bf16.mxu0 0
    %191 = vmatpush1.bf16.msra.mxu0 %v172
    %192 = vmatprep.subr.bf16.mxu0 0
    %193 = vmatpush1.bf16.msra.mxu0 %v173
    %194 = vmatprep.subr.bf16.mxu0 0
    %195 = vmatpush1.bf16.msra.mxu0 %v174
    %196 = vmatprep.subr.bf16.mxu0 0
    %197 = vmatpush1.bf16.msra.mxu0 %v175
    %198 = vmatprep.subr.bf16.mxu0 0
    %199 = vmatpush1.bf16.msra.mxu0 %v176
    %200 = vmatprep.subr.bf16.mxu0 0
    %201 = vmatpush1.bf16.msra.mxu0 %v177
    %202 = vmatprep.subr.bf16.mxu0 0
    %203 = vmatpush1.bf16.msra.mxu0 0
    %204 = vmatprep.subr.bf16.mxu0 0
    %205 = vmatpush1.bf16.msra.mxu0 0
    %206 = vmatprep.subr.bf16.mxu0 0
    %207 = vmatpush1.bf16.msra.mxu0 0
    %208 = vmatprep.subr.bf16.mxu0 0
    %209 = vmatpush1.bf16.msra.mxu0 0
    %210 = vmatprep.subr.bf16.mxu0 0
    %211 = vmatpush1.bf16.msra.mxu0 0
    %212 = vmatprep.subr.bf16.mxu0 0
    %213 = vmatpush1.bf16.msra.mxu0 0
    %214 = vmatprep.subr.bf16.mxu0 0
    %215 = vmatpush1.bf16.msra.mxu0 0
    %216 = vmatprep.subr.bf16.mxu0 0
    %217 = vmatpush1.bf16.msra.mxu0 0
    %218 = vmatprep.mubr.bf16.mxu0 0
    %219 = vmatmul.mubr.bf16.gmra.mrb[0].mxu0 %v99
    %v220 = vpop.f32.mrb[0].mxu0
    %v221 = vadd.f32 %v136, %v220
    %v222 = vpop.f32.mrb[0].mxu0
    %v223 = vpop.f32.mrb[0].mxu0
    %v224 = vadd.f32 %v136, %v223
    %v225 = vpop.f32.mrb[0].mxu0
    %226 = vmatprep.mubr.bf16.mxu0 0
    %227 = vmatmul.mubr.bf16.gmra.mrb[0].mxu0 %v100
    %v228 = vpop.f32.mrb[0].mxu0
    %v229 = vadd.f32 %v136, %v228
    %v230 = vpop.f32.mrb[0].mxu0
    %v231 = vpop.f32.mrb[0].mxu0
    %v232 = vadd.f32 %v136, %v231
    %v233 = vpop.f32.mrb[0].mxu0
    %234 = vmatprep.mubr.bf16.mxu0 0
    %235 = vmatmul.mubr.bf16.gmra.mrb[0].mxu0 %v101
    %v236 = vpop.f32.mrb[0].mxu0
    %v237 = vadd.f32 %v136, %v236
    %v238 = vpop.f32.mrb[0].mxu0
    %v239 = vpop.f32.mrb[0].mxu0
    %v240 = vadd.f32 %v136, %v239
    %v241 = vpop.f32.mrb[0].mxu0
    %242 = vmatprep.mubr.bf16.mxu0 0
    %243 = vmatmul.mubr.bf16.gmra.mrb[0].mxu0 %v102
    %v244 = vpop.f32.mrb[0].mxu0
    %v245 = vadd.f32 %v136, %v244
    %v246 = vpop.f32.mrb[0].mxu0
    %v247 = vpop.f32.mrb[0].mxu0
    %v248 = vadd.f32 %v136, %v247
    %v249 = vpop.f32.mrb[0].mxu0
    %250 = vmatprep.mubr.bf16.mxu0 0
    %251 = vmatmul.mubr.bf16.gmra.mrb[0].mxu0 %v103
    %v252 = vpop.f32.mrb[0].mxu0
    %v253 = vadd.f32 %v136, %v252
    %v254 = vpop.f32.mrb[0].mxu0
    %v255 = vpop.f32.mrb[0].mxu0
    %v256 = vadd.f32 %v136, %v255
    %v257 = vpop.f32.mrb[0].mxu0
    %258 = vmatprep.mubr.bf16.mxu0 0
    %259 = vmatmul.mubr.bf16.gmra.mrb[0].mxu0 %v104
    %v260 = vpop.f32.mrb[0].mxu0
    %v261 = vadd.f32 %v136, %v260
    %v262 = vpop.f32.mrb[0].mxu0
    %v263 = vpop.f32.mrb[0].mxu0
    %v264 = vadd.f32 %v136, %v263
    %v265 = vpop.f32.mrb[0].mxu0
    %266 = vmatprep.mubr.bf16.mxu0 0
    %267 = vmatmul.mubr.bf16.gmra.mrb[0].mxu0 %v105
    %v268 = vpop.f32.mrb[0].mxu0
    %v269 = vadd.f32 %v136, %v268
    %v270 = vpop.f32.mrb[0].mxu0
    %v271 = vpop.f32.mrb[0].mxu0
    %v272 = vadd.f32 %v136, %v271
    %v273 = vpop.f32.mrb[0].mxu0
    %274 = vmatprep.mubr.bf16.mxu0 0
    %275 = vmatmul.mubr.bf16.gmra.mrb[0].mxu0 %v106
    %v276 = vpop.f32.mrb[0].mxu0
    %v277 = vadd.f32 %v136, %v276
    %v278 = vpop.f32.mrb[0].mxu0
    %v279 = vpop.f32.mrb[0].mxu0
    %v280 = vadd.f32 %v136, %v279
    %v281 = vpop.f32.mrb[0].mxu0
    %282 = vmatprep.mubr.bf16.mxu0 0
    %283 = vmatmul.mubr.bf16.gmra.mrb[0].mxu0 %v107
    %v284 = vpop.f32.mrb[0].mxu0
    %v285 = vadd.f32 %v136, %v284
    %v286 = vpop.f32.mrb[0].mxu0
    %v287 = vpop.f32.mrb[0].mxu0
    %v288 = vadd.f32 %v136, %v287
    %v289 = vpop.f32.mrb[0].mxu0
    %290 = vmatprep.mubr.bf16.mxu0 0
    %291 = vmatmul.mubr.bf16.gmra.mrb[0].mxu0 %v108
    %v292 = vpop.f32.mrb[0].mxu0
    %v293 = vadd.f32 %v136, %v292
    %v294 = vpop.f32.mrb[0].mxu0
    %v295 = vpop.f32.mrb[0].mxu0
    %v296 = vadd.f32 %v136, %v295
    %v297 = vpop.f32.mrb[0].mxu0
    %298 = vmatprep.mubr.bf16.mxu0 0
    %299 = vmatmul.mubr.bf16.gmra.mrb[0].mxu0 %v109
    %v300 = vpop.f32.mrb[0].mxu0
    %v301 = vadd.f32 %v136, %v300
    %v302 = vpop.f32.mrb[0].mxu0
    %v303 = vpop.f32.mrb[0].mxu0
    %v304 = vadd.f32 %v136, %v303
    %v305 = vpop.f32.mrb[0].mxu0
    %306 = vmatprep.mubr.bf16.mxu0 0
    %307 = vmatmul.mubr.bf16.gmra.mrb[0].mxu0 %v110
    %v308 = vpop.f32.mrb[0].mxu0
    %v309 = vadd.f32 %v136, %v308
    %v310 = vpop.f32.mrb[0].mxu0
    %v311 = vpop.f32.mrb[0].mxu0
    %v312 = vadd.f32 %v136, %v311
    %v313 = vpop.f32.mrb[0].mxu0
    %314 = vmatprep.mubr.bf16.mxu0 0
    %315 = vmatmul.mubr.bf16.gmra.mrb[0].mxu0 %v111
    %v316 = vpop.f32.mrb[0].mxu0
    %v317 = vadd.f32 %v136, %v316
    %v318 = vpop.f32.mrb[0].mxu0
    %v319 = vpop.f32.mrb[0].mxu0
    %v320 = vadd.f32 %v136, %v319
    %v321 = vpop.f32.mrb[0].mxu0
    %322 = vmatprep.mubr.bf16.mxu0 0
    %323 = vmatmul.mubr.bf16.gmra.mrb[0].mxu0 %v112
    %v324 = vpop.f32.mrb[0].mxu0
    %v325 = vadd.f32 %v136, %v324
    %v326 = vpop.f32.mrb[0].mxu0
    %v327 = vpop.f32.mrb[0].mxu0
    %v328 = vadd.f32 %v136, %v327
    %v329 = vpop.f32.mrb[0].mxu0
    %330 = vmatprep.mubr.bf16.mxu0 0
    %331 = vmatmul.mubr.bf16.gmra.mrb[0].mxu0 %v113
    %v332 = vpop.f32.mrb[0].mxu0
    %v333 = vadd.f32 %v136, %v332
    %v334 = vpop.f32.mrb[0].mxu0
    %v335 = vpop.f32.mrb[0].mxu0
    %v336 = vadd.f32 %v136, %v335
    %v337 = vpop.f32.mrb[0].mxu0
    %338 = vmatprep.mubr.bf16.mxu0 0
    %339 = vmatmul.mubr.bf16.gmra.mrb[0].mxu0 %v114
    %v340 = vpop.f32.mrb[0].mxu0
    %v341 = vadd.f32 %v136, %v340
    %v342 = vpop.f32.mrb[0].mxu0
    %v343 = vpop.f32.mrb[0].mxu0
    %v344 = vadd.f32 %v136, %v343
    %v345 = vpop.f32.mrb[0].mxu0
    %346 = vdwg.mxu0
    %347 = vst [vmem:[%s19] sm:$0xff] %v221
    %348 = vst [vmem:[%s19 + $0x8] sm:$0xff] %v224
    %349 = vst [vmem:[%s19 + $0x10] sm:$0xff] %v229
    %350 = vst [vmem:[%s19 + $0x18] sm:$0xff] %v232
    %351 = vst [vmem:[%s19 + $0x20] sm:$0xff] %v237
    %352 = vst [vmem:[%s19 + $0x28] sm:$0xff] %v240
    %353 = vst [vmem:[%s19 + $0x30] sm:$0xff] %v245
    %354 = vst [vmem:[%s19 + $0x38] sm:$0xff] %v248
    %355 = vst [vmem:[%s19 + $0x40] sm:$0xff] %v253
    %356 = vst [vmem:[%s19 + $0x48] sm:$0xff] %v256
    %357 = vst [vmem:[%s19 + $0x50] sm:$0xff] %v261
    %358 = vst [vmem:[%s19 + $0x58] sm:$0xff] %v264
    %359 = vst [vmem:[%s19 + $0x60] sm:$0xff] %v269
    %360 = vst [vmem:[%s19 + $0x68] sm:$0xff] %v272
    %361 = vst [vmem:[%s19 + $0x70] sm:$0xff] %v277
    %362 = vst [vmem:[%s19 + $0x78] sm:$0xff] %v280
    %363 = vst [vmem:[%s19 + $0x80] sm:$0xff] %v285
    %364 = vst [vmem:[%s19 + $0x88] sm:$0xff] %v288
    %365 = vst [vmem:[%s19 + $0x90] sm:$0xff] %v293
    %366 = vst [vmem:[%s19 + $0x98] sm:$0xff] %v296
    %367 = vst [vmem:[%s19 + $0xa0] sm:$0xff] %v301
    %368 = vst [vmem:[%s19 + $0xa8] sm:$0xff] %v304
    %369 = vst [vmem:[%s19 + $0xb0] sm:$0xff] %v309
    %370 = vst [vmem:[%s19 + $0xb8] sm:$0xff] %v312
    %371 = vst [vmem:[%s19 + $0xc0] sm:$0xff] %v317
    %372 = vst [vmem:[%s19 + $0xc8] sm:$0xff] %v320
    %373 = vst [vmem:[%s19 + $0xd0] sm:$0xff] %v325
    %374 = vst [vmem:[%s19 + $0xd8] sm:$0xff] %v328
    %375 = vst [vmem:[%s19 + $0xe0] sm:$0xff] %v333
    %376 = vst [vmem:[%s19 + $0xe8] sm:$0xff] %v336
    %377 = vst [vmem:[%s19 + $0xf0] sm:$0xff] %v341
    %378 = vst [vmem:[%s19 + $0xf8] sm:$0xff] %v344
    %v379 = vld [vmem:[%s2] sm:$0x1]
    %v380 = vld [vmem:[%s3] sm:$0x1]
    %vm381 = vcmask 523264
    %v382 = vsel %vm381, %v63, 0.0
    %383 = vadd.xlane.f32.xlu0 %v382
    %v384 = vpop.xlane.xlu0 %383
    %v385 = vsel %vm381, %v64, 0.0
    %386 = vadd.xlane.f32.xlu0 %v385
    %v387 = vpop.xlane.xlu0 %386
    %v388 = vsel %vm381, %v65, 0.0
    %389 = vadd.xlane.f32.xlu0 %v388
    %v390 = vpop.xlane.xlu0 %389
    %v391 = vsel %vm381, %v66, 0.0
    %392 = vadd.xlane.f32.xlu0 %v391
    %v393 = vpop.xlane.xlu0 %392
    %v394 = vrcp.pop 64.0
    %v395 = vmul.f32 %v384, %v394
    %v396 = vmul.f32 %v387, %v394
    %v397 = vmul.f32 %v390, %v394
    %v398 = vmul.f32 %v393, %v394
    %v399 = vsub.f32 %v63, %v395
    %v400 = vsub.f32 %v64, %v396
    %v401 = vsub.f32 %v65, %v397
    %v402 = vsub.f32 %v66, %v398
    %v403 = vmul.f32 %v399, %v399
    %v404 = vmul.f32 %v400, %v400
    %v405 = vmul.f32 %v401, %v401
    %v406 = vmul.f32 %v402, %v402
    %v407 = vsel %vm381, %v403, 0.0
    %408 = vadd.xlane.f32.xlu0 %v407
    %v409 = vpop.xlane.xlu0 %408
    %v410 = vsel %vm381, %v404, 0.0
    %411 = vadd.xlane.f32.xlu0 %v410
    %v412 = vpop.xlane.xlu0 %411
    %v413 = vsel %vm381, %v405, 0.0
    %414 = vadd.xlane.f32.xlu0 %v413
    %v415 = vpop.xlane.xlu0 %414
    %v416 = vsel %vm381, %v406, 0.0
    %417 = vadd.xlane.f32.xlu0 %v416
    %v418 = vpop.xlane.xlu0 %417
    %v419 = vmul.f32 %v409, %v394
    %v420 = vmul.f32 %v412, %v394
    %v421 = vmul.f32 %v415, %v394
    %v422 = vmul.f32 %v418, %v394
    %v423 = vadd.f32 %v419, 1e-05
    %v424 = vadd.f32 %v420, 1e-05
    %v425 = vadd.f32 %v421, 1e-05
    %v426 = vadd.f32 %v422, 1e-05
    %v427 = vrsqrt.pop %v423
    %v428 = vrsqrt.pop %v424
    %v429 = vrsqrt.pop %v425
    %v430 = vrsqrt.pop %v426
    %v431 = vmul.f32 %v399, %v427
    %v432 = vmul.f32 %v400, %v428
    %v433 = vmul.f32 %v401, %v429
    %v434 = vmul.f32 %v402, %v430
    %v436 = vlaneseq
    %v437 = vshrl.u32 %v436, 7
    %v438 = vsub.s32 0, %v437
    %v439 = vrot.slane %v379, %v438
    %v441 = vmul.f32 %v431, %v439
    %v442 = vmul.f32 %v432, %v439
    %v443 = vmul.f32 %v433, %v439
    %v444 = vmul.f32 %v434, %v439
    %v446 = vlaneseq
    %v447 = vshrl.u32 %v446, 7
    %v448 = vsub.s32 0, %v447
    %v449 = vrot.slane %v380, %v448
    %v451 = vadd.f32 %v441, %v449
    %v452 = vadd.f32 %v442, %v449
    %v453 = vadd.f32 %v443, %v449
    %v454 = vadd.f32 %v444, %v449
    %459 = vrot.lane.b32.xlu0 %v63, 64
    %v460 = vpop.permute.xlu0 %459
    %461 = vrot.lane.b32.xlu0 %v64, 64
    %v462 = vpop.permute.xlu0 %461
    %463 = vrot.lane.b32.xlu0 %v65, 64
    %v464 = vpop.permute.xlu0 %463
    %465 = vrot.lane.b32.xlu0 %v66, 64
    %v466 = vpop.permute.xlu0 %465
    %v471 = vadd.f32 %v451, %v460
    %v472 = vadd.f32 %v452, %v462
    %v473 = vadd.f32 %v453, %v464
    %v474 = vadd.f32 %v454, %v466
    %v475 = vpack.c.bf16 %v472, %v471
    %v476 = vpack.c.bf16 %v474, %v473
    %v477 = vld [vmem:[%s6] sm:$0xf]
    %v478 = vld [vmem:[%s6 + $0x4] sm:$0xf]
    %v479 = vld [vmem:[%s6 + $0x8] sm:$0xf]
    %v480 = vld [vmem:[%s6 + $0xc] sm:$0xf]
    %v481 = vld [vmem:[%s6 + $0x10] sm:$0xf]
    %v482 = vld [vmem:[%s6 + $0x14] sm:$0xf]
    %v483 = vld [vmem:[%s6 + $0x18] sm:$0xf]
    %v484 = vld [vmem:[%s6 + $0x1c] sm:$0xf]
    %v485 = vld [vmem:[%s7] sm:$0x1]
    %v487 = vlaneseq
    %v488 = vshrl.u32 %v487, 7
    %v489 = vsub.s32 0, %v488
    %v490 = vrot.slane %v485, %v489
    %v500 = vunpack.c.l.b16 %v477
    %v501 = vunpack.c.l.b16 %v478
    %v502 = vunpack.c.l.b16 %v479
    %v503 = vunpack.c.l.b16 %v480
    %v504 = vunpack.c.l.b16 %v481
    %v505 = vunpack.c.l.b16 %v482
    %v506 = vunpack.c.l.b16 %v483
    %v507 = vunpack.c.l.b16 %v484
    %v508 = vpack.c.b16 %v501, %v500
    %v509 = vpack.c.b16 %v503, %v502
    %v510 = vpack.c.b16 %v505, %v504
    %v511 = vpack.c.b16 %v507, %v506
    %v517 = vsel %vm381, %v475, 0
    %v520 = vsel %vm381, %v476, 0
    %522 = vmatprep.subr.bf16.mxu0 0
    %523 = vmatpush1.bf16.msra.mxu0 %v508
    %524 = vmatprep.subr.bf16.mxu0 0
    %525 = vmatpush1.bf16.msra.mxu0 %v509
    %526 = vmatprep.subr.bf16.mxu0 0
    %527 = vmatpush1.bf16.msra.mxu0 %v510
    %528 = vmatprep.subr.bf16.mxu0 0
    %529 = vmatpush1.bf16.msra.mxu0 %v511
    %530 = vmatprep.subr.bf16.mxu0 0
    %531 = vmatpush1.bf16.msra.mxu0 0
    %532 = vmatprep.subr.bf16.mxu0 0
    %533 = vmatpush1.bf16.msra.mxu0 0
    %534 = vmatprep.subr.bf16.mxu0 0
    %535 = vmatpush1.bf16.msra.mxu0 0
    %536 = vmatprep.subr.bf16.mxu0 0
    %537 = vmatpush1.bf16.msra.mxu0 0
    %538 = vmatprep.subr.bf16.mxu0 0
    %539 = vmatpush1.bf16.msra.mxu0 0
    %540 = vmatprep.subr.bf16.mxu0 0
    %541 = vmatpush1.bf16.msra.mxu0 0
    %542 = vmatprep.subr.bf16.mxu0 0
    %543 = vmatpush1.bf16.msra.mxu0 0
    %544 = vmatprep.subr.bf16.mxu0 0
    %545 = vmatpush1.bf16.msra.mxu0 0
    %546 = vmatprep.subr.bf16.mxu0 0
    %547 = vmatpush1.bf16.msra.mxu0 0
    %548 = vmatprep.subr.bf16.mxu0 0
    %549 = vmatpush1.bf16.msra.mxu0 0
    %550 = vmatprep.subr.bf16.mxu0 0
    %551 = vmatpush1.bf16.msra.mxu0 0
    %552 = vmatprep.subr.bf16.mxu0 0
    %553 = vmatpush1.bf16.msra.mxu0 0
    %554 = vmatprep.mubr.bf16.mxu0 0
    %555 = vmatmul.mubr.bf16.gmra.mrb[0].mxu0 %v517
    %v556 = vpop.f32.mrb[0].mxu0
    %v557 = vadd.f32 %v490, %v556
    %v558 = vpop.f32.mrb[0].mxu0
    %v559 = vpop.f32.mrb[0].mxu0
    %v560 = vadd.f32 %v490, %v559
    %v561 = vpop.f32.mrb[0].mxu0
    %562 = vmatprep.mubr.bf16.mxu0 0
    %563 = vmatmul.mubr.bf16.gmra.mrb[0].mxu0 %v520
    %v564 = vpop.f32.mrb[0].mxu0
    %v565 = vadd.f32 %v490, %v564
    %v566 = vpop.f32.mrb[0].mxu0
    %v567 = vpop.f32.mrb[0].mxu0
    %v568 = vadd.f32 %v490, %v567
    %v569 = vpop.f32.mrb[0].mxu0
    %570 = vdwg.mxu0
    %v575 = vcombine.high %v557, %v557
    %v577 = vunpack.c.l.s4 1966171168
    %v578 = vunpack.c.0.s8 %v577
    %v579 = vlaneseq
    %v580 = vshrl.u32 %v579, 7
    %v581 = vsub.s32 %v578, %v580
    %v582 = vrot.slane %v557, %v581
    %v584 = vunpack.c.l.s4 1966171168
    %v585 = vunpack.c.0.s8 %v584
    %v586 = vlaneseq
    %v587 = vshrl.u32 %v586, 7
    %v588 = vsub.s32 %v585, %v587
    %v589 = vrot.slane %v575, %v588
    %v590 = vcombine.high %v582, %v582
    %v591 = vcombine.high %v589, %v589
    %v593 = vunpack.c.l.s4 1966171168
    %v594 = vunpack.c.0.s8 %v593
    %v595 = vlaneseq
    %v596 = vshrl.u32 %v595, 7
    %v597 = vsub.s32 %v594, %v596
    %v598 = vrot.slane %v582, %v597
    %v600 = vunpack.c.l.s4 1966171168
    %v601 = vunpack.c.0.s8 %v600
    %v602 = vlaneseq
    %v603 = vshrl.u32 %v602, 7
    %v604 = vsub.s32 %v601, %v603
    %v605 = vrot.slane %v589, %v604
    %v607 = vunpack.c.l.s4 1966171168
    %v608 = vunpack.c.0.s8 %v607
    %v609 = vlaneseq
    %v610 = vshrl.u32 %v609, 7
    %v611 = vsub.s32 %v608, %v610
    %v612 = vrot.slane %v590, %v611
    %v614 = vunpack.c.l.s4 1966171168
    %v615 = vunpack.c.0.s8 %v614
    %v616 = vlaneseq
    %v617 = vshrl.u32 %v616, 7
    %v618 = vsub.s32 %v615, %v617
    %v619 = vrot.slane %v591, %v618
    %v620 = vcombine.high %v598, %v598
    %v621 = vcombine.high %v605, %v605
    %v622 = vcombine.high %v612, %v612
    %v623 = vcombine.high %v619, %v619
    %v624 = vcombine.high %v560, %v560
    %v626 = vunpack.c.l.s4 1966171168
    %v627 = vunpack.c.0.s8 %v626
    %v628 = vlaneseq
    %v629 = vshrl.u32 %v628, 7
    %v630 = vsub.s32 %v627, %v629
    %v631 = vrot.slane %v560, %v630
    %v633 = vunpack.c.l.s4 1966171168
    %v634 = vunpack.c.0.s8 %v633
    %v635 = vlaneseq
    %v636 = vshrl.u32 %v635, 7
    %v637 = vsub.s32 %v634, %v636
    %v638 = vrot.slane %v624, %v637
    %v639 = vcombine.high %v631, %v631
    %v640 = vcombine.high %v638, %v638
    %v642 = vunpack.c.l.s4 1966171168
    %v643 = vunpack.c.0.s8 %v642
    %v644 = vlaneseq
    %v645 = vshrl.u32 %v644, 7
    %v646 = vsub.s32 %v643, %v645
    %v647 = vrot.slane %v631, %v646
    %v649 = vunpack.c.l.s4 1966171168
    %v650 = vunpack.c.0.s8 %v649
    %v651 = vlaneseq
    %v652 = vshrl.u32 %v651, 7
    %v653 = vsub.s32 %v650, %v652
    %v654 = vrot.slane %v638, %v653
    %v656 = vunpack.c.l.s4 1966171168
    %v657 = vunpack.c.0.s8 %v656
    %v658 = vlaneseq
    %v659 = vshrl.u32 %v658, 7
    %v660 = vsub.s32 %v657, %v659
    %v661 = vrot.slane %v639, %v660
    %v663 = vunpack.c.l.s4 1966171168
    %v664 = vunpack.c.0.s8 %v663
    %v665 = vlaneseq
    %v666 = vshrl.u32 %v665, 7
    %v667 = vsub.s32 %v664, %v666
    %v668 = vrot.slane %v640, %v667
    %v669 = vcombine.high %v647, %v647
    %v670 = vcombine.high %v654, %v654
    %v671 = vcombine.high %v661, %v661
    %v672 = vcombine.high %v668, %v668
    %v673 = vcombine.high %v565, %v565
    %v675 = vunpack.c.l.s4 1966171168
    %v676 = vunpack.c.0.s8 %v675
    %v677 = vlaneseq
    %v678 = vshrl.u32 %v677, 7
    %v679 = vsub.s32 %v676, %v678
    %v680 = vrot.slane %v565, %v679
    %v682 = vunpack.c.l.s4 1966171168
    %v683 = vunpack.c.0.s8 %v682
    %v684 = vlaneseq
    %v685 = vshrl.u32 %v684, 7
    %v686 = vsub.s32 %v683, %v685
    %v687 = vrot.slane %v673, %v686
    %v688 = vcombine.high %v680, %v680
    %v689 = vcombine.high %v687, %v687
    %v691 = vunpack.c.l.s4 1966171168
    %v692 = vunpack.c.0.s8 %v691
    %v693 = vlaneseq
    %v694 = vshrl.u32 %v693, 7
    %v695 = vsub.s32 %v692, %v694
    %v696 = vrot.slane %v680, %v695
    %v698 = vunpack.c.l.s4 1966171168
    %v699 = vunpack.c.0.s8 %v698
    %v700 = vlaneseq
    %v701 = vshrl.u32 %v700, 7
    %v702 = vsub.s32 %v699, %v701
    %v703 = vrot.slane %v687, %v702
    %v705 = vunpack.c.l.s4 1966171168
    %v706 = vunpack.c.0.s8 %v705
    %v707 = vlaneseq
    %v708 = vshrl.u32 %v707, 7
    %v709 = vsub.s32 %v706, %v708
    %v710 = vrot.slane %v688, %v709
    %v712 = vunpack.c.l.s4 1966171168
    %v713 = vunpack.c.0.s8 %v712
    %v714 = vlaneseq
    %v715 = vshrl.u32 %v714, 7
    %v716 = vsub.s32 %v713, %v715
    %v717 = vrot.slane %v689, %v716
    %v718 = vcombine.high %v696, %v696
    %v719 = vcombine.high %v703, %v703
    %v720 = vcombine.high %v710, %v710
    %v721 = vcombine.high %v717, %v717
    %v722 = vcombine.high %v568, %v568
    %v724 = vunpack.c.l.s4 1966171168
    %v725 = vunpack.c.0.s8 %v724
    %v726 = vlaneseq
    %v727 = vshrl.u32 %v726, 7
    %v728 = vsub.s32 %v725, %v727
    %v729 = vrot.slane %v568, %v728
    %v731 = vunpack.c.l.s4 1966171168
    %v732 = vunpack.c.0.s8 %v731
    %v733 = vlaneseq
    %v734 = vshrl.u32 %v733, 7
    %v735 = vsub.s32 %v732, %v734
    %v736 = vrot.slane %v722, %v735
    %v737 = vcombine.high %v729, %v729
    %v738 = vcombine.high %v736, %v736
    %v740 = vunpack.c.l.s4 1966171168
    %v741 = vunpack.c.0.s8 %v740
    %v742 = vlaneseq
    %v743 = vshrl.u32 %v742, 7
    %v744 = vsub.s32 %v741, %v743
    %v745 = vrot.slane %v729, %v744
    %v747 = vunpack.c.l.s4 1966171168
    %v748 = vunpack.c.0.s8 %v747
    %v749 = vlaneseq
    %v750 = vshrl.u32 %v749, 7
    %v751 = vsub.s32 %v748, %v750
    %v752 = vrot.slane %v736, %v751
    %v754 = vunpack.c.l.s4 1966171168
    %v755 = vunpack.c.0.s8 %v754
    %v756 = vlaneseq
    %v757 = vshrl.u32 %v756, 7
    %v758 = vsub.s32 %v755, %v757
    %v759 = vrot.slane %v737, %v758
    %v761 = vunpack.c.l.s4 1966171168
    %v762 = vunpack.c.0.s8 %v761
    %v763 = vlaneseq
    %v764 = vshrl.u32 %v763, 7
    %v765 = vsub.s32 %v762, %v764
    %v766 = vrot.slane %v738, %v765
    %v767 = vcombine.high %v745, %v745
    %v768 = vcombine.high %v752, %v752
    %v769 = vcombine.high %v759, %v759
    %v770 = vcombine.high %v766, %v766
    %v771 = vlaneseq
    %v772 = vshrl.u32 %v771, 7
    %v773 = vsub.s32 0, %v772
    %v774 = vrot.slane %v598, %v773
    %v775 = vlaneseq
    %v776 = vshrl.u32 %v775, 7
    %v777 = vsub.s32 0, %v776
    %v778 = vrot.slane %v612, %v777
    %v779 = vlaneseq
    %v780 = vshrl.u32 %v779, 7
    %v781 = vsub.s32 0, %v780
    %v782 = vrot.slane %v620, %v781
    %v783 = vlaneseq
    %v784 = vshrl.u32 %v783, 7
    %v785 = vsub.s32 0, %v784
    %v786 = vrot.slane %v622, %v785
    %v787 = vlaneseq
    %v788 = vshrl.u32 %v787, 7
    %v789 = vsub.s32 0, %v788
    %v790 = vrot.slane %v605, %v789
    %v791 = vlaneseq
    %v792 = vshrl.u32 %v791, 7
    %v793 = vsub.s32 0, %v792
    %v794 = vrot.slane %v619, %v793
    %v795 = vlaneseq
    %v796 = vshrl.u32 %v795, 7
    %v797 = vsub.s32 0, %v796
    %v798 = vrot.slane %v621, %v797
    %v799 = vlaneseq
    %v800 = vshrl.u32 %v799, 7
    %v801 = vsub.s32 0, %v800
    %v802 = vrot.slane %v623, %v801
    %v803 = vlaneseq
    %v804 = vshrl.u32 %v803, 7
    %v805 = vsub.s32 0, %v804
    %v806 = vrot.slane %v647, %v805
    %v807 = vlaneseq
    %v808 = vshrl.u32 %v807, 7
    %v809 = vsub.s32 0, %v808
    %v810 = vrot.slane %v661, %v809
    %v811 = vlaneseq
    %v812 = vshrl.u32 %v811, 7
    %v813 = vsub.s32 0, %v812
    %v814 = vrot.slane %v669, %v813
    %v815 = vlaneseq
    %v816 = vshrl.u32 %v815, 7
    %v817 = vsub.s32 0, %v816
    %v818 = vrot.slane %v671, %v817
    %v819 = vlaneseq
    %v820 = vshrl.u32 %v819, 7
    %v821 = vsub.s32 0, %v820
    %v822 = vrot.slane %v654, %v821
    %v823 = vlaneseq
    %v824 = vshrl.u32 %v823, 7
    %v825 = vsub.s32 0, %v824
    %v826 = vrot.slane %v668, %v825
    %v827 = vlaneseq
    %v828 = vshrl.u32 %v827, 7
    %v829 = vsub.s32 0, %v828
    %v830 = vrot.slane %v670, %v829
    %v831 = vlaneseq
    %v832 = vshrl.u32 %v831, 7
    %v833 = vsub.s32 0, %v832
    %v834 = vrot.slane %v672, %v833
    %v835 = vlaneseq
    %v836 = vshrl.u32 %v835, 7
    %v837 = vsub.s32 0, %v836
    %v838 = vrot.slane %v696, %v837
    %v839 = vlaneseq
    %v840 = vshrl.u32 %v839, 7
    %v841 = vsub.s32 0, %v840
    %v842 = vrot.slane %v710, %v841
    %v843 = vlaneseq
    %v844 = vshrl.u32 %v843, 7
    %v845 = vsub.s32 0, %v844
    %v846 = vrot.slane %v718, %v845
    %v847 = vlaneseq
    %v848 = vshrl.u32 %v847, 7
    %v849 = vsub.s32 0, %v848
    %v850 = vrot.slane %v720, %v849
    %v851 = vlaneseq
    %v852 = vshrl.u32 %v851, 7
    %v853 = vsub.s32 0, %v852
    %v854 = vrot.slane %v703, %v853
    %v855 = vlaneseq
    %v856 = vshrl.u32 %v855, 7
    %v857 = vsub.s32 0, %v856
    %v858 = vrot.slane %v717, %v857
    %v859 = vlaneseq
    %v860 = vshrl.u32 %v859, 7
    %v861 = vsub.s32 0, %v860
    %v862 = vrot.slane %v719, %v861
    %v863 = vlaneseq
    %v864 = vshrl.u32 %v863, 7
    %v865 = vsub.s32 0, %v864
    %v866 = vrot.slane %v721, %v865
    %v867 = vlaneseq
    %v868 = vshrl.u32 %v867, 7
    %v869 = vsub.s32 0, %v868
    %v870 = vrot.slane %v745, %v869
    %v871 = vlaneseq
    %v872 = vshrl.u32 %v871, 7
    %v873 = vsub.s32 0, %v872
    %v874 = vrot.slane %v759, %v873
    %v875 = vlaneseq
    %v876 = vshrl.u32 %v875, 7
    %v877 = vsub.s32 0, %v876
    %v878 = vrot.slane %v767, %v877
    %v879 = vlaneseq
    %v880 = vshrl.u32 %v879, 7
    %v881 = vsub.s32 0, %v880
    %v882 = vrot.slane %v769, %v881
    %v883 = vlaneseq
    %v884 = vshrl.u32 %v883, 7
    %v885 = vsub.s32 0, %v884
    %v886 = vrot.slane %v752, %v885
    %v887 = vlaneseq
    %v888 = vshrl.u32 %v887, 7
    %v889 = vsub.s32 0, %v888
    %v890 = vrot.slane %v766, %v889
    %v891 = vlaneseq
    %v892 = vshrl.u32 %v891, 7
    %v893 = vsub.s32 0, %v892
    %v894 = vrot.slane %v768, %v893
    %v895 = vlaneseq
    %v896 = vshrl.u32 %v895, 7
    %v897 = vsub.s32 0, %v896
    %v898 = vrot.slane %v770, %v897
    %v931 = vmul.f32 %v774, %v221
    %v932 = vmul.f32 %v778, %v224
    %v933 = vmul.f32 %v782, %v229
    %v934 = vmul.f32 %v786, %v232
    %v935 = vmul.f32 %v790, %v237
    %v936 = vmul.f32 %v794, %v240
    %v937 = vmul.f32 %v798, %v245
    %v938 = vmul.f32 %v802, %v248
    %v939 = vmul.f32 %v806, %v253
    %v940 = vmul.f32 %v810, %v256
    %v941 = vmul.f32 %v814, %v261
    %v942 = vmul.f32 %v818, %v264
    %v943 = vmul.f32 %v822, %v269
    %v944 = vmul.f32 %v826, %v272
    %v945 = vmul.f32 %v830, %v277
    %v946 = vmul.f32 %v834, %v280
    %v947 = vmul.f32 %v838, %v285
    %v948 = vmul.f32 %v842, %v288
    %v949 = vmul.f32 %v846, %v293
    %v950 = vmul.f32 %v850, %v296
    %v951 = vmul.f32 %v854, %v301
    %v952 = vmul.f32 %v858, %v304
    %v953 = vmul.f32 %v862, %v309
    %v954 = vmul.f32 %v866, %v312
    %v955 = vmul.f32 %v870, %v317
    %v956 = vmul.f32 %v874, %v320
    %v957 = vmul.f32 %v878, %v325
    %v958 = vmul.f32 %v882, %v328
    %v959 = vmul.f32 %v886, %v333
    %v960 = vmul.f32 %v890, %v336
    %v961 = vmul.f32 %v894, %v341
    %v962 = vmul.f32 %v898, %v344
    %v963 = vpack.c.bf16 %v932, %v931
    %v964 = vpack.c.bf16 %v934, %v933
    %v965 = vpack.c.bf16 %v936, %v935
    %v966 = vpack.c.bf16 %v938, %v937
    %v967 = vpack.c.bf16 %v940, %v939
    %v968 = vpack.c.bf16 %v942, %v941
    %v969 = vpack.c.bf16 %v944, %v943
    %v970 = vpack.c.bf16 %v946, %v945
    %v971 = vpack.c.bf16 %v948, %v947
    %v972 = vpack.c.bf16 %v950, %v949
    %v973 = vpack.c.bf16 %v952, %v951
    %v974 = vpack.c.bf16 %v954, %v953
    %v975 = vpack.c.bf16 %v956, %v955
    %v976 = vpack.c.bf16 %v958, %v957
    %v977 = vpack.c.bf16 %v960, %v959
    %v978 = vpack.c.bf16 %v962, %v961
    %v979 = vld [vmem:[%s16] sm:$0xf]
    %v980 = vld [vmem:[%s16 + $0x4] sm:$0xf]
    %v981 = vld [vmem:[%s16 + $0x8] sm:$0xf]
    %v982 = vld [vmem:[%s16 + $0xc] sm:$0xf]
    %v983 = vld [vmem:[%s16 + $0x10] sm:$0xf]
    %v984 = vld [vmem:[%s16 + $0x14] sm:$0xf]
    %v985 = vld [vmem:[%s16 + $0x18] sm:$0xf]
    %v986 = vld [vmem:[%s16 + $0x1c] sm:$0xf]
    %v987 = vld [vmem:[%s16 + $0x20] sm:$0xf]
    %v988 = vld [vmem:[%s16 + $0x24] sm:$0xf]
    %v989 = vld [vmem:[%s16 + $0x28] sm:$0xf]
    %v990 = vld [vmem:[%s16 + $0x2c] sm:$0xf]
    %v991 = vld [vmem:[%s16 + $0x30] sm:$0xf]
    %v992 = vld [vmem:[%s16 + $0x34] sm:$0xf]
    %v993 = vld [vmem:[%s16 + $0x38] sm:$0xf]
    %v994 = vld [vmem:[%s16 + $0x3c] sm:$0xf]
    %v1011 = vunpack.c.l.b16 %v979
    %v1012 = vunpack.c.l.b16 %v980
    %v1013 = vunpack.c.l.b16 %v981
    %v1014 = vunpack.c.l.b16 %v982
    %v1015 = vunpack.c.l.b16 %v983
    %v1016 = vunpack.c.l.b16 %v984
    %v1017 = vunpack.c.l.b16 %v985
    %v1018 = vunpack.c.l.b16 %v986
    %v1019 = vunpack.c.l.b16 %v987
    %v1020 = vunpack.c.l.b16 %v988
    %v1021 = vunpack.c.l.b16 %v989
    %v1022 = vunpack.c.l.b16 %v990
    %v1023 = vunpack.c.l.b16 %v991
    %v1024 = vunpack.c.l.b16 %v992
    %v1025 = vunpack.c.l.b16 %v993
    %v1026 = vunpack.c.l.b16 %v994
    %v1027 = vpack.c.b16 %v1012, %v1011
    %v1028 = vpack.c.b16 %v1014, %v1013
    %v1029 = vpack.c.b16 %v1016, %v1015
    %v1030 = vpack.c.b16 %v1018, %v1017
    %v1031 = vpack.c.b16 %v1020, %v1019
    %v1032 = vpack.c.b16 %v1022, %v1021
    %v1033 = vpack.c.b16 %v1024, %v1023
    %v1034 = vpack.c.b16 %v1026, %v1025
    %1043 = vmatprep.subr.bf16.mxu0 0
    %1044 = vmatpush1.bf16.msra.mxu0 %v1027
    %1045 = vmatprep.subr.bf16.mxu0 0
    %1046 = vmatpush1.bf16.msra.mxu0 %v1028
    %1047 = vmatprep.subr.bf16.mxu0 0
    %1048 = vmatpush1.bf16.msra.mxu0 %v1029
    %1049 = vmatprep.subr.bf16.mxu0 0
    %1050 = vmatpush1.bf16.msra.mxu0 %v1030
    %1051 = vmatprep.subr.bf16.mxu0 0
    %1052 = vmatpush1.bf16.msra.mxu0 %v1031
    %1053 = vmatprep.subr.bf16.mxu0 0
    %1054 = vmatpush1.bf16.msra.mxu0 %v1032
    %1055 = vmatprep.subr.bf16.mxu0 0
    %1056 = vmatpush1.bf16.msra.mxu0 %v1033
    %1057 = vmatprep.subr.bf16.mxu0 0
    %1058 = vmatpush1.bf16.msra.mxu0 %v1034
    %1059 = vmatprep.subr.bf16.mxu0 0
    %1060 = vmatpush1.bf16.msra.mxu0 0
    %1061 = vmatprep.subr.bf16.mxu0 0
    %1062 = vmatpush1.bf16.msra.mxu0 0
    %1063 = vmatprep.subr.bf16.mxu0 0
    %1064 = vmatpush1.bf16.msra.mxu0 0
    %1065 = vmatprep.subr.bf16.mxu0 0
    %1066 = vmatpush1.bf16.msra.mxu0 0
    %1067 = vmatprep.subr.bf16.mxu0 0
    %1068 = vmatpush1.bf16.msra.mxu0 0
    %1069 = vmatprep.subr.bf16.mxu0 0
    %1070 = vmatpush1.bf16.msra.mxu0 0
    %1071 = vmatprep.subr.bf16.mxu0 0
    %1072 = vmatpush1.bf16.msra.mxu0 0
    %1073 = vmatprep.subr.bf16.mxu0 0
    %1074 = vmatpush1.bf16.msra.mxu0 0
    %1075 = vmatprep.mubr.bf16.mxu0 0
    %1076 = vmatmul.mubr.bf16.gmra.mrb[0].mxu0 %v963
    %v1077 = vpop.f32.mrb[0].mxu0
    %v1078 = vadd.f32 0.0, %v1077
    %v1079 = vpop.f32.mrb[0].mxu0
    %v1080 = vpop.f32.mrb[0].mxu0
    %v1081 = vadd.f32 0.0, %v1080
    %v1082 = vpop.f32.mrb[0].mxu0
    %1083 = vmatprep.mubr.bf16.mxu0 0
    %1084 = vmatmul.mubr.bf16.gmra.mrb[0].mxu0 %v964
    %v1085 = vpop.f32.mrb[0].mxu0
    %v1086 = vadd.f32 0.0, %v1085
    %v1087 = vpop.f32.mrb[0].mxu0
    %v1088 = vpop.f32.mrb[0].mxu0
    %v1089 = vadd.f32 0.0, %v1088
    %v1090 = vpop.f32.mrb[0].mxu0
    %1091 = vmatprep.mubr.bf16.mxu0 0
    %1092 = vmatmul.mubr.bf16.gmra.mrb[0].mxu0 %v965
    %v1093 = vpop.f32.mrb[0].mxu0
    %v1094 = vadd.f32 0.0, %v1093
    %v1095 = vpop.f32.mrb[0].mxu0
    %v1096 = vpop.f32.mrb[0].mxu0
    %v1097 = vadd.f32 0.0, %v1096
    %v1098 = vpop.f32.mrb[0].mxu0
    %1099 = vmatprep.mubr.bf16.mxu0 0
    %1100 = vmatmul.mubr.bf16.gmra.mrb[0].mxu0 %v966
    %v1101 = vpop.f32.mrb[0].mxu0
    %v1102 = vadd.f32 0.0, %v1101
    %v1103 = vpop.f32.mrb[0].mxu0
    %v1104 = vpop.f32.mrb[0].mxu0
    %v1105 = vadd.f32 0.0, %v1104
    %v1106 = vpop.f32.mrb[0].mxu0
    %1107 = vmatprep.mubr.bf16.mxu0 0
    %1108 = vmatmul.mubr.bf16.gmra.mrb[0].mxu0 %v967
    %v1109 = vpop.f32.mrb[0].mxu0
    %v1110 = vadd.f32 0.0, %v1109
    %v1111 = vpop.f32.mrb[0].mxu0
    %v1112 = vpop.f32.mrb[0].mxu0
    %v1113 = vadd.f32 0.0, %v1112
    %v1114 = vpop.f32.mrb[0].mxu0
    %1115 = vmatprep.mubr.bf16.mxu0 0
    %1116 = vmatmul.mubr.bf16.gmra.mrb[0].mxu0 %v968
    %v1117 = vpop.f32.mrb[0].mxu0
    %v1118 = vadd.f32 0.0, %v1117
    %v1119 = vpop.f32.mrb[0].mxu0
    %v1120 = vpop.f32.mrb[0].mxu0
    %v1121 = vadd.f32 0.0, %v1120
    %v1122 = vpop.f32.mrb[0].mxu0
    %1123 = vmatprep.mubr.bf16.mxu0 0
    %1124 = vmatmul.mubr.bf16.gmra.mrb[0].mxu0 %v969
    %v1125 = vpop.f32.mrb[0].mxu0
    %v1126 = vadd.f32 0.0, %v1125
    %v1127 = vpop.f32.mrb[0].mxu0
    %v1128 = vpop.f32.mrb[0].mxu0
    %v1129 = vadd.f32 0.0, %v1128
    %v1130 = vpop.f32.mrb[0].mxu0
    %1131 = vmatprep.mubr.bf16.mxu0 0
    %1132 = vmatmul.mubr.bf16.gmra.mrb[0].mxu0 %v970
    %v1133 = vpop.f32.mrb[0].mxu0
    %v1134 = vadd.f32 0.0, %v1133
    %v1135 = vpop.f32.mrb[0].mxu0
    %v1136 = vpop.f32.mrb[0].mxu0
    %v1137 = vadd.f32 0.0, %v1136
    %v1138 = vpop.f32.mrb[0].mxu0
    %1139 = vmatprep.mubr.bf16.mxu0 0
    %1140 = vmatmul.mubr.bf16.gmra.mrb[0].mxu0 %v971
    %v1141 = vpop.f32.mrb[0].mxu0
    %v1142 = vadd.f32 0.0, %v1141
    %v1143 = vpop.f32.mrb[0].mxu0
    %v1144 = vpop.f32.mrb[0].mxu0
    %v1145 = vadd.f32 0.0, %v1144
    %v1146 = vpop.f32.mrb[0].mxu0
    %1147 = vmatprep.mubr.bf16.mxu0 0
    %1148 = vmatmul.mubr.bf16.gmra.mrb[0].mxu0 %v972
    %v1149 = vpop.f32.mrb[0].mxu0
    %v1150 = vadd.f32 0.0, %v1149
    %v1151 = vpop.f32.mrb[0].mxu0
    %v1152 = vpop.f32.mrb[0].mxu0
    %v1153 = vadd.f32 0.0, %v1152
    %v1154 = vpop.f32.mrb[0].mxu0
    %1155 = vmatprep.mubr.bf16.mxu0 0
    %1156 = vmatmul.mubr.bf16.gmra.mrb[0].mxu0 %v973
    %v1157 = vpop.f32.mrb[0].mxu0
    %v1158 = vadd.f32 0.0, %v1157
    %v1159 = vpop.f32.mrb[0].mxu0
    %v1160 = vpop.f32.mrb[0].mxu0
    %v1161 = vadd.f32 0.0, %v1160
    %v1162 = vpop.f32.mrb[0].mxu0
    %1163 = vmatprep.mubr.bf16.mxu0 0
    %1164 = vmatmul.mubr.bf16.gmra.mrb[0].mxu0 %v974
    %v1165 = vpop.f32.mrb[0].mxu0
    %v1166 = vadd.f32 0.0, %v1165
    %v1167 = vpop.f32.mrb[0].mxu0
    %v1168 = vpop.f32.mrb[0].mxu0
    %v1169 = vadd.f32 0.0, %v1168
    %v1170 = vpop.f32.mrb[0].mxu0
    %1171 = vmatprep.mubr.bf16.mxu0 0
    %1172 = vmatmul.mubr.bf16.gmra.mrb[0].mxu0 %v975
    %v1173 = vpop.f32.mrb[0].mxu0
    %v1174 = vadd.f32 0.0, %v1173
    %v1175 = vpop.f32.mrb[0].mxu0
    %v1176 = vpop.f32.mrb[0].mxu0
    %v1177 = vadd.f32 0.0, %v1176
    %v1178 = vpop.f32.mrb[0].mxu0
    %1179 = vmatprep.mubr.bf16.mxu0 0
    %1180 = vmatmul.mubr.bf16.gmra.mrb[0].mxu0 %v976
    %v1181 = vpop.f32.mrb[0].mxu0
    %v1182 = vadd.f32 0.0, %v1181
    %v1183 = vpop.f32.mrb[0].mxu0
    %v1184 = vpop.f32.mrb[0].mxu0
    %v1185 = vadd.f32 0.0, %v1184
    %v1186 = vpop.f32.mrb[0].mxu0
    %1187 = vmatprep.mubr.bf16.mxu0 0
    %1188 = vmatmul.mubr.bf16.gmra.mrb[0].mxu0 %v977
    %v1189 = vpop.f32.mrb[0].mxu0
    %v1190 = vadd.f32 0.0, %v1189
    %v1191 = vpop.f32.mrb[0].mxu0
    %v1192 = vpop.f32.mrb[0].mxu0
    %v1193 = vadd.f32 0.0, %v1192
    %v1194 = vpop.f32.mrb[0].mxu0
    %1195 = vmatprep.mubr.bf16.mxu0 0
    %1196 = vmatmul.mubr.bf16.gmra.mrb[0].mxu0 %v978
    %v1197 = vpop.f32.mrb[0].mxu0
    %v1198 = vadd.f32 0.0, %v1197
    %v1199 = vpop.f32.mrb[0].mxu0
    %v1200 = vpop.f32.mrb[0].mxu0
    %v1201 = vadd.f32 0.0, %v1200
    %v1202 = vpop.f32.mrb[0].mxu0
    %1203 = vdwg.mxu0
    %v1204 = vrot.slane %v1078, 4
    %v1205 = vmax.f32 %v1078, %v1204
    %v1206 = vrot.slane %v1205, 2
    %v1207 = vmax.f32 %v1205, %v1206
    %v1208 = vrot.slane %v1207, 1
    %v1209 = vmax.f32 %v1207, %v1208
    %v1210 = vrot.slane %v1081, 4
    %v1211 = vmax.f32 %v1081, %v1210
    %v1212 = vrot.slane %v1211, 2
    %v1213 = vmax.f32 %v1211, %v1212
    %v1214 = vrot.slane %v1213, 1
    %v1215 = vmax.f32 %v1213, %v1214
    %v1216 = vrot.slane %v1086, 4
    %v1217 = vmax.f32 %v1086, %v1216
    %v1218 = vrot.slane %v1217, 2
    %v1219 = vmax.f32 %v1217, %v1218
    %v1220 = vrot.slane %v1219, 1
    %v1221 = vmax.f32 %v1219, %v1220
    %v1222 = vrot.slane %v1089, 4
    %v1223 = vmax.f32 %v1089, %v1222
    %v1224 = vrot.slane %v1223, 2
    %v1225 = vmax.f32 %v1223, %v1224
    %v1226 = vrot.slane %v1225, 1
    %v1227 = vmax.f32 %v1225, %v1226
    %v1228 = vrot.slane %v1094, 4
    %v1229 = vmax.f32 %v1094, %v1228
    %v1230 = vrot.slane %v1229, 2
    %v1231 = vmax.f32 %v1229, %v1230
    %v1232 = vrot.slane %v1231, 1
    %v1233 = vmax.f32 %v1231, %v1232
    %v1234 = vrot.slane %v1097, 4
    %v1235 = vmax.f32 %v1097, %v1234
    %v1236 = vrot.slane %v1235, 2
    %v1237 = vmax.f32 %v1235, %v1236
    %v1238 = vrot.slane %v1237, 1
    %v1239 = vmax.f32 %v1237, %v1238
    %v1240 = vrot.slane %v1102, 4
    %v1241 = vmax.f32 %v1102, %v1240
    %v1242 = vrot.slane %v1241, 2
    %v1243 = vmax.f32 %v1241, %v1242
    %v1244 = vrot.slane %v1243, 1
    %v1245 = vmax.f32 %v1243, %v1244
    %v1246 = vrot.slane %v1105, 4
    %v1247 = vmax.f32 %v1105, %v1246
    %v1248 = vrot.slane %v1247, 2
    %v1249 = vmax.f32 %v1247, %v1248
    %v1250 = vrot.slane %v1249, 1
    %v1251 = vmax.f32 %v1249, %v1250
    %v1252 = vrot.slane %v1110, 4
    %v1253 = vmax.f32 %v1110, %v1252
    %v1254 = vrot.slane %v1253, 2
    %v1255 = vmax.f32 %v1253, %v1254
    %v1256 = vrot.slane %v1255, 1
    %v1257 = vmax.f32 %v1255, %v1256
    %v1258 = vrot.slane %v1113, 4
    %v1259 = vmax.f32 %v1113, %v1258
    %v1260 = vrot.slane %v1259, 2
    %v1261 = vmax.f32 %v1259, %v1260
    %v1262 = vrot.slane %v1261, 1
    %v1263 = vmax.f32 %v1261, %v1262
    %v1264 = vrot.slane %v1118, 4
    %v1265 = vmax.f32 %v1118, %v1264
    %v1266 = vrot.slane %v1265, 2
    %v1267 = vmax.f32 %v1265, %v1266
    %v1268 = vrot.slane %v1267, 1
    %v1269 = vmax.f32 %v1267, %v1268
    %v1270 = vrot.slane %v1121, 4
    %v1271 = vmax.f32 %v1121, %v1270
    %v1272 = vrot.slane %v1271, 2
    %v1273 = vmax.f32 %v1271, %v1272
    %v1274 = vrot.slane %v1273, 1
    %v1275 = vmax.f32 %v1273, %v1274
    %v1276 = vrot.slane %v1126, 4
    %v1277 = vmax.f32 %v1126, %v1276
    %v1278 = vrot.slane %v1277, 2
    %v1279 = vmax.f32 %v1277, %v1278
    %v1280 = vrot.slane %v1279, 1
    %v1281 = vmax.f32 %v1279, %v1280
    %v1282 = vrot.slane %v1129, 4
    %v1283 = vmax.f32 %v1129, %v1282
    %v1284 = vrot.slane %v1283, 2
    %v1285 = vmax.f32 %v1283, %v1284
    %v1286 = vrot.slane %v1285, 1
    %v1287 = vmax.f32 %v1285, %v1286
    %v1288 = vrot.slane %v1134, 4
    %v1289 = vmax.f32 %v1134, %v1288
    %v1290 = vrot.slane %v1289, 2
    %v1291 = vmax.f32 %v1289, %v1290
    %v1292 = vrot.slane %v1291, 1
    %v1293 = vmax.f32 %v1291, %v1292
    %v1294 = vrot.slane %v1137, 4
    %v1295 = vmax.f32 %v1137, %v1294
    %v1296 = vrot.slane %v1295, 2
    %v1297 = vmax.f32 %v1295, %v1296
    %v1298 = vrot.slane %v1297, 1
    %v1299 = vmax.f32 %v1297, %v1298
    %v1300 = vrot.slane %v1142, 4
    %v1301 = vmax.f32 %v1142, %v1300
    %v1302 = vrot.slane %v1301, 2
    %v1303 = vmax.f32 %v1301, %v1302
    %v1304 = vrot.slane %v1303, 1
    %v1305 = vmax.f32 %v1303, %v1304
    %v1306 = vrot.slane %v1145, 4
    %v1307 = vmax.f32 %v1145, %v1306
    %v1308 = vrot.slane %v1307, 2
    %v1309 = vmax.f32 %v1307, %v1308
    %v1310 = vrot.slane %v1309, 1
    %v1311 = vmax.f32 %v1309, %v1310
    %v1312 = vrot.slane %v1150, 4
    %v1313 = vmax.f32 %v1150, %v1312
    %v1314 = vrot.slane %v1313, 2
    %v1315 = vmax.f32 %v1313, %v1314
    %v1316 = vrot.slane %v1315, 1
    %v1317 = vmax.f32 %v1315, %v1316
    %v1318 = vrot.slane %v1153, 4
    %v1319 = vmax.f32 %v1153, %v1318
    %v1320 = vrot.slane %v1319, 2
    %v1321 = vmax.f32 %v1319, %v1320
    %v1322 = vrot.slane %v1321, 1
    %v1323 = vmax.f32 %v1321, %v1322
    %v1324 = vrot.slane %v1158, 4
    %v1325 = vmax.f32 %v1158, %v1324
    %v1326 = vrot.slane %v1325, 2
    %v1327 = vmax.f32 %v1325, %v1326
    %v1328 = vrot.slane %v1327, 1
    %v1329 = vmax.f32 %v1327, %v1328
    %v1330 = vrot.slane %v1161, 4
    %v1331 = vmax.f32 %v1161, %v1330
    %v1332 = vrot.slane %v1331, 2
    %v1333 = vmax.f32 %v1331, %v1332
    %v1334 = vrot.slane %v1333, 1
    %v1335 = vmax.f32 %v1333, %v1334
    %v1336 = vrot.slane %v1166, 4
    %v1337 = vmax.f32 %v1166, %v1336
    %v1338 = vrot.slane %v1337, 2
    %v1339 = vmax.f32 %v1337, %v1338
    %v1340 = vrot.slane %v1339, 1
    %v1341 = vmax.f32 %v1339, %v1340
    %v1342 = vrot.slane %v1169, 4
    %v1343 = vmax.f32 %v1169, %v1342
    %v1344 = vrot.slane %v1343, 2
    %v1345 = vmax.f32 %v1343, %v1344
    %v1346 = vrot.slane %v1345, 1
    %v1347 = vmax.f32 %v1345, %v1346
    %v1348 = vrot.slane %v1174, 4
    %v1349 = vmax.f32 %v1174, %v1348
    %v1350 = vrot.slane %v1349, 2
    %v1351 = vmax.f32 %v1349, %v1350
    %v1352 = vrot.slane %v1351, 1
    %v1353 = vmax.f32 %v1351, %v1352
    %v1354 = vrot.slane %v1177, 4
    %v1355 = vmax.f32 %v1177, %v1354
    %v1356 = vrot.slane %v1355, 2
    %v1357 = vmax.f32 %v1355, %v1356
    %v1358 = vrot.slane %v1357, 1
    %v1359 = vmax.f32 %v1357, %v1358
    %v1360 = vrot.slane %v1182, 4
    %v1361 = vmax.f32 %v1182, %v1360
    %v1362 = vrot.slane %v1361, 2
    %v1363 = vmax.f32 %v1361, %v1362
    %v1364 = vrot.slane %v1363, 1
    %v1365 = vmax.f32 %v1363, %v1364
    %v1366 = vrot.slane %v1185, 4
    %v1367 = vmax.f32 %v1185, %v1366
    %v1368 = vrot.slane %v1367, 2
    %v1369 = vmax.f32 %v1367, %v1368
    %v1370 = vrot.slane %v1369, 1
    %v1371 = vmax.f32 %v1369, %v1370
    %v1372 = vrot.slane %v1190, 4
    %v1373 = vmax.f32 %v1190, %v1372
    %v1374 = vrot.slane %v1373, 2
    %v1375 = vmax.f32 %v1373, %v1374
    %v1376 = vrot.slane %v1375, 1
    %v1377 = vmax.f32 %v1375, %v1376
    %v1378 = vrot.slane %v1193, 4
    %v1379 = vmax.f32 %v1193, %v1378
    %v1380 = vrot.slane %v1379, 2
    %v1381 = vmax.f32 %v1379, %v1380
    %v1382 = vrot.slane %v1381, 1
    %v1383 = vmax.f32 %v1381, %v1382
    %v1384 = vrot.slane %v1198, 4
    %v1385 = vmax.f32 %v1198, %v1384
    %v1386 = vrot.slane %v1385, 2
    %v1387 = vmax.f32 %v1385, %v1386
    %v1388 = vrot.slane %v1387, 1
    %v1389 = vmax.f32 %v1387, %v1388
    %v1390 = vrot.slane %v1201, 4
    %v1391 = vmax.f32 %v1201, %v1390
    %v1392 = vrot.slane %v1391, 2
    %v1393 = vmax.f32 %v1391, %v1392
    %v1394 = vrot.slane %v1393, 1
    %v1395 = vmax.f32 %v1393, %v1394
    %v1396 = vsub.f32 %v1078, %v1209
    %v1397 = vsub.f32 %v1081, %v1215
    %v1398 = vsub.f32 %v1086, %v1221
    %v1399 = vsub.f32 %v1089, %v1227
    %v1400 = vsub.f32 %v1094, %v1233
    %v1401 = vsub.f32 %v1097, %v1239
    %v1402 = vsub.f32 %v1102, %v1245
    %v1403 = vsub.f32 %v1105, %v1251
    %v1404 = vsub.f32 %v1110, %v1257
    %v1405 = vsub.f32 %v1113, %v1263
    %v1406 = vsub.f32 %v1118, %v1269
    %v1407 = vsub.f32 %v1121, %v1275
    %v1408 = vsub.f32 %v1126, %v1281
    %v1409 = vsub.f32 %v1129, %v1287
    %v1410 = vsub.f32 %v1134, %v1293
    %v1411 = vsub.f32 %v1137, %v1299
    %v1412 = vsub.f32 %v1142, %v1305
    %v1413 = vsub.f32 %v1145, %v1311
    %v1414 = vsub.f32 %v1150, %v1317
    %v1415 = vsub.f32 %v1153, %v1323
    %v1416 = vsub.f32 %v1158, %v1329
    %v1417 = vsub.f32 %v1161, %v1335
    %v1418 = vsub.f32 %v1166, %v1341
    %v1419 = vsub.f32 %v1169, %v1347
    %v1420 = vsub.f32 %v1174, %v1353
    %v1421 = vsub.f32 %v1177, %v1359
    %v1422 = vsub.f32 %v1182, %v1365
    %v1423 = vsub.f32 %v1185, %v1371
    %v1424 = vsub.f32 %v1190, %v1377
    %v1425 = vsub.f32 %v1193, %v1383
    %v1426 = vsub.f32 %v1198, %v1389
    %v1427 = vsub.f32 %v1201, %v1395
    %v1428 = vmul.f32 %v1396, 1.442695
    %v1429 = vpow.pop %v1428
    %v1430 = vmul.f32 %v1397, 1.442695
    %v1431 = vpow.pop %v1430
    %v1432 = vmul.f32 %v1398, 1.442695
    %v1433 = vpow.pop %v1432
    %v1434 = vmul.f32 %v1399, 1.442695
    %v1435 = vpow.pop %v1434
    %v1436 = vmul.f32 %v1400, 1.442695
    %v1437 = vpow.pop %v1436
    %v1438 = vmul.f32 %v1401, 1.442695
    %v1439 = vpow.pop %v1438
    %v1440 = vmul.f32 %v1402, 1.442695
    %v1441 = vpow.pop %v1440
    %v1442 = vmul.f32 %v1403, 1.442695
    %v1443 = vpow.pop %v1442
    %v1444 = vmul.f32 %v1404, 1.442695
    %v1445 = vpow.pop %v1444
    %v1446 = vmul.f32 %v1405, 1.442695
    %v1447 = vpow.pop %v1446
    %v1448 = vmul.f32 %v1406, 1.442695
    %v1449 = vpow.pop %v1448
    %v1450 = vmul.f32 %v1407, 1.442695
    %v1451 = vpow.pop %v1450
    %v1452 = vmul.f32 %v1408, 1.442695
    %v1453 = vpow.pop %v1452
    %v1454 = vmul.f32 %v1409, 1.442695
    %v1455 = vpow.pop %v1454
    %v1456 = vmul.f32 %v1410, 1.442695
    %v1457 = vpow.pop %v1456
    %v1458 = vmul.f32 %v1411, 1.442695
    %v1459 = vpow.pop %v1458
    %v1460 = vmul.f32 %v1412, 1.442695
    %v1461 = vpow.pop %v1460
    %v1462 = vmul.f32 %v1413, 1.442695
    %v1463 = vpow.pop %v1462
    %v1464 = vmul.f32 %v1414, 1.442695
    %v1465 = vpow.pop %v1464
    %v1466 = vmul.f32 %v1415, 1.442695
    %v1467 = vpow.pop %v1466
    %v1468 = vmul.f32 %v1416, 1.442695
    %v1469 = vpow.pop %v1468
    %v1470 = vmul.f32 %v1417, 1.442695
    %v1471 = vpow.pop %v1470
    %v1472 = vmul.f32 %v1418, 1.442695
    %v1473 = vpow.pop %v1472
    %v1474 = vmul.f32 %v1419, 1.442695
    %v1475 = vpow.pop %v1474
    %v1476 = vmul.f32 %v1420, 1.442695
    %v1477 = vpow.pop %v1476
    %v1478 = vmul.f32 %v1421, 1.442695
    %v1479 = vpow.pop %v1478
    %v1480 = vmul.f32 %v1422, 1.442695
    %v1481 = vpow.pop %v1480
    %v1482 = vmul.f32 %v1423, 1.442695
    %v1483 = vpow.pop %v1482
    %v1484 = vmul.f32 %v1424, 1.442695
    %v1485 = vpow.pop %v1484
    %v1486 = vmul.f32 %v1425, 1.442695
    %v1487 = vpow.pop %v1486
    %v1488 = vmul.f32 %v1426, 1.442695
    %v1489 = vpow.pop %v1488
    %v1490 = vmul.f32 %v1427, 1.442695
    %v1491 = vpow.pop %v1490
    %v1492 = vpack.c.bf16 %v1431, %v1429
    %v1493 = vpack.c.bf16 %v1435, %v1433
    %v1494 = vpack.c.bf16 %v1439, %v1437
    %v1495 = vpack.c.bf16 %v1443, %v1441
    %v1496 = vpack.c.bf16 %v1447, %v1445
    %v1497 = vpack.c.bf16 %v1451, %v1449
    %v1498 = vpack.c.bf16 %v1455, %v1453
    %v1499 = vpack.c.bf16 %v1459, %v1457
    %v1500 = vpack.c.bf16 %v1463, %v1461
    %v1501 = vpack.c.bf16 %v1467, %v1465
    %v1502 = vpack.c.bf16 %v1471, %v1469
    %v1503 = vpack.c.bf16 %v1475, %v1473
    %v1504 = vpack.c.bf16 %v1479, %v1477
    %v1505 = vpack.c.bf16 %v1483, %v1481
    %v1506 = vpack.c.bf16 %v1487, %v1485
    %v1507 = vpack.c.bf16 %v1491, %v1489
    %v1508 = vld [vmem:[%s17] sm:$0xf]
    %v1509 = vld [vmem:[%s17 + $0x4] sm:$0xf]
    %v1510 = vld [vmem:[%s17 + $0x8] sm:$0xf]
    %v1511 = vld [vmem:[%s17 + $0xc] sm:$0xf]
    %v1512 = vld [vmem:[%s17 + $0x10] sm:$0xf]
    %v1513 = vld [vmem:[%s17 + $0x14] sm:$0xf]
    %v1514 = vld [vmem:[%s17 + $0x18] sm:$0xf]
    %v1515 = vld [vmem:[%s17 + $0x1c] sm:$0xf]
    %v1516 = vld [vmem:[%s17 + $0x20] sm:$0xf]
    %v1517 = vld [vmem:[%s17 + $0x24] sm:$0xf]
    %v1518 = vld [vmem:[%s17 + $0x28] sm:$0xf]
    %v1519 = vld [vmem:[%s17 + $0x2c] sm:$0xf]
    %v1520 = vld [vmem:[%s17 + $0x30] sm:$0xf]
    %v1521 = vld [vmem:[%s17 + $0x34] sm:$0xf]
    %v1522 = vld [vmem:[%s17 + $0x38] sm:$0xf]
    %v1523 = vld [vmem:[%s17 + $0x3c] sm:$0xf]
    %v1540 = vunpack.c.l.b16 %v1508
    %v1541 = vunpack.c.l.b16 %v1509
    %v1542 = vunpack.c.l.b16 %v1510
    %v1543 = vunpack.c.l.b16 %v1511
    %v1544 = vunpack.c.l.b16 %v1512
    %v1545 = vunpack.c.l.b16 %v1513
    %v1546 = vunpack.c.l.b16 %v1514
    %v1547 = vunpack.c.l.b16 %v1515
    %v1548 = vunpack.c.l.b16 %v1516
    %v1549 = vunpack.c.l.b16 %v1517
    %v1550 = vunpack.c.l.b16 %v1518
    %v1551 = vunpack.c.l.b16 %v1519
    %v1552 = vunpack.c.l.b16 %v1520
    %v1553 = vunpack.c.l.b16 %v1521
    %v1554 = vunpack.c.l.b16 %v1522
    %v1555 = vunpack.c.l.b16 %v1523
    %v1556 = vpack.c.b16 %v1541, %v1540
    %v1557 = vpack.c.b16 %v1543, %v1542
    %v1558 = vpack.c.b16 %v1545, %v1544
    %v1559 = vpack.c.b16 %v1547, %v1546
    %v1560 = vpack.c.b16 %v1549, %v1548
    %v1561 = vpack.c.b16 %v1551, %v1550
    %v1562 = vpack.c.b16 %v1553, %v1552
    %v1563 = vpack.c.b16 %v1555, %v1554
    %1572 = vmatprep.subr.bf16.mxu0 0
    %1573 = vmatpush1.bf16.msra.mxu0 %v1556
    %1574 = vmatprep.subr.bf16.mxu0 0
    %1575 = vmatpush1.bf16.msra.mxu0 %v1557
    %1576 = vmatprep.subr.bf16.mxu0 0
    %1577 = vmatpush1.bf16.msra.mxu0 %v1558
    %1578 = vmatprep.subr.bf16.mxu0 0
    %1579 = vmatpush1.bf16.msra.mxu0 %v1559
    %1580 = vmatprep.subr.bf16.mxu0 0
    %1581 = vmatpush1.bf16.msra.mxu0 %v1560
    %1582 = vmatprep.subr.bf16.mxu0 0
    %1583 = vmatpush1.bf16.msra.mxu0 %v1561
    %1584 = vmatprep.subr.bf16.mxu0 0
    %1585 = vmatpush1.bf16.msra.mxu0 %v1562
    %1586 = vmatprep.subr.bf16.mxu0 0
    %1587 = vmatpush1.bf16.msra.mxu0 %v1563
    %1588 = vmatprep.subr.bf16.mxu0 0
    %1589 = vmatpush1.bf16.msra.mxu0 0
    %1590 = vmatprep.subr.bf16.mxu0 0
    %1591 = vmatpush1.bf16.msra.mxu0 0
    %1592 = vmatprep.subr.bf16.mxu0 0
    %1593 = vmatpush1.bf16.msra.mxu0 0
    %1594 = vmatprep.subr.bf16.mxu0 0
    %1595 = vmatpush1.bf16.msra.mxu0 0
    %1596 = vmatprep.subr.bf16.mxu0 0
    %1597 = vmatpush1.bf16.msra.mxu0 0
    %1598 = vmatprep.subr.bf16.mxu0 0
    %1599 = vmatpush1.bf16.msra.mxu0 0
    %1600 = vmatprep.subr.bf16.mxu0 0
    %1601 = vmatpush1.bf16.msra.mxu0 0
    %1602 = vmatprep.subr.bf16.mxu0 0
    %1603 = vmatpush1.bf16.msra.mxu0 0
    %1604 = vmatprep.mubr.bf16.mxu0 0
    %1605 = vmatmul.mubr.bf16.gmra.mrb[0].mxu0 %v1492
    %v1606 = vpop.f32.mrb[0].mxu0
    %v1607 = vadd.f32 0.0, %v1606
    %v1608 = vpop.f32.mrb[0].mxu0
    %v1609 = vpop.f32.mrb[0].mxu0
    %v1610 = vadd.f32 0.0, %v1609
    %v1611 = vpop.f32.mrb[0].mxu0
    %1612 = vmatprep.mubr.bf16.mxu0 0
    %1613 = vmatmul.mubr.bf16.gmra.mrb[0].mxu0 %v1493
    %v1614 = vpop.f32.mrb[0].mxu0
    %v1615 = vadd.f32 0.0, %v1614
    %v1616 = vpop.f32.mrb[0].mxu0
    %v1617 = vpop.f32.mrb[0].mxu0
    %v1618 = vadd.f32 0.0, %v1617
    %v1619 = vpop.f32.mrb[0].mxu0
    %1620 = vmatprep.mubr.bf16.mxu0 0
    %1621 = vmatmul.mubr.bf16.gmra.mrb[0].mxu0 %v1494
    %v1622 = vpop.f32.mrb[0].mxu0
    %v1623 = vadd.f32 0.0, %v1622
    %v1624 = vpop.f32.mrb[0].mxu0
    %v1625 = vpop.f32.mrb[0].mxu0
    %v1626 = vadd.f32 0.0, %v1625
    %v1627 = vpop.f32.mrb[0].mxu0
    %1628 = vmatprep.mubr.bf16.mxu0 0
    %1629 = vmatmul.mubr.bf16.gmra.mrb[0].mxu0 %v1495
    %v1630 = vpop.f32.mrb[0].mxu0
    %v1631 = vadd.f32 0.0, %v1630
    %v1632 = vpop.f32.mrb[0].mxu0
    %v1633 = vpop.f32.mrb[0].mxu0
    %v1634 = vadd.f32 0.0, %v1633
    %v1635 = vpop.f32.mrb[0].mxu0
    %1636 = vmatprep.mubr.bf16.mxu0 0
    %1637 = vmatmul.mubr.bf16.gmra.mrb[0].mxu0 %v1496
    %v1638 = vpop.f32.mrb[0].mxu0
    %v1639 = vadd.f32 0.0, %v1638
    %v1640 = vpop.f32.mrb[0].mxu0
    %v1641 = vpop.f32.mrb[0].mxu0
    %v1642 = vadd.f32 0.0, %v1641
    %v1643 = vpop.f32.mrb[0].mxu0
    %1644 = vmatprep.mubr.bf16.mxu0 0
    %1645 = vmatmul.mubr.bf16.gmra.mrb[0].mxu0 %v1497
    %v1646 = vpop.f32.mrb[0].mxu0
    %v1647 = vadd.f32 0.0, %v1646
    %v1648 = vpop.f32.mrb[0].mxu0
    %v1649 = vpop.f32.mrb[0].mxu0
    %v1650 = vadd.f32 0.0, %v1649
    %v1651 = vpop.f32.mrb[0].mxu0
    %1652 = vmatprep.mubr.bf16.mxu0 0
    %1653 = vmatmul.mubr.bf16.gmra.mrb[0].mxu0 %v1498
    %v1654 = vpop.f32.mrb[0].mxu0
    %v1655 = vadd.f32 0.0, %v1654
    %v1656 = vpop.f32.mrb[0].mxu0
    %v1657 = vpop.f32.mrb[0].mxu0
    %v1658 = vadd.f32 0.0, %v1657
    %v1659 = vpop.f32.mrb[0].mxu0
    %1660 = vmatprep.mubr.bf16.mxu0 0
    %1661 = vmatmul.mubr.bf16.gmra.mrb[0].mxu0 %v1499
    %v1662 = vpop.f32.mrb[0].mxu0
    %v1663 = vadd.f32 0.0, %v1662
    %v1664 = vpop.f32.mrb[0].mxu0
    %v1665 = vpop.f32.mrb[0].mxu0
    %v1666 = vadd.f32 0.0, %v1665
    %v1667 = vpop.f32.mrb[0].mxu0
    %1668 = vmatprep.mubr.bf16.mxu0 0
    %1669 = vmatmul.mubr.bf16.gmra.mrb[0].mxu0 %v1500
    %v1670 = vpop.f32.mrb[0].mxu0
    %v1671 = vadd.f32 0.0, %v1670
    %v1672 = vpop.f32.mrb[0].mxu0
    %v1673 = vpop.f32.mrb[0].mxu0
    %v1674 = vadd.f32 0.0, %v1673
    %v1675 = vpop.f32.mrb[0].mxu0
    %1676 = vmatprep.mubr.bf16.mxu0 0
    %1677 = vmatmul.mubr.bf16.gmra.mrb[0].mxu0 %v1501
    %v1678 = vpop.f32.mrb[0].mxu0
    %v1679 = vadd.f32 0.0, %v1678
    %v1680 = vpop.f32.mrb[0].mxu0
    %v1681 = vpop.f32.mrb[0].mxu0
    %v1682 = vadd.f32 0.0, %v1681
    %v1683 = vpop.f32.mrb[0].mxu0
    %1684 = vmatprep.mubr.bf16.mxu0 0
    %1685 = vmatmul.mubr.bf16.gmra.mrb[0].mxu0 %v1502
    %v1686 = vpop.f32.mrb[0].mxu0
    %v1687 = vadd.f32 0.0, %v1686
    %v1688 = vpop.f32.mrb[0].mxu0
    %v1689 = vpop.f32.mrb[0].mxu0
    %v1690 = vadd.f32 0.0, %v1689
    %v1691 = vpop.f32.mrb[0].mxu0
    %1692 = vmatprep.mubr.bf16.mxu0 0
    %1693 = vmatmul.mubr.bf16.gmra.mrb[0].mxu0 %v1503
    %v1694 = vpop.f32.mrb[0].mxu0
    %v1695 = vadd.f32 0.0, %v1694
    %v1696 = vpop.f32.mrb[0].mxu0
    %v1697 = vpop.f32.mrb[0].mxu0
    %v1698 = vadd.f32 0.0, %v1697
    %v1699 = vpop.f32.mrb[0].mxu0
    %1700 = vmatprep.mubr.bf16.mxu0 0
    %1701 = vmatmul.mubr.bf16.gmra.mrb[0].mxu0 %v1504
    %v1702 = vpop.f32.mrb[0].mxu0
    %v1703 = vadd.f32 0.0, %v1702
    %v1704 = vpop.f32.mrb[0].mxu0
    %v1705 = vpop.f32.mrb[0].mxu0
    %v1706 = vadd.f32 0.0, %v1705
    %v1707 = vpop.f32.mrb[0].mxu0
    %1708 = vmatprep.mubr.bf16.mxu0 0
    %1709 = vmatmul.mubr.bf16.gmra.mrb[0].mxu0 %v1505
    %v1710 = vpop.f32.mrb[0].mxu0
    %v1711 = vadd.f32 0.0, %v1710
    %v1712 = vpop.f32.mrb[0].mxu0
    %v1713 = vpop.f32.mrb[0].mxu0
    %v1714 = vadd.f32 0.0, %v1713
    %v1715 = vpop.f32.mrb[0].mxu0
    %1716 = vmatprep.mubr.bf16.mxu0 0
    %1717 = vmatmul.mubr.bf16.gmra.mrb[0].mxu0 %v1506
    %v1718 = vpop.f32.mrb[0].mxu0
    %v1719 = vadd.f32 0.0, %v1718
    %v1720 = vpop.f32.mrb[0].mxu0
    %v1721 = vpop.f32.mrb[0].mxu0
    %v1722 = vadd.f32 0.0, %v1721
    %v1723 = vpop.f32.mrb[0].mxu0
    %1724 = vmatprep.mubr.bf16.mxu0 0
    %1725 = vmatmul.mubr.bf16.gmra.mrb[0].mxu0 %v1507
    %v1726 = vpop.f32.mrb[0].mxu0
    %v1727 = vadd.f32 0.0, %v1726
    %v1728 = vpop.f32.mrb[0].mxu0
    %v1729 = vpop.f32.mrb[0].mxu0
    %v1730 = vadd.f32 0.0, %v1729
    %v1731 = vpop.f32.mrb[0].mxu0
    %1732 = vdwg.mxu0
    %v1733 = vmul.f32 %v1607, %v221
    %v1734 = vmul.f32 %v1610, %v224
    %v1735 = vmul.f32 %v1615, %v229
    %v1736 = vmul.f32 %v1618, %v232
    %v1737 = vmul.f32 %v1623, %v237
    %v1738 = vmul.f32 %v1626, %v240
    %v1739 = vmul.f32 %v1631, %v245
    %v1740 = vmul.f32 %v1634, %v248
    %v1741 = vmul.f32 %v1639, %v253
    %v1742 = vmul.f32 %v1642, %v256
    %v1743 = vmul.f32 %v1647, %v261
    %v1744 = vmul.f32 %v1650, %v264
    %v1745 = vmul.f32 %v1655, %v269
    %v1746 = vmul.f32 %v1658, %v272
    %v1747 = vmul.f32 %v1663, %v277
    %v1748 = vmul.f32 %v1666, %v280
    %v1749 = vmul.f32 %v1671, %v285
    %v1750 = vmul.f32 %v1674, %v288
    %v1751 = vmul.f32 %v1679, %v293
    %v1752 = vmul.f32 %v1682, %v296
    %v1753 = vmul.f32 %v1687, %v301
    %v1754 = vmul.f32 %v1690, %v304
    %v1755 = vmul.f32 %v1695, %v309
    %v1756 = vmul.f32 %v1698, %v312
    %v1757 = vmul.f32 %v1703, %v317
    %v1758 = vmul.f32 %v1706, %v320
    %v1759 = vmul.f32 %v1711, %v325
    %v1760 = vmul.f32 %v1714, %v328
    %v1761 = vmul.f32 %v1719, %v333
    %v1762 = vmul.f32 %v1722, %v336
    %v1763 = vmul.f32 %v1727, %v341
    %v1764 = vmul.f32 %v1730, %v344
    %v1765 = vrot.slane %v1733, 4
    %v1766 = vadd.f32 %v1733, %v1765
    %v1767 = vrot.slane %v1766, 2
    %v1768 = vadd.f32 %v1766, %v1767
    %v1769 = vrot.slane %v1768, 1
    %v1770 = vadd.f32 %v1768, %v1769
    %v1771 = vrot.slane %v1734, 4
    %v1772 = vadd.f32 %v1734, %v1771
    %v1773 = vrot.slane %v1772, 2
    %v1774 = vadd.f32 %v1772, %v1773
    %v1775 = vrot.slane %v1774, 1
    %v1776 = vadd.f32 %v1774, %v1775
    %v1777 = vrot.slane %v1735, 4
    %v1778 = vadd.f32 %v1735, %v1777
    %v1779 = vrot.slane %v1778, 2
    %v1780 = vadd.f32 %v1778, %v1779
    %v1781 = vrot.slane %v1780, 1
    %v1782 = vadd.f32 %v1780, %v1781
    %v1783 = vrot.slane %v1736, 4
    %v1784 = vadd.f32 %v1736, %v1783
    %v1785 = vrot.slane %v1784, 2
    %v1786 = vadd.f32 %v1784, %v1785
    %v1787 = vrot.slane %v1786, 1
    %v1788 = vadd.f32 %v1786, %v1787
    %v1789 = vrot.slane %v1737, 4
    %v1790 = vadd.f32 %v1737, %v1789
    %v1791 = vrot.slane %v1790, 2
    %v1792 = vadd.f32 %v1790, %v1791
    %v1793 = vrot.slane %v1792, 1
    %v1794 = vadd.f32 %v1792, %v1793
    %v1795 = vrot.slane %v1738, 4
    %v1796 = vadd.f32 %v1738, %v1795
    %v1797 = vrot.slane %v1796, 2
    %v1798 = vadd.f32 %v1796, %v1797
    %v1799 = vrot.slane %v1798, 1
    %v1800 = vadd.f32 %v1798, %v1799
    %v1801 = vrot.slane %v1739, 4
    %v1802 = vadd.f32 %v1739, %v1801
    %v1803 = vrot.slane %v1802, 2
    %v1804 = vadd.f32 %v1802, %v1803
    %v1805 = vrot.slane %v1804, 1
    %v1806 = vadd.f32 %v1804, %v1805
    %v1807 = vrot.slane %v1740, 4
    %v1808 = vadd.f32 %v1740, %v1807
    %v1809 = vrot.slane %v1808, 2
    %v1810 = vadd.f32 %v1808, %v1809
    %v1811 = vrot.slane %v1810, 1
    %v1812 = vadd.f32 %v1810, %v1811
    %v1813 = vrot.slane %v1741, 4
    %v1814 = vadd.f32 %v1741, %v1813
    %v1815 = vrot.slane %v1814, 2
    %v1816 = vadd.f32 %v1814, %v1815
    %v1817 = vrot.slane %v1816, 1
    %v1818 = vadd.f32 %v1816, %v1817
    %v1819 = vrot.slane %v1742, 4
    %v1820 = vadd.f32 %v1742, %v1819
    %v1821 = vrot.slane %v1820, 2
    %v1822 = vadd.f32 %v1820, %v1821
    %v1823 = vrot.slane %v1822, 1
    %v1824 = vadd.f32 %v1822, %v1823
    %v1825 = vrot.slane %v1743, 4
    %v1826 = vadd.f32 %v1743, %v1825
    %v1827 = vrot.slane %v1826, 2
    %v1828 = vadd.f32 %v1826, %v1827
    %v1829 = vrot.slane %v1828, 1
    %v1830 = vadd.f32 %v1828, %v1829
    %v1831 = vrot.slane %v1744, 4
    %v1832 = vadd.f32 %v1744, %v1831
    %v1833 = vrot.slane %v1832, 2
    %v1834 = vadd.f32 %v1832, %v1833
    %v1835 = vrot.slane %v1834, 1
    %v1836 = vadd.f32 %v1834, %v1835
    %v1837 = vrot.slane %v1745, 4
    %v1838 = vadd.f32 %v1745, %v1837
    %v1839 = vrot.slane %v1838, 2
    %v1840 = vadd.f32 %v1838, %v1839
    %v1841 = vrot.slane %v1840, 1
    %v1842 = vadd.f32 %v1840, %v1841
    %v1843 = vrot.slane %v1746, 4
    %v1844 = vadd.f32 %v1746, %v1843
    %v1845 = vrot.slane %v1844, 2
    %v1846 = vadd.f32 %v1844, %v1845
    %v1847 = vrot.slane %v1846, 1
    %v1848 = vadd.f32 %v1846, %v1847
    %v1849 = vrot.slane %v1747, 4
    %v1850 = vadd.f32 %v1747, %v1849
    %v1851 = vrot.slane %v1850, 2
    %v1852 = vadd.f32 %v1850, %v1851
    %v1853 = vrot.slane %v1852, 1
    %v1854 = vadd.f32 %v1852, %v1853
    %v1855 = vrot.slane %v1748, 4
    %v1856 = vadd.f32 %v1748, %v1855
    %v1857 = vrot.slane %v1856, 2
    %v1858 = vadd.f32 %v1856, %v1857
    %v1859 = vrot.slane %v1858, 1
    %v1860 = vadd.f32 %v1858, %v1859
    %v1861 = vrot.slane %v1749, 4
    %v1862 = vadd.f32 %v1749, %v1861
    %v1863 = vrot.slane %v1862, 2
    %v1864 = vadd.f32 %v1862, %v1863
    %v1865 = vrot.slane %v1864, 1
    %v1866 = vadd.f32 %v1864, %v1865
    %v1867 = vrot.slane %v1750, 4
    %v1868 = vadd.f32 %v1750, %v1867
    %v1869 = vrot.slane %v1868, 2
    %v1870 = vadd.f32 %v1868, %v1869
    %v1871 = vrot.slane %v1870, 1
    %v1872 = vadd.f32 %v1870, %v1871
    %v1873 = vrot.slane %v1751, 4
    %v1874 = vadd.f32 %v1751, %v1873
    %v1875 = vrot.slane %v1874, 2
    %v1876 = vadd.f32 %v1874, %v1875
    %v1877 = vrot.slane %v1876, 1
    %v1878 = vadd.f32 %v1876, %v1877
    %v1879 = vrot.slane %v1752, 4
    %v1880 = vadd.f32 %v1752, %v1879
    %v1881 = vrot.slane %v1880, 2
    %v1882 = vadd.f32 %v1880, %v1881
    %v1883 = vrot.slane %v1882, 1
    %v1884 = vadd.f32 %v1882, %v1883
    %v1885 = vrot.slane %v1753, 4
    %v1886 = vadd.f32 %v1753, %v1885
    %v1887 = vrot.slane %v1886, 2
    %v1888 = vadd.f32 %v1886, %v1887
    %v1889 = vrot.slane %v1888, 1
    %v1890 = vadd.f32 %v1888, %v1889
    %v1891 = vrot.slane %v1754, 4
    %v1892 = vadd.f32 %v1754, %v1891
    %v1893 = vrot.slane %v1892, 2
    %v1894 = vadd.f32 %v1892, %v1893
    %v1895 = vrot.slane %v1894, 1
    %v1896 = vadd.f32 %v1894, %v1895
    %v1897 = vrot.slane %v1755, 4
    %v1898 = vadd.f32 %v1755, %v1897
    %v1899 = vrot.slane %v1898, 2
    %v1900 = vadd.f32 %v1898, %v1899
    %v1901 = vrot.slane %v1900, 1
    %v1902 = vadd.f32 %v1900, %v1901
    %v1903 = vrot.slane %v1756, 4
    %v1904 = vadd.f32 %v1756, %v1903
    %v1905 = vrot.slane %v1904, 2
    %v1906 = vadd.f32 %v1904, %v1905
    %v1907 = vrot.slane %v1906, 1
    %v1908 = vadd.f32 %v1906, %v1907
    %v1909 = vrot.slane %v1757, 4
    %v1910 = vadd.f32 %v1757, %v1909
    %v1911 = vrot.slane %v1910, 2
    %v1912 = vadd.f32 %v1910, %v1911
    %v1913 = vrot.slane %v1912, 1
    %v1914 = vadd.f32 %v1912, %v1913
    %v1915 = vrot.slane %v1758, 4
    %v1916 = vadd.f32 %v1758, %v1915
    %v1917 = vrot.slane %v1916, 2
    %v1918 = vadd.f32 %v1916, %v1917
    %v1919 = vrot.slane %v1918, 1
    %v1920 = vadd.f32 %v1918, %v1919
    %v1921 = vrot.slane %v1759, 4
    %v1922 = vadd.f32 %v1759, %v1921
    %v1923 = vrot.slane %v1922, 2
    %v1924 = vadd.f32 %v1922, %v1923
    %v1925 = vrot.slane %v1924, 1
    %v1926 = vadd.f32 %v1924, %v1925
    %v1927 = vrot.slane %v1760, 4
    %v1928 = vadd.f32 %v1760, %v1927
    %v1929 = vrot.slane %v1928, 2
    %v1930 = vadd.f32 %v1928, %v1929
    %v1931 = vrot.slane %v1930, 1
    %v1932 = vadd.f32 %v1930, %v1931
    %v1933 = vrot.slane %v1761, 4
    %v1934 = vadd.f32 %v1761, %v1933
    %v1935 = vrot.slane %v1934, 2
    %v1936 = vadd.f32 %v1934, %v1935
    %v1937 = vrot.slane %v1936, 1
    %v1938 = vadd.f32 %v1936, %v1937
    %v1939 = vrot.slane %v1762, 4
    %v1940 = vadd.f32 %v1762, %v1939
    %v1941 = vrot.slane %v1940, 2
    %v1942 = vadd.f32 %v1940, %v1941
    %v1943 = vrot.slane %v1942, 1
    %v1944 = vadd.f32 %v1942, %v1943
    %v1945 = vrot.slane %v1763, 4
    %v1946 = vadd.f32 %v1763, %v1945
    %v1947 = vrot.slane %v1946, 2
    %v1948 = vadd.f32 %v1946, %v1947
    %v1949 = vrot.slane %v1948, 1
    %v1950 = vadd.f32 %v1948, %v1949
    %v1951 = vrot.slane %v1764, 4
    %v1952 = vadd.f32 %v1764, %v1951
    %v1953 = vrot.slane %v1952, 2
    %v1954 = vadd.f32 %v1952, %v1953
    %v1955 = vrot.slane %v1954, 1
    %v1956 = vadd.f32 %v1954, %v1955
    %v1957 = vrot.slane %v1607, 4
    %v1958 = vadd.f32 %v1607, %v1957
    %v1959 = vrot.slane %v1958, 2
    %v1960 = vadd.f32 %v1958, %v1959
    %v1961 = vrot.slane %v1960, 1
    %v1962 = vadd.f32 %v1960, %v1961
    %v1963 = vrot.slane %v1610, 4
    %v1964 = vadd.f32 %v1610, %v1963
    %v1965 = vrot.slane %v1964, 2
    %v1966 = vadd.f32 %v1964, %v1965
    %v1967 = vrot.slane %v1966, 1
    %v1968 = vadd.f32 %v1966, %v1967
    %v1969 = vrot.slane %v1615, 4
    %v1970 = vadd.f32 %v1615, %v1969
    %v1971 = vrot.slane %v1970, 2
    %v1972 = vadd.f32 %v1970, %v1971
    %v1973 = vrot.slane %v1972, 1
    %v1974 = vadd.f32 %v1972, %v1973
    %v1975 = vrot.slane %v1618, 4
    %v1976 = vadd.f32 %v1618, %v1975
    %v1977 = vrot.slane %v1976, 2
    %v1978 = vadd.f32 %v1976, %v1977
    %v1979 = vrot.slane %v1978, 1
    %v1980 = vadd.f32 %v1978, %v1979
    %v1981 = vrot.slane %v1623, 4
    %v1982 = vadd.f32 %v1623, %v1981
    %v1983 = vrot.slane %v1982, 2
    %v1984 = vadd.f32 %v1982, %v1983
    %v1985 = vrot.slane %v1984, 1
    %v1986 = vadd.f32 %v1984, %v1985
    %v1987 = vrot.slane %v1626, 4
    %v1988 = vadd.f32 %v1626, %v1987
    %v1989 = vrot.slane %v1988, 2
    %v1990 = vadd.f32 %v1988, %v1989
    %v1991 = vrot.slane %v1990, 1
    %v1992 = vadd.f32 %v1990, %v1991
    %v1993 = vrot.slane %v1631, 4
    %v1994 = vadd.f32 %v1631, %v1993
    %v1995 = vrot.slane %v1994, 2
    %v1996 = vadd.f32 %v1994, %v1995
    %v1997 = vrot.slane %v1996, 1
    %v1998 = vadd.f32 %v1996, %v1997
    %v1999 = vrot.slane %v1634, 4
    %v2000 = vadd.f32 %v1634, %v1999
    %v2001 = vrot.slane %v2000, 2
    %v2002 = vadd.f32 %v2000, %v2001
    %v2003 = vrot.slane %v2002, 1
    %v2004 = vadd.f32 %v2002, %v2003
    %v2005 = vrot.slane %v1639, 4
    %v2006 = vadd.f32 %v1639, %v2005
    %v2007 = vrot.slane %v2006, 2
    %v2008 = vadd.f32 %v2006, %v2007
    %v2009 = vrot.slane %v2008, 1
    %v2010 = vadd.f32 %v2008, %v2009
    %v2011 = vrot.slane %v1642, 4
    %v2012 = vadd.f32 %v1642, %v2011
    %v2013 = vrot.slane %v2012, 2
    %v2014 = vadd.f32 %v2012, %v2013
    %v2015 = vrot.slane %v2014, 1
    %v2016 = vadd.f32 %v2014, %v2015
    %v2017 = vrot.slane %v1647, 4
    %v2018 = vadd.f32 %v1647, %v2017
    %v2019 = vrot.slane %v2018, 2
    %v2020 = vadd.f32 %v2018, %v2019
    %v2021 = vrot.slane %v2020, 1
    %v2022 = vadd.f32 %v2020, %v2021
    %v2023 = vrot.slane %v1650, 4
    %v2024 = vadd.f32 %v1650, %v2023
    %v2025 = vrot.slane %v2024, 2
    %v2026 = vadd.f32 %v2024, %v2025
    %v2027 = vrot.slane %v2026, 1
    %v2028 = vadd.f32 %v2026, %v2027
    %v2029 = vrot.slane %v1655, 4
    %v2030 = vadd.f32 %v1655, %v2029
    %v2031 = vrot.slane %v2030, 2
    %v2032 = vadd.f32 %v2030, %v2031
    %v2033 = vrot.slane %v2032, 1
    %v2034 = vadd.f32 %v2032, %v2033
    %v2035 = vrot.slane %v1658, 4
    %v2036 = vadd.f32 %v1658, %v2035
    %v2037 = vrot.slane %v2036, 2
    %v2038 = vadd.f32 %v2036, %v2037
    %v2039 = vrot.slane %v2038, 1
    %v2040 = vadd.f32 %v2038, %v2039
    %v2041 = vrot.slane %v1663, 4
    %v2042 = vadd.f32 %v1663, %v2041
    %v2043 = vrot.slane %v2042, 2
    %v2044 = vadd.f32 %v2042, %v2043
    %v2045 = vrot.slane %v2044, 1
    %v2046 = vadd.f32 %v2044, %v2045
    %v2047 = vrot.slane %v1666, 4
    %v2048 = vadd.f32 %v1666, %v2047
    %v2049 = vrot.slane %v2048, 2
    %v2050 = vadd.f32 %v2048, %v2049
    %v2051 = vrot.slane %v2050, 1
    %v2052 = vadd.f32 %v2050, %v2051
    %v2053 = vrot.slane %v1671, 4
    %v2054 = vadd.f32 %v1671, %v2053
    %v2055 = vrot.slane %v2054, 2
    %v2056 = vadd.f32 %v2054, %v2055
    %v2057 = vrot.slane %v2056, 1
    %v2058 = vadd.f32 %v2056, %v2057
    %v2059 = vrot.slane %v1674, 4
    %v2060 = vadd.f32 %v1674, %v2059
    %v2061 = vrot.slane %v2060, 2
    %v2062 = vadd.f32 %v2060, %v2061
    %v2063 = vrot.slane %v2062, 1
    %v2064 = vadd.f32 %v2062, %v2063
    %v2065 = vrot.slane %v1679, 4
    %v2066 = vadd.f32 %v1679, %v2065
    %v2067 = vrot.slane %v2066, 2
    %v2068 = vadd.f32 %v2066, %v2067
    %v2069 = vrot.slane %v2068, 1
    %v2070 = vadd.f32 %v2068, %v2069
    %v2071 = vrot.slane %v1682, 4
    %v2072 = vadd.f32 %v1682, %v2071
    %v2073 = vrot.slane %v2072, 2
    %v2074 = vadd.f32 %v2072, %v2073
    %v2075 = vrot.slane %v2074, 1
    %v2076 = vadd.f32 %v2074, %v2075
    %v2077 = vrot.slane %v1687, 4
    %v2078 = vadd.f32 %v1687, %v2077
    %v2079 = vrot.slane %v2078, 2
    %v2080 = vadd.f32 %v2078, %v2079
    %v2081 = vrot.slane %v2080, 1
    %v2082 = vadd.f32 %v2080, %v2081
    %v2083 = vrot.slane %v1690, 4
    %v2084 = vadd.f32 %v1690, %v2083
    %v2085 = vrot.slane %v2084, 2
    %v2086 = vadd.f32 %v2084, %v2085
    %v2087 = vrot.slane %v2086, 1
    %v2088 = vadd.f32 %v2086, %v2087
    %v2089 = vrot.slane %v1695, 4
    %v2090 = vadd.f32 %v1695, %v2089
    %v2091 = vrot.slane %v2090, 2
    %v2092 = vadd.f32 %v2090, %v2091
    %v2093 = vrot.slane %v2092, 1
    %v2094 = vadd.f32 %v2092, %v2093
    %v2095 = vrot.slane %v1698, 4
    %v2096 = vadd.f32 %v1698, %v2095
    %v2097 = vrot.slane %v2096, 2
    %v2098 = vadd.f32 %v2096, %v2097
    %v2099 = vrot.slane %v2098, 1
    %v2100 = vadd.f32 %v2098, %v2099
    %v2101 = vrot.slane %v1703, 4
    %v2102 = vadd.f32 %v1703, %v2101
    %v2103 = vrot.slane %v2102, 2
    %v2104 = vadd.f32 %v2102, %v2103
    %v2105 = vrot.slane %v2104, 1
    %v2106 = vadd.f32 %v2104, %v2105
    %v2107 = vrot.slane %v1706, 4
    %v2108 = vadd.f32 %v1706, %v2107
    %v2109 = vrot.slane %v2108, 2
    %v2110 = vadd.f32 %v2108, %v2109
    %v2111 = vrot.slane %v2110, 1
    %v2112 = vadd.f32 %v2110, %v2111
    %v2113 = vrot.slane %v1711, 4
    %v2114 = vadd.f32 %v1711, %v2113
    %v2115 = vrot.slane %v2114, 2
    %v2116 = vadd.f32 %v2114, %v2115
    %v2117 = vrot.slane %v2116, 1
    %v2118 = vadd.f32 %v2116, %v2117
    %v2119 = vrot.slane %v1714, 4
    %v2120 = vadd.f32 %v1714, %v2119
    %v2121 = vrot.slane %v2120, 2
    %v2122 = vadd.f32 %v2120, %v2121
    %v2123 = vrot.slane %v2122, 1
    %v2124 = vadd.f32 %v2122, %v2123
    %v2125 = vrot.slane %v1719, 4
    %v2126 = vadd.f32 %v1719, %v2125
    %v2127 = vrot.slane %v2126, 2
    %v2128 = vadd.f32 %v2126, %v2127
    %v2129 = vrot.slane %v2128, 1
    %v2130 = vadd.f32 %v2128, %v2129
    %v2131 = vrot.slane %v1722, 4
    %v2132 = vadd.f32 %v1722, %v2131
    %v2133 = vrot.slane %v2132, 2
    %v2134 = vadd.f32 %v2132, %v2133
    %v2135 = vrot.slane %v2134, 1
    %v2136 = vadd.f32 %v2134, %v2135
    %v2137 = vrot.slane %v1727, 4
    %v2138 = vadd.f32 %v1727, %v2137
    %v2139 = vrot.slane %v2138, 2
    %v2140 = vadd.f32 %v2138, %v2139
    %v2141 = vrot.slane %v2140, 1
    %v2142 = vadd.f32 %v2140, %v2141
    %v2143 = vrot.slane %v1730, 4
    %v2144 = vadd.f32 %v1730, %v2143
    %v2145 = vrot.slane %v2144, 2
    %v2146 = vadd.f32 %v2144, %v2145
    %v2147 = vrot.slane %v2146, 1
    %v2148 = vadd.f32 %v2146, %v2147
    %v2149 = vmax.f32 %v1962, 1.0
    %v2150 = vmax.f32 %v1968, 1.0
    %v2151 = vmax.f32 %v1974, 1.0
    %v2152 = vmax.f32 %v1980, 1.0
    %v2153 = vmax.f32 %v1986, 1.0
    %v2154 = vmax.f32 %v1992, 1.0
    %v2155 = vmax.f32 %v1998, 1.0
    %v2156 = vmax.f32 %v2004, 1.0
    %v2157 = vmax.f32 %v2010, 1.0
    %v2158 = vmax.f32 %v2016, 1.0
    %v2159 = vmax.f32 %v2022, 1.0
    %v2160 = vmax.f32 %v2028, 1.0
    %v2161 = vmax.f32 %v2034, 1.0
    %v2162 = vmax.f32 %v2040, 1.0
    %v2163 = vmax.f32 %v2046, 1.0
    %v2164 = vmax.f32 %v2052, 1.0
    %v2165 = vmax.f32 %v2058, 1.0
    %v2166 = vmax.f32 %v2064, 1.0
    %v2167 = vmax.f32 %v2070, 1.0
    %v2168 = vmax.f32 %v2076, 1.0
    %v2169 = vmax.f32 %v2082, 1.0
    %v2170 = vmax.f32 %v2088, 1.0
    %v2171 = vmax.f32 %v2094, 1.0
    %v2172 = vmax.f32 %v2100, 1.0
    %v2173 = vmax.f32 %v2106, 1.0
    %v2174 = vmax.f32 %v2112, 1.0
    %v2175 = vmax.f32 %v2118, 1.0
    %v2176 = vmax.f32 %v2124, 1.0
    %v2177 = vmax.f32 %v2130, 1.0
    %v2178 = vmax.f32 %v2136, 1.0
    %v2179 = vmax.f32 %v2142, 1.0
    %v2180 = vmax.f32 %v2148, 1.0
    %v2181 = vrcp.pop %v2149
    %v2182 = vrcp.pop %v2150
    %v2183 = vrcp.pop %v2151
    %v2184 = vrcp.pop %v2152
    %v2185 = vrcp.pop %v2153
    %v2186 = vrcp.pop %v2154
    %v2187 = vrcp.pop %v2155
    %v2188 = vrcp.pop %v2156
    %v2189 = vrcp.pop %v2157
    %v2190 = vrcp.pop %v2158
    %v2191 = vrcp.pop %v2159
    %v2192 = vrcp.pop %v2160
    %v2193 = vrcp.pop %v2161
    %v2194 = vrcp.pop %v2162
    %v2195 = vrcp.pop %v2163
    %v2196 = vrcp.pop %v2164
    %v2197 = vrcp.pop %v2165
    %v2198 = vrcp.pop %v2166
    %v2199 = vrcp.pop %v2167
    %v2200 = vrcp.pop %v2168
    %v2201 = vrcp.pop %v2169
    %v2202 = vrcp.pop %v2170
    %v2203 = vrcp.pop %v2171
    %v2204 = vrcp.pop %v2172
    %v2205 = vrcp.pop %v2173
    %v2206 = vrcp.pop %v2174
    %v2207 = vrcp.pop %v2175
    %v2208 = vrcp.pop %v2176
    %v2209 = vrcp.pop %v2177
    %v2210 = vrcp.pop %v2178
    %v2211 = vrcp.pop %v2179
    %v2212 = vrcp.pop %v2180
    %v2213 = vmul.f32 %v1770, %v2181
    %v2214 = vmul.f32 %v1776, %v2182
    %v2215 = vmul.f32 %v1782, %v2183
    %v2216 = vmul.f32 %v1788, %v2184
    %v2217 = vmul.f32 %v1794, %v2185
    %v2218 = vmul.f32 %v1800, %v2186
    %v2219 = vmul.f32 %v1806, %v2187
    %v2220 = vmul.f32 %v1812, %v2188
    %v2221 = vmul.f32 %v1818, %v2189
    %v2222 = vmul.f32 %v1824, %v2190
    %v2223 = vmul.f32 %v1830, %v2191
    %v2224 = vmul.f32 %v1836, %v2192
    %v2225 = vmul.f32 %v1842, %v2193
    %v2226 = vmul.f32 %v1848, %v2194
    %v2227 = vmul.f32 %v1854, %v2195
    %v2228 = vmul.f32 %v1860, %v2196
    %v2229 = vmul.f32 %v1866, %v2197
    %v2230 = vmul.f32 %v1872, %v2198
    %v2231 = vmul.f32 %v1878, %v2199
    %v2232 = vmul.f32 %v1884, %v2200
    %v2233 = vmul.f32 %v1890, %v2201
    %v2234 = vmul.f32 %v1896, %v2202
    %v2235 = vmul.f32 %v1902, %v2203
    %v2236 = vmul.f32 %v1908, %v2204
    %v2237 = vmul.f32 %v1914, %v2205
    %v2238 = vmul.f32 %v1920, %v2206
    %v2239 = vmul.f32 %v1926, %v2207
    %v2240 = vmul.f32 %v1932, %v2208
    %v2241 = vmul.f32 %v1938, %v2209
    %v2242 = vmul.f32 %v1944, %v2210
    %v2243 = vmul.f32 %v1950, %v2211
    %v2244 = vmul.f32 %v1956, %v2212
    %v2245 = vlaneseq
    %v2246 = vand.u32 %v2245, 127
    %vm2247 = vcmp.lt.s32.totalorder %v2246, 64
    %vm2280 = vcmask 1041409
    %v2281 = vsel %vm2280, %v2214, %v2213
    %vm2282 = vcmask 1042434
    %v2283 = vsel %vm2282, %v2215, %v2281
    %vm2284 = vcmask 1043459
    %v2285 = vsel %vm2284, %v2216, %v2283
    %vm2286 = vcmask 1044484
    %v2287 = vsel %vm2286, %v2217, %v2285
    %vm2288 = vcmask 1045509
    %v2289 = vsel %vm2288, %v2218, %v2287
    %vm2290 = vcmask 1046534
    %v2291 = vsel %vm2290, %v2219, %v2289
    %vm2292 = vcmask 1047559
    %v2293 = vsel %vm2292, %v2220, %v2291
    %v2294 = vsel %vm2280, %v2222, %v2221
    %v2295 = vsel %vm2282, %v2223, %v2294
    %v2296 = vsel %vm2284, %v2224, %v2295
    %v2297 = vsel %vm2286, %v2225, %v2296
    %v2298 = vsel %vm2288, %v2226, %v2297
    %v2299 = vsel %vm2290, %v2227, %v2298
    %v2300 = vsel %vm2292, %v2228, %v2299
    %v2301 = vsel %vm2280, %v2230, %v2229
    %v2302 = vsel %vm2282, %v2231, %v2301
    %v2303 = vsel %vm2284, %v2232, %v2302
    %v2304 = vsel %vm2286, %v2233, %v2303
    %v2305 = vsel %vm2288, %v2234, %v2304
    %v2306 = vsel %vm2290, %v2235, %v2305
    %v2307 = vsel %vm2292, %v2236, %v2306
    %v2308 = vsel %vm2280, %v2238, %v2237
    %v2309 = vsel %vm2282, %v2239, %v2308
    %v2310 = vsel %vm2284, %v2240, %v2309
    %v2311 = vsel %vm2286, %v2241, %v2310
    %v2312 = vsel %vm2288, %v2242, %v2311
    %v2313 = vsel %vm2290, %v2243, %v2312
    %v2314 = vsel %vm2292, %v2244, %v2313
    %v2319 = vsel %vm2247, %v63, %v2293
    %v2320 = vsel %vm2247, %v64, %v2300
    %v2321 = vsel %vm2247, %v65, %v2307
    %v2322 = vsel %vm2247, %v66, %v2314
    %v2323 = vpack.c.bf16 %v2320, %v2319
    %v2324 = vpack.c.bf16 %v2322, %v2321
    %v2325 = vld [vmem:[%s10] sm:$0xf]
    %v2326 = vld [vmem:[%s10 + $0x4] sm:$0xf]
    %v2327 = vld [vmem:[%s10 + $0x8] sm:$0xf]
    %v2328 = vld [vmem:[%s10 + $0xc] sm:$0xf]
    %v2329 = vld [vmem:[%s10 + $0x10] sm:$0xf]
    %v2330 = vld [vmem:[%s10 + $0x14] sm:$0xf]
    %v2331 = vld [vmem:[%s10 + $0x18] sm:$0xf]
    %v2332 = vld [vmem:[%s10 + $0x1c] sm:$0xf]
    %v2333 = vld [vmem:[%s10 + $0x20] sm:$0xf]
    %v2334 = vld [vmem:[%s10 + $0x24] sm:$0xf]
    %v2335 = vld [vmem:[%s10 + $0x28] sm:$0xf]
    %v2336 = vld [vmem:[%s10 + $0x2c] sm:$0xf]
    %v2337 = vld [vmem:[%s10 + $0x30] sm:$0xf]
    %v2338 = vld [vmem:[%s10 + $0x34] sm:$0xf]
    %v2339 = vld [vmem:[%s10 + $0x38] sm:$0xf]
    %v2340 = vld [vmem:[%s10 + $0x3c] sm:$0xf]
    %v2341 = vld [vmem:[%s11] sm:$0x1]
    %v2343 = vlaneseq
    %v2344 = vshrl.u32 %v2343, 7
    %v2345 = vsub.s32 0, %v2344
    %v2346 = vrot.slane %v2341, %v2345
    %v2364 = vunpack.c.l.b16 %v2325
    %v2365 = vunpack.c.l.b16 %v2326
    %v2366 = vunpack.c.l.b16 %v2327
    %v2367 = vunpack.c.l.b16 %v2328
    %v2368 = vunpack.c.l.b16 %v2329
    %v2369 = vunpack.c.l.b16 %v2330
    %v2370 = vunpack.c.l.b16 %v2331
    %v2371 = vunpack.c.l.b16 %v2332
    %v2372 = vunpack.c.l.b16 %v2333
    %v2373 = vunpack.c.l.b16 %v2334
    %v2374 = vunpack.c.l.b16 %v2335
    %v2375 = vunpack.c.l.b16 %v2336
    %v2376 = vunpack.c.l.b16 %v2337
    %v2377 = vunpack.c.l.b16 %v2338
    %v2378 = vunpack.c.l.b16 %v2339
    %v2379 = vunpack.c.l.b16 %v2340
    %v2380 = vpack.c.b16 %v2365, %v2364
    %v2381 = vpack.c.b16 %v2367, %v2366
    %v2382 = vpack.c.b16 %v2369, %v2368
    %v2383 = vpack.c.b16 %v2371, %v2370
    %v2384 = vpack.c.b16 %v2373, %v2372
    %v2385 = vpack.c.b16 %v2375, %v2374
    %v2386 = vpack.c.b16 %v2377, %v2376
    %v2387 = vpack.c.b16 %v2379, %v2378
    %2396 = vmatprep.subr.bf16.mxu0 0
    %2397 = vmatpush1.bf16.msra.mxu0 %v2380
    %2398 = vmatprep.subr.bf16.mxu0 0
    %2399 = vmatpush1.bf16.msra.mxu0 %v2381
    %2400 = vmatprep.subr.bf16.mxu0 0
    %2401 = vmatpush1.bf16.msra.mxu0 %v2382
    %2402 = vmatprep.subr.bf16.mxu0 0
    %2403 = vmatpush1.bf16.msra.mxu0 %v2383
    %2404 = vmatprep.subr.bf16.mxu0 0
    %2405 = vmatpush1.bf16.msra.mxu0 %v2384
    %2406 = vmatprep.subr.bf16.mxu0 0
    %2407 = vmatpush1.bf16.msra.mxu0 %v2385
    %2408 = vmatprep.subr.bf16.mxu0 0
    %2409 = vmatpush1.bf16.msra.mxu0 %v2386
    %2410 = vmatprep.subr.bf16.mxu0 0
    %2411 = vmatpush1.bf16.msra.mxu0 %v2387
    %2412 = vmatprep.subr.bf16.mxu0 0
    %2413 = vmatpush1.bf16.msra.mxu0 0
    %2414 = vmatprep.subr.bf16.mxu0 0
    %2415 = vmatpush1.bf16.msra.mxu0 0
    %2416 = vmatprep.subr.bf16.mxu0 0
    %2417 = vmatpush1.bf16.msra.mxu0 0
    %2418 = vmatprep.subr.bf16.mxu0 0
    %2419 = vmatpush1.bf16.msra.mxu0 0
    %2420 = vmatprep.subr.bf16.mxu0 0
    %2421 = vmatpush1.bf16.msra.mxu0 0
    %2422 = vmatprep.subr.bf16.mxu0 0
    %2423 = vmatpush1.bf16.msra.mxu0 0
    %2424 = vmatprep.subr.bf16.mxu0 0
    %2425 = vmatpush1.bf16.msra.mxu0 0
    %2426 = vmatprep.subr.bf16.mxu0 0
    %2427 = vmatpush1.bf16.msra.mxu0 0
    %2428 = vmatprep.mubr.bf16.mxu0 0
    %2429 = vmatmul.mubr.bf16.gmra.mrb[0].mxu0 %v2323
    %v2430 = vpop.f32.mrb[0].mxu0
    %v2431 = vadd.f32 %v2346, %v2430
    %v2432 = vpop.f32.mrb[0].mxu0
    %v2433 = vpop.f32.mrb[0].mxu0
    %v2434 = vadd.f32 %v2346, %v2433
    %v2435 = vpop.f32.mrb[0].mxu0
    %2436 = vmatprep.mubr.bf16.mxu0 0
    %2437 = vmatmul.mubr.bf16.gmra.mrb[0].mxu0 %v2324
    %v2438 = vpop.f32.mrb[0].mxu0
    %v2439 = vadd.f32 %v2346, %v2438
    %v2440 = vpop.f32.mrb[0].mxu0
    %v2441 = vpop.f32.mrb[0].mxu0
    %v2442 = vadd.f32 %v2346, %v2441
    %v2443 = vpop.f32.mrb[0].mxu0
    %2444 = vdwg.mxu0
    %v2445 = vadd.f32 %v63, %v2431
    %v2446 = vadd.f32 %v64, %v2434
    %v2447 = vadd.f32 %v65, %v2439
    %v2448 = vadd.f32 %v66, %v2442
    %v2449 = vld [vmem:[%s4] sm:$0x1]
    %v2450 = vld [vmem:[%s5] sm:$0x1]
    %v2451 = vsel %vm381, %v2445, 0.0
    %2452 = vadd.xlane.f32.xlu0 %v2451
    %v2453 = vpop.xlane.xlu0 %2452
    %v2454 = vsel %vm381, %v2446, 0.0
    %2455 = vadd.xlane.f32.xlu0 %v2454
    %v2456 = vpop.xlane.xlu0 %2455
    %v2457 = vsel %vm381, %v2447, 0.0
    %2458 = vadd.xlane.f32.xlu0 %v2457
    %v2459 = vpop.xlane.xlu0 %2458
    %v2460 = vsel %vm381, %v2448, 0.0
    %2461 = vadd.xlane.f32.xlu0 %v2460
    %v2462 = vpop.xlane.xlu0 %2461
    %v2463 = vmul.f32 %v2453, %v394
    %v2464 = vmul.f32 %v2456, %v394
    %v2465 = vmul.f32 %v2459, %v394
    %v2466 = vmul.f32 %v2462, %v394
    %v2467 = vsub.f32 %v2445, %v2463
    %v2468 = vsub.f32 %v2446, %v2464
    %v2469 = vsub.f32 %v2447, %v2465
    %v2470 = vsub.f32 %v2448, %v2466
    %v2471 = vmul.f32 %v2467, %v2467
    %v2472 = vmul.f32 %v2468, %v2468
    %v2473 = vmul.f32 %v2469, %v2469
    %v2474 = vmul.f32 %v2470, %v2470
    %v2475 = vsel %vm381, %v2471, 0.0
    %2476 = vadd.xlane.f32.xlu0 %v2475
    %v2477 = vpop.xlane.xlu0 %2476
    %v2478 = vsel %vm381, %v2472, 0.0
    %2479 = vadd.xlane.f32.xlu0 %v2478
    %v2480 = vpop.xlane.xlu0 %2479
    %v2481 = vsel %vm381, %v2473, 0.0
    %2482 = vadd.xlane.f32.xlu0 %v2481
    %v2483 = vpop.xlane.xlu0 %2482
    %v2484 = vsel %vm381, %v2474, 0.0
    %2485 = vadd.xlane.f32.xlu0 %v2484
    %v2486 = vpop.xlane.xlu0 %2485
    %v2487 = vmul.f32 %v2477, %v394
    %v2488 = vmul.f32 %v2480, %v394
    %v2489 = vmul.f32 %v2483, %v394
    %v2490 = vmul.f32 %v2486, %v394
    %v2491 = vadd.f32 %v2487, 1e-05
    %v2492 = vadd.f32 %v2488, 1e-05
    %v2493 = vadd.f32 %v2489, 1e-05
    %v2494 = vadd.f32 %v2490, 1e-05
    %v2495 = vrsqrt.pop %v2491
    %v2496 = vrsqrt.pop %v2492
    %v2497 = vrsqrt.pop %v2493
    %v2498 = vrsqrt.pop %v2494
    %v2499 = vmul.f32 %v2467, %v2495
    %v2500 = vmul.f32 %v2468, %v2496
    %v2501 = vmul.f32 %v2469, %v2497
    %v2502 = vmul.f32 %v2470, %v2498
    %v2504 = vlaneseq
    %v2505 = vshrl.u32 %v2504, 7
    %v2506 = vsub.s32 0, %v2505
    %v2507 = vrot.slane %v2449, %v2506
    %v2509 = vmul.f32 %v2499, %v2507
    %v2510 = vmul.f32 %v2500, %v2507
    %v2511 = vmul.f32 %v2501, %v2507
    %v2512 = vmul.f32 %v2502, %v2507
    %v2514 = vlaneseq
    %v2515 = vshrl.u32 %v2514, 7
    %v2516 = vsub.s32 0, %v2515
    %v2517 = vrot.slane %v2450, %v2516
    %v2519 = vadd.f32 %v2509, %v2517
    %v2520 = vadd.f32 %v2510, %v2517
    %v2521 = vadd.f32 %v2511, %v2517
    %v2522 = vadd.f32 %v2512, %v2517
    %v2523 = vpack.c.bf16 %v2520, %v2519
    %v2524 = vpack.c.bf16 %v2522, %v2521
    %v2525 = vld [vmem:[%s12] sm:$0xf]
    %v2526 = vld [vmem:[%s12 + $0x4] sm:$0xf]
    %v2527 = vld [vmem:[%s12 + $0x8] sm:$0xf]
    %v2528 = vld [vmem:[%s12 + $0xc] sm:$0xf]
    %v2529 = vld [vmem:[%s12 + $0x10] sm:$0xf]
    %v2530 = vld [vmem:[%s12 + $0x14] sm:$0xf]
    %v2531 = vld [vmem:[%s12 + $0x18] sm:$0xf]
    %v2532 = vld [vmem:[%s12 + $0x1c] sm:$0xf]
    %v2533 = vld [vmem:[%s13] sm:$0x1]
    %v2535 = vlaneseq
    %v2536 = vshrl.u32 %v2535, 7
    %v2537 = vsub.s32 0, %v2536
    %v2538 = vrot.slane %v2533, %v2537
    %v2548 = vunpack.c.l.b16 %v2525
    %v2549 = vunpack.c.l.b16 %v2526
    %v2550 = vunpack.c.l.b16 %v2527
    %v2551 = vunpack.c.l.b16 %v2528
    %v2552 = vunpack.c.l.b16 %v2529
    %v2553 = vunpack.c.l.b16 %v2530
    %v2554 = vunpack.c.l.b16 %v2531
    %v2555 = vunpack.c.l.b16 %v2532
    %v2556 = vpack.c.b16 %v2549, %v2548
    %v2557 = vpack.c.b16 %v2551, %v2550
    %v2558 = vpack.c.b16 %v2553, %v2552
    %v2559 = vpack.c.b16 %v2555, %v2554
    %v2565 = vsel %vm381, %v2523, 0
    %v2568 = vsel %vm381, %v2524, 0
    %2570 = vmatprep.subr.bf16.mxu0 0
    %2571 = vmatpush1.bf16.msra.mxu0 %v2556
    %2572 = vmatprep.subr.bf16.mxu0 0
    %2573 = vmatpush1.bf16.msra.mxu0 %v2557
    %2574 = vmatprep.subr.bf16.mxu0 0
    %2575 = vmatpush1.bf16.msra.mxu0 %v2558
    %2576 = vmatprep.subr.bf16.mxu0 0
    %2577 = vmatpush1.bf16.msra.mxu0 %v2559
    %2578 = vmatprep.subr.bf16.mxu0 0
    %2579 = vmatpush1.bf16.msra.mxu0 0
    %2580 = vmatprep.subr.bf16.mxu0 0
    %2581 = vmatpush1.bf16.msra.mxu0 0
    %2582 = vmatprep.subr.bf16.mxu0 0
    %2583 = vmatpush1.bf16.msra.mxu0 0
    %2584 = vmatprep.subr.bf16.mxu0 0
    %2585 = vmatpush1.bf16.msra.mxu0 0
    %2586 = vmatprep.subr.bf16.mxu0 0
    %2587 = vmatpush1.bf16.msra.mxu0 0
    %2588 = vmatprep.subr.bf16.mxu0 0
    %2589 = vmatpush1.bf16.msra.mxu0 0
    %2590 = vmatprep.subr.bf16.mxu0 0
    %2591 = vmatpush1.bf16.msra.mxu0 0
    %2592 = vmatprep.subr.bf16.mxu0 0
    %2593 = vmatpush1.bf16.msra.mxu0 0
    %2594 = vmatprep.subr.bf16.mxu0 0
    %2595 = vmatpush1.bf16.msra.mxu0 0
    %2596 = vmatprep.subr.bf16.mxu0 0
    %2597 = vmatpush1.bf16.msra.mxu0 0
    %2598 = vmatprep.subr.bf16.mxu0 0
    %2599 = vmatpush1.bf16.msra.mxu0 0
    %2600 = vmatprep.subr.bf16.mxu0 0
    %2601 = vmatpush1.bf16.msra.mxu0 0
    %2602 = vmatprep.mubr.bf16.mxu0 0
    %2603 = vmatmul.mubr.bf16.gmra.mrb[0].mxu0 %v2565
    %v2604 = vpop.f32.mrb[0].mxu0
    %v2605 = vadd.f32 %v2538, %v2604
    %v2606 = vpop.f32.mrb[0].mxu0
    %v2607 = vpop.f32.mrb[0].mxu0
    %v2608 = vadd.f32 %v2538, %v2607
    %v2609 = vpop.f32.mrb[0].mxu0
    %2610 = vmatprep.mubr.bf16.mxu0 0
    %2611 = vmatmul.mubr.bf16.gmra.mrb[0].mxu0 %v2568
    %v2612 = vpop.f32.mrb[0].mxu0
    %v2613 = vadd.f32 %v2538, %v2612
    %v2614 = vpop.f32.mrb[0].mxu0
    %v2615 = vpop.f32.mrb[0].mxu0
    %v2616 = vadd.f32 %v2538, %v2615
    %v2617 = vpop.f32.mrb[0].mxu0
    %2618 = vdwg.mxu0
    %v2619 = vmul.f32 %v2605, 0.5
    %v2620 = vmul.f32 %v2608, 0.5
    %v2621 = vmul.f32 %v2613, 0.5
    %v2622 = vmul.f32 %v2616, 0.5
    %v2623 = vmul.f32 %v2605, 0.70710677
    %v2624 = vmul.f32 %v2608, 0.70710677
    %v2625 = vmul.f32 %v2613, 0.70710677
    %v2626 = vmul.f32 %v2616, 0.70710677
    %vm2627 = vcmp.ge.f32.partialorder %v2623, 0.0
    %vm2628 = vcmp.ge.f32.partialorder %v2624, 0.0
    %vm2629 = vcmp.ge.f32.partialorder %v2625, 0.0
    %vm2630 = vcmp.ge.f32.partialorder %v2626, 0.0
    %v2631 = vsel %vm2627, 1.0, -1.0
    %v2632 = vsel %vm2628, 1.0, -1.0
    %v2633 = vsel %vm2629, 1.0, -1.0
    %v2634 = vsel %vm2630, 1.0, -1.0
    %v2635 = vand.u32 2147483647, %v2623
    %v2636 = vand.u32 2147483647, %v2624
    %v2637 = vand.u32 2147483647, %v2625
    %v2638 = vand.u32 2147483647, %v2626
    %v2639 = vmul.f32 %v2635, 0.3275911
    %v2640 = vmul.f32 %v2636, 0.3275911
    %v2641 = vmul.f32 %v2637, 0.3275911
    %v2642 = vmul.f32 %v2638, 0.3275911
    %v2643 = vadd.f32 %v2639, 1.0
    %v2644 = vadd.f32 %v2640, 1.0
    %v2645 = vadd.f32 %v2641, 1.0
    %v2646 = vadd.f32 %v2642, 1.0
    %v2647 = vrcp.pop %v2643
    %v2648 = vmul.f32 1.0, %v2647
    %v2649 = vrcp.pop %v2644
    %v2650 = vmul.f32 1.0, %v2649
    %v2651 = vrcp.pop %v2645
    %v2652 = vmul.f32 1.0, %v2651
    %v2653 = vrcp.pop %v2646
    %v2654 = vmul.f32 1.0, %v2653
    %v2655 = vmul.f32 %v2648, 1.0614054
    %v2656 = vmul.f32 %v2650, 1.0614054
    %v2657 = vmul.f32 %v2652, 1.0614054
    %v2658 = vmul.f32 %v2654, 1.0614054
    %v2659 = vadd.f32 %v2655, -1.4531521
    %v2660 = vadd.f32 %v2656, -1.4531521
    %v2661 = vadd.f32 %v2657, -1.4531521
    %v2662 = vadd.f32 %v2658, -1.4531521
    %v2663 = vmul.f32 %v2648, %v2659
    %v2664 = vmul.f32 %v2650, %v2660
    %v2665 = vmul.f32 %v2652, %v2661
    %v2666 = vmul.f32 %v2654, %v2662
    %v2667 = vadd.f32 %v2663, 1.4214138
    %v2668 = vadd.f32 %v2664, 1.4214138
    %v2669 = vadd.f32 %v2665, 1.4214138
    %v2670 = vadd.f32 %v2666, 1.4214138
    %v2671 = vmul.f32 %v2648, %v2667
    %v2672 = vmul.f32 %v2650, %v2668
    %v2673 = vmul.f32 %v2652, %v2669
    %v2674 = vmul.f32 %v2654, %v2670
    %v2675 = vadd.f32 %v2671, -0.28449672
    %v2676 = vadd.f32 %v2672, -0.28449672
    %v2677 = vadd.f32 %v2673, -0.28449672
    %v2678 = vadd.f32 %v2674, -0.28449672
    %v2679 = vmul.f32 %v2648, %v2675
    %v2680 = vmul.f32 %v2650, %v2676
    %v2681 = vmul.f32 %v2652, %v2677
    %v2682 = vmul.f32 %v2654, %v2678
    %v2683 = vadd.f32 %v2679, 0.2548296
    %v2684 = vadd.f32 %v2680, 0.2548296
    %v2685 = vadd.f32 %v2681, 0.2548296
    %v2686 = vadd.f32 %v2682, 0.2548296
    %v2687 = vmul.f32 %v2648, %v2683
    %v2688 = vmul.f32 %v2650, %v2684
    %v2689 = vmul.f32 %v2652, %v2685
    %v2690 = vmul.f32 %v2654, %v2686
    %v2691 = vsub.f32 0.0, %v2635
    %v2692 = vsub.f32 0.0, %v2636
    %v2693 = vsub.f32 0.0, %v2637
    %v2694 = vsub.f32 0.0, %v2638
    %v2695 = vmul.f32 %v2691, %v2635
    %v2696 = vmul.f32 %v2692, %v2636
    %v2697 = vmul.f32 %v2693, %v2637
    %v2698 = vmul.f32 %v2694, %v2638
    %v2699 = vmul.f32 %v2695, 1.442695
    %v2700 = vpow.pop %v2699
    %v2701 = vmul.f32 %v2696, 1.442695
    %v2702 = vpow.pop %v2701
    %v2703 = vmul.f32 %v2697, 1.442695
    %v2704 = vpow.pop %v2703
    %v2705 = vmul.f32 %v2698, 1.442695
    %v2706 = vpow.pop %v2705
    %v2707 = vmul.f32 %v2687, %v2700
    %v2708 = vmul.f32 %v2688, %v2702
    %v2709 = vmul.f32 %v2689, %v2704
    %v2710 = vmul.f32 %v2690, %v2706
    %v2711 = vsub.f32 1.0, %v2707
    %v2712 = vsub.f32 1.0, %v2708
    %v2713 = vsub.f32 1.0, %v2709
    %v2714 = vsub.f32 1.0, %v2710
    %v2715 = vmul.f32 %v2631, %v2711
    %v2716 = vmul.f32 %v2632, %v2712
    %v2717 = vmul.f32 %v2633, %v2713
    %v2718 = vmul.f32 %v2634, %v2714
    %v2719 = vadd.f32 %v2715, 1.0
    %v2720 = vadd.f32 %v2716, 1.0
    %v2721 = vadd.f32 %v2717, 1.0
    %v2722 = vadd.f32 %v2718, 1.0
    %v2723 = vmul.f32 %v2619, %v2719
    %v2724 = vmul.f32 %v2620, %v2720
    %v2725 = vmul.f32 %v2621, %v2721
    %v2726 = vmul.f32 %v2622, %v2722
    %v2727 = vpack.c.bf16 %v2724, %v2723
    %v2728 = vpack.c.bf16 %v2726, %v2725
    %v2729 = vld [vmem:[%s14] sm:$0xf]
    %v2730 = vld [vmem:[%s14 + $0x4] sm:$0xf]
    %v2731 = vld [vmem:[%s14 + $0x8] sm:$0xf]
    %v2732 = vld [vmem:[%s14 + $0xc] sm:$0xf]
    %v2733 = vld [vmem:[%s14 + $0x10] sm:$0xf]
    %v2734 = vld [vmem:[%s14 + $0x14] sm:$0xf]
    %v2735 = vld [vmem:[%s14 + $0x18] sm:$0xf]
    %v2736 = vld [vmem:[%s14 + $0x1c] sm:$0xf]
    %v2737 = vld [vmem:[%s15] sm:$0x1]
    %v2739 = vlaneseq
    %v2740 = vshrl.u32 %v2739, 7
    %v2741 = vsub.s32 0, %v2740
    %v2742 = vrot.slane %v2737, %v2741
    %v2752 = vunpack.c.l.b16 %v2729
    %v2753 = vunpack.c.l.b16 %v2730
    %v2754 = vunpack.c.l.b16 %v2731
    %v2755 = vunpack.c.l.b16 %v2732
    %v2756 = vunpack.c.l.b16 %v2733
    %v2757 = vunpack.c.l.b16 %v2734
    %v2758 = vunpack.c.l.b16 %v2735
    %v2759 = vunpack.c.l.b16 %v2736
    %v2760 = vpack.c.b16 %v2753, %v2752
    %v2761 = vpack.c.b16 %v2755, %v2754
    %v2762 = vpack.c.b16 %v2757, %v2756
    %v2763 = vpack.c.b16 %v2759, %v2758
    %v2769 = vsel %vm381, %v2727, 0
    %v2772 = vsel %vm381, %v2728, 0
    %2774 = vmatprep.subr.bf16.mxu0 0
    %2775 = vmatpush1.bf16.msra.mxu0 %v2760
    %2776 = vmatprep.subr.bf16.mxu0 0
    %2777 = vmatpush1.bf16.msra.mxu0 %v2761
    %2778 = vmatprep.subr.bf16.mxu0 0
    %2779 = vmatpush1.bf16.msra.mxu0 %v2762
    %2780 = vmatprep.subr.bf16.mxu0 0
    %2781 = vmatpush1.bf16.msra.mxu0 %v2763
    %2782 = vmatprep.subr.bf16.mxu0 0
    %2783 = vmatpush1.bf16.msra.mxu0 0
    %2784 = vmatprep.subr.bf16.mxu0 0
    %2785 = vmatpush1.bf16.msra.mxu0 0
    %2786 = vmatprep.subr.bf16.mxu0 0
    %2787 = vmatpush1.bf16.msra.mxu0 0
    %2788 = vmatprep.subr.bf16.mxu0 0
    %2789 = vmatpush1.bf16.msra.mxu0 0
    %2790 = vmatprep.subr.bf16.mxu0 0
    %2791 = vmatpush1.bf16.msra.mxu0 0
    %2792 = vmatprep.subr.bf16.mxu0 0
    %2793 = vmatpush1.bf16.msra.mxu0 0
    %2794 = vmatprep.subr.bf16.mxu0 0
    %2795 = vmatpush1.bf16.msra.mxu0 0
    %2796 = vmatprep.subr.bf16.mxu0 0
    %2797 = vmatpush1.bf16.msra.mxu0 0
    %2798 = vmatprep.subr.bf16.mxu0 0
    %2799 = vmatpush1.bf16.msra.mxu0 0
    %2800 = vmatprep.subr.bf16.mxu0 0
    %2801 = vmatpush1.bf16.msra.mxu0 0
    %2802 = vmatprep.subr.bf16.mxu0 0
    %2803 = vmatpush1.bf16.msra.mxu0 0
    %2804 = vmatprep.subr.bf16.mxu0 0
    %2805 = vmatpush1.bf16.msra.mxu0 0
    %2806 = vmatprep.mubr.bf16.mxu0 0
    %2807 = vmatmul.mubr.bf16.gmra.mrb[0].mxu0 %v2769
    %v2808 = vpop.f32.mrb[0].mxu0
    %v2809 = vadd.f32 %v2742, %v2808
    %v2810 = vpop.f32.mrb[0].mxu0
    %v2811 = vpop.f32.mrb[0].mxu0
    %v2812 = vadd.f32 %v2742, %v2811
    %v2813 = vpop.f32.mrb[0].mxu0
    %2814 = vmatprep.mubr.bf16.mxu0 0
    %2815 = vmatmul.mubr.bf16.gmra.mrb[0].mxu0 %v2772
    %v2816 = vpop.f32.mrb[0].mxu0
    %v2817 = vadd.f32 %v2742, %v2816
    %v2818 = vpop.f32.mrb[0].mxu0
    %v2819 = vpop.f32.mrb[0].mxu0
    %v2820 = vadd.f32 %v2742, %v2819
    %v2821 = vpop.f32.mrb[0].mxu0
    %2822 = vdwg.mxu0
    %v2823 = vadd.f32 %v2445, %v2809
    %v2824 = vadd.f32 %v2446, %v2812
    %v2825 = vadd.f32 %v2447, %v2817
    %v2826 = vadd.f32 %v2448, %v2820
    %2827 = vst.msk [vmem:[#allocation2] sm:$0xff] %vm381, %v2823
    %2828 = vst.msk [vmem:[#allocation2 + $0x8] sm:$0xff] %vm381, %v2824
    %2829 = vst.msk [vmem:[#allocation2 + $0x10] sm:$0xff] %vm381, %v2825
    %2830 = vst.msk [vmem:[#allocation2 + $0x18] sm:$0xff] %vm381, %v2826
    // Predicated region
    $region74: #{cross_attention_layer.1} parent=1 // pred_check
      _
    $region75: #{cross_attention_layer.1} parent=1 // pred_check_branch
      %2832 = sbr.rel (0) target = $region77
    $region76: #{cross_attention_layer.1} parent=1 // pred_region
      %s2834 = ssub.s32 512, 512
      %2835 = vsyncadd [#allocation3], %s2834
      %s2836 = sshll.u32 [#allocation2], 4
      %s2837 = int_to_ptr.vmem [resolvable:$true] %s2836
      %2842 = dma.vmem_to_hbm [thread:$0]  %s2837, 512, %s18, [#allocation3], 128, 128, 8
    $region77: #{cross_attention_layer.1} parent=1 // pred_fallthru
      _
    // Predicated region
    $region78: #{cross_attention_layer.1} parent=1 // pred_check
      _
    $region79: #{cross_attention_layer.1} parent=1 // pred_check_branch
      %2844 = sbr.rel (0) target = $region81
    $region80: #{cross_attention_layer.1} parent=1 // pred_region
      _
    $region81: #{cross_attention_layer.1} parent=1 // pred_fallthru
      _
    // Predicated region
    $region82: #{cross_attention_layer.1} parent=1 // pred_check
      _
    $region83: #{cross_attention_layer.1} parent=1 // pred_check_branch
      %2846 = sbr.rel (0) target = $region85
    $region84: #{cross_attention_layer.1} parent=1 // pred_region
      %2847 = dma.done [#allocation3], 512
    $region85: #{cross_attention_layer.1} parent=1 // pred_fallthru
      _
    // Predicated region
    $region86: #{cross_attention_layer.1} parent=1 // pred_check
      _
    $region87: #{cross_attention_layer.1} parent=1 // pred_check_branch
      %2849 = sbr.rel (0) target = $region89
    $region88: #{cross_attention_layer.1} parent=1 // pred_region
      _
    $region89: #{cross_attention_layer.1} parent=1 // pred_fallthru
      _
    %2850 = vsyncpa [#allocation3], 1

</llo_original>
